<compile_context>
chip_gen: v7x
topology: tpu7x:2x2x1
jax: 0.10.0
libtpu: 0.0.40
codegen_flags: <defaults>
</compile_context>

<pallas_src>
import functools

import jax
import jax.numpy as jnp
from jax.experimental import pallas as pl
from jax.experimental.pallas import tpu as pltpu


# ----------------------------------------------------------------------------
# Helpers: tiling / weight folding / im2col for the 3-channel stem.
# ----------------------------------------------------------------------------
def _row_tile(h, max_tile=32):
    """Largest even divisor of h that is <= min(max_tile, h//2); else h.

    Gives several row tiles per image (pipelining + megacore sharding) while
    keeping the (tile_rows*W, Cout) f32 accumulator and the output blocks small
    enough for v7x's 64 MiB VMEM at realistic widths.
    """
    cap = min(max_tile, max(1, h // 2))
    for t in range(cap, 0, -1):
        if h % t == 0 and t % 2 == 0:
            return t
    return h


def _fold_kh(w_hwio):
    """(3, 3, Cin, Cout) HWIO -> (3, 3*Cin, Cout) bf16.

    The three kw taps are concatenated along the contraction axis so each grid
    step does 3 MXU matmuls with depth 3*Cin instead of 9 with depth Cin.
    """
    return jnp.concatenate(
        [w_hwio[:, 0], w_hwio[:, 1], w_hwio[:, 2]], axis=1
    ).astype(jnp.bfloat16)


def _im2col_3x3(x):
    """(N,H,W,3) -> (N,H,W,27): full im2col for the Cin=3 stem.

    Cheap for 3 channels; turns layer 0 into one 27-deep matmul instead of
    nine depth-3 matmuls that badly underfill the MXU.
    """
    n, h, w, _ = x.shape
    xp = jnp.pad(x, ((0, 0), (1, 1), (1, 1), (0, 0)))
    cols = [xp[:, kh:kh + h, kw:kw + w, :] for kh in range(3) for kw in range(3)]
    return jnp.concatenate(cols, axis=-1)


# ----------------------------------------------------------------------------
# Stem kernel: Conv(3->64) + ReLU as a single im2col matmul per row tile.
# ----------------------------------------------------------------------------
def _conv1_im2col_kernel(p_ref, w_ref, b_ref, o_ref, *, th):
    # p_ref: (1, th, W, 27) bf16 im2col patches; w_ref: (27, 64) bf16
    w_out = o_ref.shape[2]
    cout = o_ref.shape[3]
    k = p_ref.shape[3]
    p = p_ref[0].reshape(th * w_out, k)
    y = jnp.dot(p, w_ref[...], preferred_element_type=jnp.float32) + b_ref[...]
    o_ref[...] = jnp.maximum(y, 0.0).reshape(1, th, w_out, cout).astype(o_ref.dtype)


def conv1_im2col(patches, w, b, *, th):
    n, h, w_sp, k = patches.shape
    cout = w.shape[1]
    b2 = b.reshape(1, cout).astype(jnp.float32)
    return pl.pallas_call(
        functools.partial(_conv1_im2col_kernel, th=th),
        out_shape=jax.ShapeDtypeStruct((n, h, w_sp, cout), jnp.bfloat16),
        grid=(n, h // th),
        in_specs=[
            pl.BlockSpec((1, th, w_sp, k), lambda ni, i: (ni, i, 0, 0)),
            pl.BlockSpec((k, cout), lambda ni, i: (0, 0)),
            pl.BlockSpec((1, cout), lambda ni, i: (0, 0)),
        ],
        out_specs=pl.BlockSpec((1, th, w_sp, cout), lambda ni, i: (ni, i, 0, 0)),
        compiler_params=pltpu.CompilerParams(
            dimension_semantics=("parallel", "parallel")),
    )(patches, w, b2)


# ----------------------------------------------------------------------------
# General 3x3 conv kernel (kh-folded matmuls), with optional fused features:
#   relu_input   : apply ReLU to the loaded input tile (fuses the previous ReLU)
#   pre_relu_out : store the pre-ReLU result (needed for the layer-5 feature)
#   fuse_pool    : also emit a 2x2-maxpooled (post-ReLU) output tile
# ----------------------------------------------------------------------------
def _conv3x3_kernel(x_ref, w_ref, b_ref, *refs,
                    th, relu_input, pre_relu_out, fuse_pool):
    if fuse_pool:
        out_ref, pool_ref = refs
    else:
        (out_ref,) = refs
        pool_ref = None

    i = pl.program_id(1)
    w_out = out_ref.shape[2]
    cin = x_ref.shape[3]
    cout = out_ref.shape[3]
    row0 = pl.multiple_of(i * th, th)

    # 3 MXU matmuls (one per kernel row), contraction depth 3*Cin, bf16 in /
    # f32 accumulation in a local value (no VMEM scratch round trip per tap).
    acc = None
    for kh in range(3):
        rows = x_ref[0, pl.ds(row0 + kh, th), :, :]          # (th, W+2, cin)
        if relu_input:
            rows = jnp.maximum(rows, 0)                      # fused layer-6 ReLU
        rows = rows.astype(jnp.bfloat16)
        patch = jnp.concatenate(
            [rows[:, 0:w_out, :],
             rows[:, 1:w_out + 1, :],
             rows[:, 2:w_out + 2, :]], axis=-1
        ).reshape(th * w_out, 3 * cin)
        contrib = jnp.dot(patch, w_ref[kh], preferred_element_type=jnp.float32)
        acc = contrib if acc is None else acc + contrib

    y = acc + b_ref[...]                                     # f32 + bias
    post = jnp.maximum(y, 0.0)
    out = y if pre_relu_out else post
    out_ref[...] = out.reshape(1, th, w_out, cout).astype(out_ref.dtype)

    if fuse_pool:
        # Fused MaxPool2d(2, 2) on the post-ReLU tile: reshape + max (no
        # stride-2 slices).
        t = post.reshape(th, w_out // 2, 2, cout)
        t = jnp.maximum(t[:, :, 0, :], t[:, :, 1, :])        # horizontal pairs
        t = t.reshape(th // 2, 2, w_out // 2, cout)
        pooled = jnp.maximum(t[:, 0], t[:, 1])               # vertical pairs
        pool_ref[...] = pooled.reshape(
            1, th // 2, w_out // 2, cout).astype(pool_ref.dtype)


def conv3x3(x_nhwc, w_folded, b, *, th, relu_input=False, pre_relu_out=False,
            fuse_pool=False, out_dtype=jnp.bfloat16):
    """3x3 'same' conv over NHWC (bf16) input, row-tiled Pallas kernel."""
    n, h, w_sp, cin = x_nhwc.shape
    cout = w_folded.shape[2]
    assert h % th == 0
    if fuse_pool:
        assert th % 2 == 0 and w_sp % 2 == 0 and h % 2 == 0, \
            "fused 2x2 maxpool needs even tile / spatial dims"

    # TODO(synk): the spatial zero-pad is one extra HBM round trip per layer; at
    # large resolutions fold the halo into the producing kernel instead.
    xp = jnp.pad(x_nhwc, ((0, 0), (1, 1), (1, 1), (0, 0)))
    b2 = b.reshape(1, cout).astype(jnp.float32)

    out_shape = [jax.ShapeDtypeStruct((n, h, w_sp, cout), out_dtype)]
    out_specs = [pl.BlockSpec((1, th, w_sp, cout), lambda ni, i: (ni, i, 0, 0))]
    if fuse_pool:
        out_shape.append(
            jax.ShapeDtypeStruct((n, h // 2, w_sp // 2, cout), out_dtype))
        out_specs.append(
            pl.BlockSpec((1, th // 2, w_sp // 2, cout),
                         lambda ni, i: (ni, i, 0, 0)))

    kernel = functools.partial(
        _conv3x3_kernel, th=th, relu_input=relu_input,
        pre_relu_out=pre_relu_out, fuse_pool=fuse_pool)

    res = pl.pallas_call(
        kernel,
        out_shape=tuple(out_shape),
        grid=(n, h // th),
        in_specs=[
            # Padded image: same block index for every row tile -> resident in
            # VMEM across the inner grid axis, DMA'd from HBM once per image.
            pl.BlockSpec((1, h + 2, w_sp + 2, cin), lambda ni, i: (ni, 0, 0, 0)),
            pl.BlockSpec((3, 3 * cin, cout), lambda ni, i: (0, 0, 0)),
            pl.BlockSpec((1, cout), lambda ni, i: (0, 0)),
        ],
        out_specs=tuple(out_specs),
        compiler_params=pltpu.CompilerParams(
            dimension_semantics=("parallel", "parallel")),
    )(xp, w_folded, b2)
    return res if fuse_pool else res[0]


# ----------------------------------------------------------------------------
# Module: VGG16FeatureExtractor forward
# ----------------------------------------------------------------------------
def init_params(key):
    """Deterministic synthetic parameters (HWIO conv weights), fp32."""
    keys = jax.random.split(key, 8)

    def w(k, cin, cout):
        return jax.random.normal(k, (3, 3, cin, cout), jnp.float32) * 0.05

    def bias(k, cout):
        return jax.random.normal(k, (cout,), jnp.float32) * 0.01

    return {
        "w1": w(keys[0], 3, 64),    "b1": bias(keys[1], 64),
        "w2": w(keys[2], 64, 64),   "b2": bias(keys[3], 64),
        "w3": w(keys[4], 64, 128),  "b3": bias(keys[5], 128),
        "w4": w(keys[6], 128, 128), "b4": bias(keys[7], 128),
    }


@jax.jit
def vgg16_feature_extractor(x_nchw, params):
    # Accept NCHW (PyTorch convention), compute in NHWC/bf16, return NCHW/f32.
    x = jnp.transpose(x_nchw, (0, 2, 3, 1))
    _, h, _, _ = x.shape

    # Pre-fold weights for the MXU-friendly contractions (bf16 operands).
    w1 = params["w1"].reshape(27, 64).astype(jnp.bfloat16)   # matches im2col order
    w2 = _fold_kh(params["w2"])
    w3 = _fold_kh(params["w3"])
    w4 = _fold_kh(params["w4"])

    th0 = _row_tile(h)
    th1 = _row_tile(h // 2)

    # Layers 0-1: Conv(3->64) + ReLU as one 27-deep im2col matmul   -> result[0]
    patches = _im2col_3x3(x.astype(jnp.bfloat16))
    r1 = conv1_im2col(patches, w1, params["b1"], th=th0)

    # Layers 2-3: Conv(64->64) + ReLU                               -> result[1]
    # Layer 4: MaxPool2d(2,2) fused into the same kernel's epilogue.
    r2, pooled = conv3x3(r1, w2, params["b2"], th=th0, fuse_pool=True)

    # Layer 5: Conv(64->128), pre-ReLU output                       -> result[2]
    r3 = conv3x3(pooled, w3, params["b3"], th=th1, pre_relu_out=True)

    # Layer 6: ReLU — fused into the next conv's input load (no HBM round trip).
    # Layers 7-8: Conv(128->128) + ReLU                             -> result[3]
    r4 = conv3x3(r3, w4, params["b4"], th=th1, relu_input=True)

    to_nchw = lambda t: jnp.transpose(t, (0, 3, 1, 2)).astype(jnp.float32)
    return [to_nchw(r1), to_nchw(r2), to_nchw(r3), to_nchw(r4)]


# ----------------------------------------------------------------------------
# Pure-JAX f32 reference (for a tolerance check against the bf16 kernels).
# ----------------------------------------------------------------------------
def _ref_conv(x, w, b):
    y = jax.lax.conv_general_dilated(
        x, w, window_strides=(1, 1), padding="SAME",
        dimension_numbers=("NHWC", "HWIO", "NHWC"))
    return y + b


def ref_forward(x_nchw, params):
    x = jnp.transpose(x_nchw, (0, 2, 3, 1))
    y1 = jax.nn.relu(_ref_conv(x, params["w1"], params["b1"]))
    y2 = jax.nn.relu(_ref_conv(y1, params["w2"], params["b2"]))
    p = jax.lax.reduce_window(y2, -jnp.inf, jax.lax.max,
                              (1, 2, 2, 1), (1, 2, 2, 1), "VALID")
    y3 = _ref_conv(p, params["w3"], params["b3"])          # pre-ReLU feature
    y4 = jax.nn.relu(_ref_conv(jax.nn.relu(y3), params["w4"], params["b4"]))
    to_nchw = lambda t: jnp.transpose(t, (0, 3, 1, 2))
    return [to_nchw(y1), to_nchw(y2), to_nchw(y3), to_nchw(y4)]


if __name__ == "__main__":
    key = jax.random.PRNGKey(0)
    k_x, k_p = jax.random.split(key)
    # Small input consistent with the module: NCHW, 3 channels (VGG16 input).
    x = jax.random.normal(k_x, (2, 3, 16, 16), jnp.float32)
    params = init_params(k_p)

    results = vgg16_feature_extractor(x, params)
    results = jax.block_until_ready(results)

    # Shapes the PyTorch module would produce for a 16x16 input.
    expected = [(2, 64, 16, 16), (2, 64, 16, 16), (2, 128, 8, 8), (2, 128, 8, 8)]
    got = [tuple(r.shape) for r in results]
    assert got == expected, got
    assert all(r.dtype == jnp.float32 for r in results)

    # Numerical check vs. f32 XLA reference (tolerant to bf16 feature maps).
    refs = ref_forward(x, params)
    for idx, (r, rf) in enumerate(zip(results, refs)):
        err = float(jnp.max(jnp.abs(r - rf)))
        scale = float(jnp.max(jnp.abs(rf))) + 1e-6
        assert err <= 0.08 + 0.08 * scale, (idx, err, scale)

    print("KERNEL_OK")
</pallas_src>

<mosaic_0001>
module attributes {stable_mosaic.version = 11 : i64} {
  func.func @_conv1_im2col_kernel(%arg0: i32, %arg1: i32, %arg2: memref<1x8x16x27xbf16, #tpu.memory_space<vmem>>, %arg3: memref<27x64xbf16, #tpu.memory_space<vmem>>, %arg4: memref<1x64xf32, #tpu.memory_space<vmem>>, %arg5: memref<1x8x16x64xbf16, #tpu.memory_space<vmem>>) attributes {dimension_semantics = [#tpu.dimension_semantics<parallel>, #tpu.dimension_semantics<parallel>], iteration_bounds = array<i64: 2, 2>, scalar_prefetch = 0 : i64, scratch_operands = 0 : i64, tpu.core_type = #tpu.core_type<tc>, window_params = [{transform_indices = @transform_0, window_bounds = array<i64: 1, 8, 16, 27>}, {pipeline_mode = #tpu.pipeline_mode<synchronous>, transform_indices = @transform_1, window_bounds = array<i64: 27, 64>}, {pipeline_mode = #tpu.pipeline_mode<synchronous>, transform_indices = @transform_2, window_bounds = array<i64: 1, 64>}, {transform_indices = @transform_3, window_bounds = array<i64: 1, 8, 16, 64>}]} {
    %c0 = arith.constant 0 : index
    %c0_0 = arith.constant 0 : index
    %c0_1 = arith.constant 0 : index
    %c0_2 = arith.constant 0 : index
    %0 = vector.load %arg2[%c0, %c0_0, %c0_1, %c0_2] : memref<1x8x16x27xbf16, #tpu.memory_space<vmem>>, vector<1x8x16x27xbf16>
    %1 = vector.shape_cast %0 : vector<1x8x16x27xbf16> to vector<8x16x27xbf16>
    %2 = vector.shape_cast %1 : vector<8x16x27xbf16> to vector<128x27xbf16>
    %c0_3 = arith.constant 0 : index
    %c0_4 = arith.constant 0 : index
    %3 = vector.load %arg3[%c0_3, %c0_4] : memref<27x64xbf16, #tpu.memory_space<vmem>>, vector<27x64xbf16>
    %cst = arith.constant dense<0.000000e+00> : vector<128x64xf32>
    %4 = tpu.matmul %2, %3, %cst {dimension_numbers = #tpu.dot_dimension_numbers<[1], [0], [0], [1], [0, 0, 1, 1], [], []>} : vector<128x27xbf16>, vector<27x64xbf16>, vector<128x64xf32> -> vector<128x64xf32>
    %c0_5 = arith.constant 0 : index
    %c0_6 = arith.constant 0 : index
    %5 = vector.load %arg4[%c0_5, %c0_6] : memref<1x64xf32, #tpu.memory_space<vmem>>, vector<1x64xf32>
    %6 = vector.broadcast %5 : vector<1x64xf32> to vector<128x64xf32>
    %7 = arith.addf %4, %6 : vector<128x64xf32>
    %cst_7 = arith.constant 0.000000e+00 : f32
    %8 = vector.broadcast %cst_7 : f32 to vector<128x64xf32>
    %9 = arith.maximumf %7, %8 : vector<128x64xf32>
    %10 = vector.shape_cast %9 : vector<128x64xf32> to vector<1x8x16x64xf32>
    %11 = arith.truncf %10 : vector<1x8x16x64xf32> to vector<1x8x16x64xbf16>
    %c0_8 = arith.constant 0 : index
    %c0_9 = arith.constant 0 : index
    %c0_10 = arith.constant 0 : index
    %c0_11 = arith.constant 0 : index
    %12 = vector.load %arg5[%c0_8, %c0_9, %c0_10, %c0_11] : memref<1x8x16x64xbf16, #tpu.memory_space<vmem>>, vector<1x8x16x64xbf16>
    tpu.vector_store %arg5[%c0_8, %c0_9, %c0_10, %c0_11], %11 {strides = array<i32>} : memref<1x8x16x64xbf16, #tpu.memory_space<vmem>>, vector<1x8x16x64xbf16>,
    return
  }
  func.func @transform_0(%arg0: i32, %arg1: i32) -> (i32, i32, i32, i32) {
    %c0_i32 = arith.constant 0 : i32
    %c0_i32_0 = arith.constant 0 : i32
    %c0_i32_1 = arith.constant 0 : i32
    return %arg0, %arg1, %c0_i32, %c0_i32_0 : i32, i32, i32, i32
  }
  func.func @transform_1(%arg0: i32, %arg1: i32) -> (i32, i32) {
    %c0_i32 = arith.constant 0 : i32
    %c0_i32_0 = arith.constant 0 : i32
    %c0_i32_1 = arith.constant 0 : i32
    return %c0_i32, %c0_i32_0 : i32, i32
  }
  func.func @transform_2(%arg0: i32, %arg1: i32) -> (i32, i32) {
    %c0_i32 = arith.constant 0 : i32
    %c0_i32_0 = arith.constant 0 : i32
    %c0_i32_1 = arith.constant 0 : i32
    return %c0_i32, %c0_i32_0 : i32, i32
  }
  func.func @transform_3(%arg0: i32, %arg1: i32) -> (i32, i32, i32, i32) {
    %c0_i32 = arith.constant 0 : i32
    %c0_i32_0 = arith.constant 0 : i32
    %c0_i32_1 = arith.constant 0 : i32
    return %arg0, %arg1, %c0_i32, %c0_i32_0 : i32, i32, i32, i32
  }
}

module attributes {stable_mosaic.version = 11 : i64} {
  func.func @_conv3x3_kernel(%arg0: i32, %arg1: i32, %arg2: memref<1x18x18x64xbf16, #tpu.memory_space<vmem>>, %arg3: memref<3x192x64xbf16, #tpu.memory_space<vmem>>, %arg4: memref<1x64xf32, #tpu.memory_space<vmem>>, %arg5: memref<1x8x16x64xbf16, #tpu.memory_space<vmem>>, %arg6: memref<1x4x8x64xbf16, #tpu.memory_space<vmem>>) attributes {dimension_semantics = [#tpu.dimension_semantics<parallel>, #tpu.dimension_semantics<parallel>], iteration_bounds = array<i64: 2, 2>, scalar_prefetch = 0 : i64, scratch_operands = 0 : i64, tpu.core_type = #tpu.core_type<tc>, window_params = [{transform_indices = @transform_0, window_bounds = array<i64: 1, 18, 18, 64>}, {pipeline_mode = #tpu.pipeline_mode<synchronous>, transform_indices = @transform_1, window_bounds = array<i64: 3, 192, 64>}, {pipeline_mode = #tpu.pipeline_mode<synchronous>, transform_indices = @transform_2, window_bounds = array<i64: 1, 64>}, {transform_indices = @transform_3, window_bounds = array<i64: 1, 8, 16, 64>}, {transform_indices = @transform_4, window_bounds = array<i64: 1, 4, 8, 64>}]} {
    %c8_i32 = arith.constant 8 : i32
    %0 = arith.muli %arg1, %c8_i32 : i32
    %1 = tpu.assume_multiple %0, 8 : i32
    %c0_i32 = arith.constant 0 : i32
    %2 = arith.addi %1, %c0_i32 : i32
    %c0 = arith.constant 0 : index
    %3 = arith.index_cast %2 : i32 to index
    %c0_0 = arith.constant 0 : index
    %c0_1 = arith.constant 0 : index
    %4 = vector.load %arg2[%c0, %3, %c0_0, %c0_1] : memref<1x18x18x64xbf16, #tpu.memory_space<vmem>>, vector<1x8x18x64xbf16>
    %5 = vector.shape_cast %4 : vector<1x8x18x64xbf16> to vector<8x18x64xbf16>
    %6 = vector.extract_strided_slice %5 {offsets = [0, 0, 0], sizes = [8, 16, 64], strides = [1, 1, 1]} : vector<8x18x64xbf16> to vector<8x16x64xbf16>
    %7 = vector.extract_strided_slice %5 {offsets = [0, 1, 0], sizes = [8, 16, 64], strides = [1, 1, 1]} : vector<8x18x64xbf16> to vector<8x16x64xbf16>
    %8 = vector.extract_strided_slice %5 {offsets = [0, 2, 0], sizes = [8, 16, 64], strides = [1, 1, 1]} : vector<8x18x64xbf16> to vector<8x16x64xbf16>
    %9 = tpu.concatenate %6, %7, %8 in 2 : vector<8x16x64xbf16>, vector<8x16x64xbf16>, vector<8x16x64xbf16> -> vector<8x16x192xbf16>
    %10 = vector.shape_cast %9 : vector<8x16x192xbf16> to vector<128x192xbf16>
    %c0_2 = arith.constant 0 : index
    %c0_3 = arith.constant 0 : index
    %c0_4 = arith.constant 0 : index
    %11 = vector.load %arg3[%c0_2, %c0_3, %c0_4] : memref<3x192x64xbf16, #tpu.memory_space<vmem>>, vector<1x192x64xbf16>
    %12 = vector.shape_cast %11 : vector<1x192x64xbf16> to vector<192x64xbf16>
    %cst = arith.constant dense<0.000000e+00> : vector<128x64xf32>
    %13 = tpu.matmul %10, %12, %cst {dimension_numbers = #tpu.dot_dimension_numbers<[1], [0], [0], [1], [0, 0, 1, 1], [], []>} : vector<128x192xbf16>, vector<192x64xbf16>, vector<128x64xf32> -> vector<128x64xf32>
    %c1_i32 = arith.constant 1 : i32
    %14 = arith.addi %1, %c1_i32 : i32
    %c0_5 = arith.constant 0 : index
    %15 = arith.index_cast %14 : i32 to index
    %c0_6 = arith.constant 0 : index
    %c0_7 = arith.constant 0 : index
    %16 = vector.load %arg2[%c0_5, %15, %c0_6, %c0_7] : memref<1x18x18x64xbf16, #tpu.memory_space<vmem>>, vector<1x8x18x64xbf16>
    %17 = vector.shape_cast %16 : vector<1x8x18x64xbf16> to vector<8x18x64xbf16>
    %18 = vector.extract_strided_slice %17 {offsets = [0, 0, 0], sizes = [8, 16, 64], strides = [1, 1, 1]} : vector<8x18x64xbf16> to vector<8x16x64xbf16>
    %19 = vector.extract_strided_slice %17 {offsets = [0, 1, 0], sizes = [8, 16, 64], strides = [1, 1, 1]} : vector<8x18x64xbf16> to vector<8x16x64xbf16>
    %20 = vector.extract_strided_slice %17 {offsets = [0, 2, 0], sizes = [8, 16, 64], strides = [1, 1, 1]} : vector<8x18x64xbf16> to vector<8x16x64xbf16>
    %21 = tpu.concatenate %18, %19, %20 in 2 : vector<8x16x64xbf16>, vector<8x16x64xbf16>, vector<8x16x64xbf16> -> vector<8x16x192xbf16>
    %22 = vector.shape_cast %21 : vector<8x16x192xbf16> to vector<128x192xbf16>
    %c1 = arith.constant 1 : index
    %c0_8 = arith.constant 0 : index
    %c0_9 = arith.constant 0 : index
    %23 = vector.load %arg3[%c1, %c0_8, %c0_9] : memref<3x192x64xbf16, #tpu.memory_space<vmem>>, vector<1x192x64xbf16>
    %24 = vector.shape_cast %23 : vector<1x192x64xbf16> to vector<192x64xbf16>
    %cst_10 = arith.constant dense<0.000000e+00> : vector<128x64xf32>
    %25 = tpu.matmul %22, %24, %cst_10 {dimension_numbers = #tpu.dot_dimension_numbers<[1], [0], [0], [1], [0, 0, 1, 1], [], []>} : vector<128x192xbf16>, vector<192x64xbf16>, vector<128x64xf32> -> vector<128x64xf32>
    %26 = arith.addf %13, %25 : vector<128x64xf32>
    %c2_i32 = arith.constant 2 : i32
    %27 = arith.addi %1, %c2_i32 : i32
    %c0_11 = arith.constant 0 : index
    %28 = arith.index_cast %27 : i32 to index
    %c0_12 = arith.constant 0 : index
    %c0_13 = arith.constant 0 : index
    %29 = vector.load %arg2[%c0_11, %28, %c0_12, %c0_13] : memref<1x18x18x64xbf16, #tpu.memory_space<vmem>>, vector<1x8x18x64xbf16>
    %30 = vector.shape_cast %29 : vector<1x8x18x64xbf16> to vector<8x18x64xbf16>
    %31 = vector.extract_strided_slice %30 {offsets = [0, 0, 0], sizes = [8, 16, 64], strides = [1, 1, 1]} : vector<8x18x64xbf16> to vector<8x16x64xbf16>
    %32 = vector.extract_strided_slice %30 {offsets = [0, 1, 0], sizes = [8, 16, 64], strides = [1, 1, 1]} : vector<8x18x64xbf16> to vector<8x16x64xbf16>
    %33 = vector.extract_strided_slice %30 {offsets = [0, 2, 0], sizes = [8, 16, 64], strides = [1, 1, 1]} : vector<8x18x64xbf16> to vector<8x16x64xbf16>
    %34 = tpu.concatenate %31, %32, %33 in 2 : vector<8x16x64xbf16>, vector<8x16x64xbf16>, vector<8x16x64xbf16> -> vector<8x16x192xbf16>
    %35 = vector.shape_cast %34 : vector<8x16x192xbf16> to vector<128x192xbf16>
    %c2 = arith.constant 2 : index
    %c0_14 = arith.constant 0 : index
    %c0_15 = arith.constant 0 : index
    %36 = vector.load %arg3[%c2, %c0_14, %c0_15] : memref<3x192x64xbf16, #tpu.memory_space<vmem>>, vector<1x192x64xbf16>
    %37 = vector.shape_cast %36 : vector<1x192x64xbf16> to vector<192x64xbf16>
    %cst_16 = arith.constant dense<0.000000e+00> : vector<128x64xf32>
    %38 = tpu.matmul %35, %37, %cst_16 {dimension_numbers = #tpu.dot_dimension_numbers<[1], [0], [0], [1], [0, 0, 1, 1], [], []>} : vector<128x192xbf16>, vector<192x64xbf16>, vector<128x64xf32> -> vector<128x64xf32>
    %39 = arith.addf %26, %38 : vector<128x64xf32>
    %c0_17 = arith.constant 0 : index
    %c0_18 = arith.constant 0 : index
    %40 = vector.load %arg4[%c0_17, %c0_18] : memref<1x64xf32, #tpu.memory_space<vmem>>, vector<1x64xf32>
    %41 = vector.broadcast %40 : vector<1x64xf32> to vector<128x64xf32>
    %42 = arith.addf %39, %41 : vector<128x64xf32>
    %cst_19 = arith.constant 0.000000e+00 : f32
    %43 = vector.broadcast %cst_19 : f32 to vector<128x64xf32>
    %44 = arith.maximumf %42, %43 : vector<128x64xf32>
    %45 = vector.shape_cast %44 : vector<128x64xf32> to vector<1x8x16x64xf32>
    %46 = arith.truncf %45 : vector<1x8x16x64xf32> to vector<1x8x16x64xbf16>
    %c0_20 = arith.constant 0 : index
    %c0_21 = arith.constant 0 : index
    %c0_22 = arith.constant 0 : index
    %c0_23 = arith.constant 0 : index
    %47 = vector.load %arg5[%c0_20, %c0_21, %c0_22, %c0_23] : memref<1x8x16x64xbf16, #tpu.memory_space<vmem>>, vector<1x8x16x64xbf16>
    tpu.vector_store %arg5[%c0_20, %c0_21, %c0_22, %c0_23], %46 {strides = array<i32>} : memref<1x8x16x64xbf16, #tpu.memory_space<vmem>>, vector<1x8x16x64xbf16>,
    %48 = vector.shape_cast %44 : vector<128x64xf32> to vector<8x8x2x64xf32>
    %49 = vector.extract_strided_slice %48 {offsets = [0, 0, 0, 0], sizes = [8, 8, 1, 64], strides = [1, 1, 1, 1]} : vector<8x8x2x64xf32> to vector<8x8x1x64xf32>
    %50 = vector.shape_cast %49 : vector<8x8x1x64xf32> to vector<8x8x64xf32>
    %51 = vector.extract_strided_slice %48 {offsets = [0, 0, 1, 0], sizes = [8, 8, 1, 64], strides = [1, 1, 1, 1]} : vector<8x8x2x64xf32> to vector<8x8x1x64xf32>
    %52 = vector.shape_cast %51 : vector<8x8x1x64xf32> to vector<8x8x64xf32>
    %53 = arith.maximumf %50, %52 : vector<8x8x64xf32>
    %54 = vector.shape_cast %53 : vector<8x8x64xf32> to vector<4x2x8x64xf32>
    %55 = vector.extract_strided_slice %54 {offsets = [0, 0, 0, 0], sizes = [4, 1, 8, 64], strides = [1, 1, 1, 1]} : vector<4x2x8x64xf32> to vector<4x1x8x64xf32>
    %56 = vector.shape_cast %55 : vector<4x1x8x64xf32> to vector<4x8x64xf32>
    %57 = vector.extract_strided_slice %54 {offsets = [0, 1, 0, 0], sizes = [4, 1, 8, 64], strides = [1, 1, 1, 1]} : vector<4x2x8x64xf32> to vector<4x1x8x64xf32>
    %58 = vector.shape_cast %57 : vector<4x1x8x64xf32> to vector<4x8x64xf32>
    %59 = arith.maximumf %56, %58 : vector<4x8x64xf32>
    %60 = vector.shape_cast %59 : vector<4x8x64xf32> to vector<1x4x8x64xf32>
    %61 = arith.truncf %60 : vector<1x4x8x64xf32> to vector<1x4x8x64xbf16>
    %c0_24 = arith.constant 0 : index
    %c0_25 = arith.constant 0 : index
    %c0_26 = arith.constant 0 : index
    %c0_27 = arith.constant 0 : index
    %62 = vector.load %arg6[%c0_24, %c0_25, %c0_26, %c0_27] : memref<1x4x8x64xbf16, #tpu.memory_space<vmem>>, vector<1x4x8x64xbf16>
    tpu.vector_store %arg6[%c0_24, %c0_25, %c0_26, %c0_27], %61 {strides = array<i32>} : memref<1x4x8x64xbf16, #tpu.memory_space<vmem>>, vector<1x4x8x64xbf16>,
    return
  }
  func.func @transform_0(%arg0: i32, %arg1: i32) -> (i32, i32, i32, i32) {
    %c0_i32 = arith.constant 0 : i32
    %c0_i32_0 = arith.constant 0 : i32
    %c0_i32_1 = arith.constant 0 : i32
    %c0_i32_2 = arith.constant 0 : i32
    return %arg0, %c0_i32, %c0_i32_0, %c0_i32_1 : i32, i32, i32, i32
  }
  func.func @transform_1(%arg0: i32, %arg1: i32) -> (i32, i32, i32) {
    %c0_i32 = arith.constant 0 : i32
    %c0_i32_0 = arith.constant 0 : i32
    %c0_i32_1 = arith.constant 0 : i32
    %c0_i32_2 = arith.constant 0 : i32
    return %c0_i32, %c0_i32_0, %c0_i32_1 : i32, i32, i32
  }
  func.func @transform_2(%arg0: i32, %arg1: i32) -> (i32, i32) {
    %c0_i32 = arith.constant 0 : i32
    %c0_i32_0 = arith.constant 0 : i32
    %c0_i32_1 = arith.constant 0 : i32
    return %c0_i32, %c0_i32_0 : i32, i32
  }
  func.func @transform_3(%arg0: i32, %arg1: i32) -> (i32, i32, i32, i32) {
    %c0_i32 = arith.constant 0 : i32
    %c0_i32_0 = arith.constant 0 : i32
    %c0_i32_1 = arith.constant 0 : i32
    return %arg0, %arg1, %c0_i32, %c0_i32_0 : i32, i32, i32, i32
  }
  func.func @transform_4(%arg0: i32, %arg1: i32) -> (i32, i32, i32, i32) {
    %c0_i32 = arith.constant 0 : i32
    %c0_i32_0 = arith.constant 0 : i32
    %c0_i32_1 = arith.constant 0 : i32
    return %arg0, %arg1, %c0_i32, %c0_i32_0 : i32, i32, i32, i32
  }
}

module attributes {stable_mosaic.version = 11 : i64} {
  func.func @_conv3x3_kernel(%arg0: i32, %arg1: i32, %arg2: memref<1x10x10x64xbf16, #tpu.memory_space<vmem>>, %arg3: memref<3x192x128xbf16, #tpu.memory_space<vmem>>, %arg4: memref<1x128xf32, #tpu.memory_space<vmem>>, %arg5: memref<1x4x8x128xbf16, #tpu.memory_space<vmem>>) attributes {dimension_semantics = [#tpu.dimension_semantics<parallel>, #tpu.dimension_semantics<parallel>], iteration_bounds = array<i64: 2, 2>, scalar_prefetch = 0 : i64, scratch_operands = 0 : i64, tpu.core_type = #tpu.core_type<tc>, window_params = [{transform_indices = @transform_0, window_bounds = array<i64: 1, 10, 10, 64>}, {pipeline_mode = #tpu.pipeline_mode<synchronous>, transform_indices = @transform_1, window_bounds = array<i64: 3, 192, 128>}, {pipeline_mode = #tpu.pipeline_mode<synchronous>, transform_indices = @transform_2, window_bounds = array<i64: 1, 128>}, {transform_indices = @transform_3, window_bounds = array<i64: 1, 4, 8, 128>}]} {
    %c4_i32 = arith.constant 4 : i32
    %0 = arith.muli %arg1, %c4_i32 : i32
    %1 = tpu.assume_multiple %0, 4 : i32
    %c0_i32 = arith.constant 0 : i32
    %2 = arith.addi %1, %c0_i32 : i32
    %c0 = arith.constant 0 : index
    %3 = arith.index_cast %2 : i32 to index
    %c0_0 = arith.constant 0 : index
    %c0_1 = arith.constant 0 : index
    %4 = vector.load %arg2[%c0, %3, %c0_0, %c0_1] : memref<1x10x10x64xbf16, #tpu.memory_space<vmem>>, vector<1x4x10x64xbf16>
    %5 = vector.shape_cast %4 : vector<1x4x10x64xbf16> to vector<4x10x64xbf16>
    %6 = vector.extract_strided_slice %5 {offsets = [0, 0, 0], sizes = [4, 8, 64], strides = [1, 1, 1]} : vector<4x10x64xbf16> to vector<4x8x64xbf16>
    %7 = vector.extract_strided_slice %5 {offsets = [0, 1, 0], sizes = [4, 8, 64], strides = [1, 1, 1]} : vector<4x10x64xbf16> to vector<4x8x64xbf16>
    %8 = vector.extract_strided_slice %5 {offsets = [0, 2, 0], sizes = [4, 8, 64], strides = [1, 1, 1]} : vector<4x10x64xbf16> to vector<4x8x64xbf16>
    %9 = tpu.concatenate %6, %7, %8 in 2 : vector<4x8x64xbf16>, vector<4x8x64xbf16>, vector<4x8x64xbf16> -> vector<4x8x192xbf16>
    %10 = vector.shape_cast %9 : vector<4x8x192xbf16> to vector<32x192xbf16>
    %c0_2 = arith.constant 0 : index
    %c0_3 = arith.constant 0 : index
    %c0_4 = arith.constant 0 : index
    %11 = vector.load %arg3[%c0_2, %c0_3, %c0_4] : memref<3x192x128xbf16, #tpu.memory_space<vmem>>, vector<1x192x128xbf16>
    %12 = vector.shape_cast %11 : vector<1x192x128xbf16> to vector<192x128xbf16>
    %cst = arith.constant dense<0.000000e+00> : vector<32x128xf32>
    %13 = tpu.matmul %10, %12, %cst {dimension_numbers = #tpu.dot_dimension_numbers<[1], [0], [0], [1], [0, 0, 1, 1], [], []>} : vector<32x192xbf16>, vector<192x128xbf16>, vector<32x128xf32> -> vector<32x128xf32>
    %c1_i32 = arith.constant 1 : i32
    %14 = arith.addi %1, %c1_i32 : i32
    %c0_5 = arith.constant 0 : index
    %15 = arith.index_cast %14 : i32 to index
    %c0_6 = arith.constant 0 : index
    %c0_7 = arith.constant 0 : index
    %16 = vector.load %arg2[%c0_5, %15, %c0_6, %c0_7] : memref<1x10x10x64xbf16, #tpu.memory_space<vmem>>, vector<1x4x10x64xbf16>
    %17 = vector.shape_cast %16 : vector<1x4x10x64xbf16> to vector<4x10x64xbf16>
    %18 = vector.extract_strided_slice %17 {offsets = [0, 0, 0], sizes = [4, 8, 64], strides = [1, 1, 1]} : vector<4x10x64xbf16> to vector<4x8x64xbf16>
    %19 = vector.extract_strided_slice %17 {offsets = [0, 1, 0], sizes = [4, 8, 64], strides = [1, 1, 1]} : vector<4x10x64xbf16> to vector<4x8x64xbf16>
    %20 = vector.extract_strided_slice %17 {offsets = [0, 2, 0], sizes = [4, 8, 64], strides = [1, 1, 1]} : vector<4x10x64xbf16> to vector<4x8x64xbf16>
    %21 = tpu.concatenate %18, %19, %20 in 2 : vector<4x8x64xbf16>, vector<4x8x64xbf16>, vector<4x8x64xbf16> -> vector<4x8x192xbf16>
    %22 = vector.shape_cast %21 : vector<4x8x192xbf16> to vector<32x192xbf16>
    %c1 = arith.constant 1 : index
    %c0_8 = arith.constant 0 : index
    %c0_9 = arith.constant 0 : index
    %23 = vector.load %arg3[%c1, %c0_8, %c0_9] : memref<3x192x128xbf16, #tpu.memory_space<vmem>>, vector<1x192x128xbf16>
    %24 = vector.shape_cast %23 : vector<1x192x128xbf16> to vector<192x128xbf16>
    %cst_10 = arith.constant dense<0.000000e+00> : vector<32x128xf32>
    %25 = tpu.matmul %22, %24, %cst_10 {dimension_numbers = #tpu.dot_dimension_numbers<[1], [0], [0], [1], [0, 0, 1, 1], [], []>} : vector<32x192xbf16>, vector<192x128xbf16>, vector<32x128xf32> -> vector<32x128xf32>
    %26 = arith.addf %13, %25 : vector<32x128xf32>
    %c2_i32 = arith.constant 2 : i32
    %27 = arith.addi %1, %c2_i32 : i32
    %c0_11 = arith.constant 0 : index
    %28 = arith.index_cast %27 : i32 to index
    %c0_12 = arith.constant 0 : index
    %c0_13 = arith.constant 0 : index
    %29 = vector.load %arg2[%c0_11, %28, %c0_12, %c0_13] : memref<1x10x10x64xbf16, #tpu.memory_space<vmem>>, vector<1x4x10x64xbf16>
    %30 = vector.shape_cast %29 : vector<1x4x10x64xbf16> to vector<4x10x64xbf16>
    %31 = vector.extract_strided_slice %30 {offsets = [0, 0, 0], sizes = [4, 8, 64], strides = [1, 1, 1]} : vector<4x10x64xbf16> to vector<4x8x64xbf16>
    %32 = vector.extract_strided_slice %30 {offsets = [0, 1, 0], sizes = [4, 8, 64], strides = [1, 1, 1]} : vector<4x10x64xbf16> to vector<4x8x64xbf16>
    %33 = vector.extract_strided_slice %30 {offsets = [0, 2, 0], sizes = [4, 8, 64], strides = [1, 1, 1]} : vector<4x10x64xbf16> to vector<4x8x64xbf16>
    %34 = tpu.concatenate %31, %32, %33 in 2 : vector<4x8x64xbf16>, vector<4x8x64xbf16>, vector<4x8x64xbf16> -> vector<4x8x192xbf16>
    %35 = vector.shape_cast %34 : vector<4x8x192xbf16> to vector<32x192xbf16>
    %c2 = arith.constant 2 : index
    %c0_14 = arith.constant 0 : index
    %c0_15 = arith.constant 0 : index
    %36 = vector.load %arg3[%c2, %c0_14, %c0_15] : memref<3x192x128xbf16, #tpu.memory_space<vmem>>, vector<1x192x128xbf16>
    %37 = vector.shape_cast %36 : vector<1x192x128xbf16> to vector<192x128xbf16>
    %cst_16 = arith.constant dense<0.000000e+00> : vector<32x128xf32>
    %38 = tpu.matmul %35, %37, %cst_16 {dimension_numbers = #tpu.dot_dimension_numbers<[1], [0], [0], [1], [0, 0, 1, 1], [], []>} : vector<32x192xbf16>, vector<192x128xbf16>, vector<32x128xf32> -> vector<32x128xf32>
    %39 = arith.addf %26, %38 : vector<32x128xf32>
    %c0_17 = arith.constant 0 : index
    %c0_18 = arith.constant 0 : index
    %40 = vector.load %arg4[%c0_17, %c0_18] : memref<1x128xf32, #tpu.memory_space<vmem>>, vector<1x128xf32>
    %41 = vector.broadcast %40 : vector<1x128xf32> to vector<32x128xf32>
    %42 = arith.addf %39, %41 : vector<32x128xf32>
    %43 = vector.shape_cast %42 : vector<32x128xf32> to vector<1x4x8x128xf32>
    %44 = arith.truncf %43 : vector<1x4x8x128xf32> to vector<1x4x8x128xbf16>
    %c0_19 = arith.constant 0 : index
    %c0_20 = arith.constant 0 : index
    %c0_21 = arith.constant 0 : index
    %c0_22 = arith.constant 0 : index
    %45 = vector.load %arg5[%c0_19, %c0_20, %c0_21, %c0_22] : memref<1x4x8x128xbf16, #tpu.memory_space<vmem>>, vector<1x4x8x128xbf16>
    tpu.vector_store %arg5[%c0_19, %c0_20, %c0_21, %c0_22], %44 {strides = array<i32>} : memref<1x4x8x128xbf16, #tpu.memory_space<vmem>>, vector<1x4x8x128xbf16>,
    return
  }
  func.func @transform_0(%arg0: i32, %arg1: i32) -> (i32, i32, i32, i32) {
    %c0_i32 = arith.constant 0 : i32
    %c0_i32_0 = arith.constant 0 : i32
    %c0_i32_1 = arith.constant 0 : i32
    %c0_i32_2 = arith.constant 0 : i32
    return %arg0, %c0_i32, %c0_i32_0, %c0_i32_1 : i32, i32, i32, i32
  }
  func.func @transform_1(%arg0: i32, %arg1: i32) -> (i32, i32, i32) {
    %c0_i32 = arith.constant 0 : i32
    %c0_i32_0 = arith.constant 0 : i32
    %c0_i32_1 = arith.constant 0 : i32
    %c0_i32_2 = arith.constant 0 : i32
    return %c0_i32, %c0_i32_0, %c0_i32_1 : i32, i32, i32
  }
  func.func @transform_2(%arg0: i32, %arg1: i32) -> (i32, i32) {
    %c0_i32 = arith.constant 0 : i32
    %c0_i32_0 = arith.constant 0 : i32
    %c0_i32_1 = arith.constant 0 : i32
    return %c0_i32, %c0_i32_0 : i32, i32
  }
  func.func @transform_3(%arg0: i32, %arg1: i32) -> (i32, i32, i32, i32) {
    %c0_i32 = arith.constant 0 : i32
    %c0_i32_0 = arith.constant 0 : i32
    %c0_i32_1 = arith.constant 0 : i32
    return %arg0, %arg1, %c0_i32, %c0_i32_0 : i32, i32, i32, i32
  }
}

module attributes {stable_mosaic.version = 11 : i64} {
  func.func @_conv3x3_kernel(%arg0: i32, %arg1: i32, %arg2: memref<1x10x10x128xbf16, #tpu.memory_space<vmem>>, %arg3: memref<3x384x128xbf16, #tpu.memory_space<vmem>>, %arg4: memref<1x128xf32, #tpu.memory_space<vmem>>, %arg5: memref<1x4x8x128xbf16, #tpu.memory_space<vmem>>) attributes {dimension_semantics = [#tpu.dimension_semantics<parallel>, #tpu.dimension_semantics<parallel>], iteration_bounds = array<i64: 2, 2>, scalar_prefetch = 0 : i64, scratch_operands = 0 : i64, tpu.core_type = #tpu.core_type<tc>, window_params = [{transform_indices = @transform_0, window_bounds = array<i64: 1, 10, 10, 128>}, {pipeline_mode = #tpu.pipeline_mode<synchronous>, transform_indices = @transform_1, window_bounds = array<i64: 3, 384, 128>}, {pipeline_mode = #tpu.pipeline_mode<synchronous>, transform_indices = @transform_2, window_bounds = array<i64: 1, 128>}, {transform_indices = @transform_3, window_bounds = array<i64: 1, 4, 8, 128>}]} {
    %c4_i32 = arith.constant 4 : i32
    %0 = arith.muli %arg1, %c4_i32 : i32
    %1 = tpu.assume_multiple %0, 4 : i32
    %c0_i32 = arith.constant 0 : i32
    %2 = arith.addi %1, %c0_i32 : i32
    %c0 = arith.constant 0 : index
    %3 = arith.index_cast %2 : i32 to index
    %c0_0 = arith.constant 0 : index
    %c0_1 = arith.constant 0 : index
    %4 = vector.load %arg2[%c0, %3, %c0_0, %c0_1] : memref<1x10x10x128xbf16, #tpu.memory_space<vmem>>, vector<1x4x10x128xbf16>
    %5 = vector.shape_cast %4 : vector<1x4x10x128xbf16> to vector<4x10x128xbf16>
    %cst = arith.constant 0.000000e+00 : bf16
    %6 = vector.broadcast %cst : bf16 to vector<4x10x128xbf16>
    %7 = arith.maximumf %5, %6 : vector<4x10x128xbf16>
    %8 = vector.extract_strided_slice %7 {offsets = [0, 0, 0], sizes = [4, 8, 128], strides = [1, 1, 1]} : vector<4x10x128xbf16> to vector<4x8x128xbf16>
    %9 = vector.extract_strided_slice %7 {offsets = [0, 1, 0], sizes = [4, 8, 128], strides = [1, 1, 1]} : vector<4x10x128xbf16> to vector<4x8x128xbf16>
    %10 = vector.extract_strided_slice %7 {offsets = [0, 2, 0], sizes = [4, 8, 128], strides = [1, 1, 1]} : vector<4x10x128xbf16> to vector<4x8x128xbf16>
    %11 = tpu.concatenate %8, %9, %10 in 2 : vector<4x8x128xbf16>, vector<4x8x128xbf16>, vector<4x8x128xbf16> -> vector<4x8x384xbf16>
    %12 = vector.shape_cast %11 : vector<4x8x384xbf16> to vector<32x384xbf16>
    %c0_2 = arith.constant 0 : index
    %c0_3 = arith.constant 0 : index
    %c0_4 = arith.constant 0 : index
    %13 = vector.load %arg3[%c0_2, %c0_3, %c0_4] : memref<3x384x128xbf16, #tpu.memory_space<vmem>>, vector<1x384x128xbf16>
    %14 = vector.shape_cast %13 : vector<1x384x128xbf16> to vector<384x128xbf16>
    %cst_5 = arith.constant dense<0.000000e+00> : vector<32x128xf32>
    %15 = tpu.matmul %12, %14, %cst_5 {dimension_numbers = #tpu.dot_dimension_numbers<[1], [0], [0], [1], [0, 0, 1, 1], [], []>} : vector<32x384xbf16>, vector<384x128xbf16>, vector<32x128xf32> -> vector<32x128xf32>
    %c1_i32 = arith.constant 1 : i32
    %16 = arith.addi %1, %c1_i32 : i32
    %c0_6 = arith.constant 0 : index
    %17 = arith.index_cast %16 : i32 to index
    %c0_7 = arith.constant 0 : index
    %c0_8 = arith.constant 0 : index
    %18 = vector.load %arg2[%c0_6, %17, %c0_7, %c0_8] : memref<1x10x10x128xbf16, #tpu.memory_space<vmem>>, vector<1x4x10x128xbf16>
    %19 = vector.shape_cast %18 : vector<1x4x10x128xbf16> to vector<4x10x128xbf16>
    %cst_9 = arith.constant 0.000000e+00 : bf16
    %20 = vector.broadcast %cst_9 : bf16 to vector<4x10x128xbf16>
    %21 = arith.maximumf %19, %20 : vector<4x10x128xbf16>
    %22 = vector.extract_strided_slice %21 {offsets = [0, 0, 0], sizes = [4, 8, 128], strides = [1, 1, 1]} : vector<4x10x128xbf16> to vector<4x8x128xbf16>
    %23 = vector.extract_strided_slice %21 {offsets = [0, 1, 0], sizes = [4, 8, 128], strides = [1, 1, 1]} : vector<4x10x128xbf16> to vector<4x8x128xbf16>
    %24 = vector.extract_strided_slice %21 {offsets = [0, 2, 0], sizes = [4, 8, 128], strides = [1, 1, 1]} : vector<4x10x128xbf16> to vector<4x8x128xbf16>
    %25 = tpu.concatenate %22, %23, %24 in 2 : vector<4x8x128xbf16>, vector<4x8x128xbf16>, vector<4x8x128xbf16> -> vector<4x8x384xbf16>
    %26 = vector.shape_cast %25 : vector<4x8x384xbf16> to vector<32x384xbf16>
    %c1 = arith.constant 1 : index
    %c0_10 = arith.constant 0 : index
    %c0_11 = arith.constant 0 : index
    %27 = vector.load %arg3[%c1, %c0_10, %c0_11] : memref<3x384x128xbf16, #tpu.memory_space<vmem>>, vector<1x384x128xbf16>
    %28 = vector.shape_cast %27 : vector<1x384x128xbf16> to vector<384x128xbf16>
    %cst_12 = arith.constant dense<0.000000e+00> : vector<32x128xf32>
    %29 = tpu.matmul %26, %28, %cst_12 {dimension_numbers = #tpu.dot_dimension_numbers<[1], [0], [0], [1], [0, 0, 1, 1], [], []>} : vector<32x384xbf16>, vector<384x128xbf16>, vector<32x128xf32> -> vector<32x128xf32>
    %30 = arith.addf %15, %29 : vector<32x128xf32>
    %c2_i32 = arith.constant 2 : i32
    %31 = arith.addi %1, %c2_i32 : i32
    %c0_13 = arith.constant 0 : index
    %32 = arith.index_cast %31 : i32 to index
    %c0_14 = arith.constant 0 : index
    %c0_15 = arith.constant 0 : index
    %33 = vector.load %arg2[%c0_13, %32, %c0_14, %c0_15] : memref<1x10x10x128xbf16, #tpu.memory_space<vmem>>, vector<1x4x10x128xbf16>
    %34 = vector.shape_cast %33 : vector<1x4x10x128xbf16> to vector<4x10x128xbf16>
    %cst_16 = arith.constant 0.000000e+00 : bf16
    %35 = vector.broadcast %cst_16 : bf16 to vector<4x10x128xbf16>
    %36 = arith.maximumf %34, %35 : vector<4x10x128xbf16>
    %37 = vector.extract_strided_slice %36 {offsets = [0, 0, 0], sizes = [4, 8, 128], strides = [1, 1, 1]} : vector<4x10x128xbf16> to vector<4x8x128xbf16>
    %38 = vector.extract_strided_slice %36 {offsets = [0, 1, 0], sizes = [4, 8, 128], strides = [1, 1, 1]} : vector<4x10x128xbf16> to vector<4x8x128xbf16>
    %39 = vector.extract_strided_slice %36 {offsets = [0, 2, 0], sizes = [4, 8, 128], strides = [1, 1, 1]} : vector<4x10x128xbf16> to vector<4x8x128xbf16>
    %40 = tpu.concatenate %37, %38, %39 in 2 : vector<4x8x128xbf16>, vector<4x8x128xbf16>, vector<4x8x128xbf16> -> vector<4x8x384xbf16>
    %41 = vector.shape_cast %40 : vector<4x8x384xbf16> to vector<32x384xbf16>
    %c2 = arith.constant 2 : index
    %c0_17 = arith.constant 0 : index
    %c0_18 = arith.constant 0 : index
    %42 = vector.load %arg3[%c2, %c0_17, %c0_18] : memref<3x384x128xbf16, #tpu.memory_space<vmem>>, vector<1x384x128xbf16>
    %43 = vector.shape_cast %42 : vector<1x384x128xbf16> to vector<384x128xbf16>
    %cst_19 = arith.constant dense<0.000000e+00> : vector<32x128xf32>
    %44 = tpu.matmul %41, %43, %cst_19 {dimension_numbers = #tpu.dot_dimension_numbers<[1], [0], [0], [1], [0, 0, 1, 1], [], []>} : vector<32x384xbf16>, vector<384x128xbf16>, vector<32x128xf32> -> vector<32x128xf32>
    %45 = arith.addf %30, %44 : vector<32x128xf32>
    %c0_20 = arith.constant 0 : index
    %c0_21 = arith.constant 0 : index
    %46 = vector.load %arg4[%c0_20, %c0_21] : memref<1x128xf32, #tpu.memory_space<vmem>>, vector<1x128xf32>
    %47 = vector.broadcast %46 : vector<1x128xf32> to vector<32x128xf32>
    %48 = arith.addf %45, %47 : vector<32x128xf32>
    %cst_22 = arith.constant 0.000000e+00 : f32
    %49 = vector.broadcast %cst_22 : f32 to vector<32x128xf32>
    %50 = arith.maximumf %48, %49 : vector<32x128xf32>
    %51 = vector.shape_cast %50 : vector<32x128xf32> to vector<1x4x8x128xf32>
    %52 = arith.truncf %51 : vector<1x4x8x128xf32> to vector<1x4x8x128xbf16>
    %c0_23 = arith.constant 0 : index
    %c0_24 = arith.constant 0 : index
    %c0_25 = arith.constant 0 : index
    %c0_26 = arith.constant 0 : index
    %53 = vector.load %arg5[%c0_23, %c0_24, %c0_25, %c0_26] : memref<1x4x8x128xbf16, #tpu.memory_space<vmem>>, vector<1x4x8x128xbf16>
    tpu.vector_store %arg5[%c0_23, %c0_24, %c0_25, %c0_26], %52 {strides = array<i32>} : memref<1x4x8x128xbf16, #tpu.memory_space<vmem>>, vector<1x4x8x128xbf16>,
    return
  }
  func.func @transform_0(%arg0: i32, %arg1: i32) -> (i32, i32, i32, i32) {
    %c0_i32 = arith.constant 0 : i32
    %c0_i32_0 = arith.constant 0 : i32
    %c0_i32_1 = arith.constant 0 : i32
    %c0_i32_2 = arith.constant 0 : i32
    return %arg0, %c0_i32, %c0_i32_0, %c0_i32_1 : i32, i32, i32, i32
  }
  func.func @transform_1(%arg0: i32, %arg1: i32) -> (i32, i32, i32) {
    %c0_i32 = arith.constant 0 : i32
    %c0_i32_0 = arith.constant 0 : i32
    %c0_i32_1 = arith.constant 0 : i32
    %c0_i32_2 = arith.constant 0 : i32
    return %c0_i32, %c0_i32_0, %c0_i32_1 : i32, i32, i32
  }
  func.func @transform_2(%arg0: i32, %arg1: i32) -> (i32, i32) {
    %c0_i32 = arith.constant 0 : i32
    %c0_i32_0 = arith.constant 0 : i32
    %c0_i32_1 = arith.constant 0 : i32
    return %c0_i32, %c0_i32_0 : i32, i32
  }
  func.func @transform_3(%arg0: i32, %arg1: i32) -> (i32, i32, i32, i32) {
    %c0_i32 = arith.constant 0 : i32
    %c0_i32_0 = arith.constant 0 : i32
    %c0_i32_1 = arith.constant 0 : i32
    return %arg0, %arg1, %c0_i32, %c0_i32_0 : i32, i32, i32, i32
  }
}

</mosaic_0001>

<llo_original>
// kernel: vgg16_feature_extractor.4
$region0: #{vgg16_feature_extractor.4}
  #allocation0 [shape = 'u32[]', space=smem, size = 0x4, offset = 0x4, fixed_abs, tag = 'smem constant byte address 0x4 - core index']
  #allocation1 [shape = 'u32[144,128]{1,0:T(1,128)}', space=vmem, size = 0x12000, scoped, tag = 'internal scratch']
  %s0 = inlined_call_operand.vmem [shape: bf16[2,16,16,27], index: 0, kind: input, shape index: {}]
  %s1 = inlined_call_operand.vmem [shape: bf16[27,64], index: 1, kind: input, shape index: {}]
  %s2 = inlined_call_operand.vmem [shape: f32[1,64], index: 2, kind: input, shape index: {}]
  %s3 = inlined_call_operand.vmem [shape: bf16[2,16,16,64], index: 3, kind: output, shape index: {}]
  %s4 = sld [smem:[#allocation0]]
  $region45: #{vgg16_feature_extractor.4} parent=0
    _
  %s6 = ssub.s32 1, %s4
  %s7 = scalar_select 0, %s6, %s4
  loop: start=0, step=1, limit=6
  $region2: #{vgg16_feature_extractor.4} parent=0 // loop_pre_header
    _
  $region3: #{vgg16_feature_extractor.4} parent=0 // loop_header
    %s9 = sphi 0, %s13
    %p10 = scmp.ge.s32.totalorder %s9, 6
    %s16 = sphi 0, %s28
    %s17 = sphi 0, %s24
    %s18 = sphi 0, %s16
    %s19 = sphi 0, %s17
    %s20 = sphi 0, %s18
    %s21 = sphi 0, %s19
    %s33 = sphi 0, %s35
    %s36 = sphi 0, %s33
    %s37 = sphi 0, %s36
    %s53 = sphi 0, %s37
    %s57 = sphi 0, %s57
    %s59 = sphi 0, %s57
    %s60 = sphi 0, %s59
    %s74 = sphi 0, %s60
    %s78 = sphi 0, %s78
    %s80 = sphi 0, %s78
    %s81 = sphi 0, %s80
    %s95 = sphi 0, %s81
    %s103 = sphi 0, %s105
    %s106 = sphi 0, %s103
    %s107 = sphi 0, %s106
    %s123 = sphi 0, %s107
  $region4: #{vgg16_feature_extractor.4} parent=0 // loop_header_branch
    %12 = sbr.rel (%p10) target = $region8
  $region5: #{vgg16_feature_extractor.4} parent=0 // loop_body
    %s14 = ssub.s32 %s9, 1
    %s15 = ssub.s32 %s9, 2
    %s22 = sadd.s32 1, %s17
    %p23 = scmp.ge.s32.totalorder %s22, 2
    %s24 = scalar_select %p23, 0, %s22
    %s25 = sadd.s32 1, %s16
    %s26 = scalar_select %p23, %s25, %s16
    %p27 = scmp.ge.s32.totalorder %s26, 2
    %s28 = scalar_select %p27, 0, %s26
    %s29 = ssub.s32 %s16, %s28
    %s30 = ssub.s32 %s17, %s24
    %s31 = sor.u32 %s29, %s30
    %p32 = scmp.eq.s32.totalorder %s31, 0
    %s34 = sadd.s32 %s33, 1
    %s35 = scalar_select %p32, %s33, %s34
    %p38 = pneg %p32
    %p39 = scmp.eq.s32.totalorder %s9, 3
    %p40 = por %p38, %p39
    %p41 = scmp.ne.s32.totalorder %s33, %s36
    %p42 = scmp.eq.s32.totalorder %s9, 0
    %p43 = por %p41, %p42
    %p44 = scmp.ne.s32.totalorder %s33, %s36
    %p45 = scmp.eq.s32.totalorder %s14, 3
    %p46 = por %p44, %p45
    %p47 = scmp.ne.s32.totalorder %s36, %s37
    %p48 = scmp.eq.s32.totalorder %s14, 0
    %p49 = por %p47, %p48
    %p50 = scmp.ne.s32.totalorder %s36, %s37
    %p51 = scmp.eq.s32.totalorder %s15, 3
    %p52 = por %p50, %p51
    %p54 = scmp.ne.s32.totalorder %s37, %s53
    %p55 = scmp.eq.s32.totalorder %s15, 0
    %p56 = por %p54, %p55
    %s58 = sadd.s32 %s57, 1
    %p61 = scmp.eq.s32.totalorder %s9, 3
    %p62 = scmp.ne.s32.totalorder %s57, %s59
    %p63 = scmp.eq.s32.totalorder %s9, 0
    %p64 = por %p62, %p63
    %p65 = scmp.ne.s32.totalorder %s57, %s59
    %p66 = scmp.eq.s32.totalorder %s14, 3
    %p67 = por %p65, %p66
    %p68 = scmp.ne.s32.totalorder %s59, %s60
    %p69 = scmp.eq.s32.totalorder %s14, 0
    %p70 = por %p68, %p69
    %p71 = scmp.ne.s32.totalorder %s59, %s60
    %p72 = scmp.eq.s32.totalorder %s15, 3
    %p73 = por %p71, %p72
    %p75 = scmp.ne.s32.totalorder %s60, %s74
    %p76 = scmp.eq.s32.totalorder %s15, 0
    %p77 = por %p75, %p76
    %s79 = sadd.s32 %s78, 1
    %p82 = scmp.eq.s32.totalorder %s9, 3
    %p83 = scmp.ne.s32.totalorder %s78, %s80
    %p84 = scmp.eq.s32.totalorder %s9, 0
    %p85 = por %p83, %p84
    %p86 = scmp.ne.s32.totalorder %s78, %s80
    %p87 = scmp.eq.s32.totalorder %s14, 3
    %p88 = por %p86, %p87
    %p89 = scmp.ne.s32.totalorder %s80, %s81
    %p90 = scmp.eq.s32.totalorder %s14, 0
    %p91 = por %p89, %p90
    %p92 = scmp.ne.s32.totalorder %s80, %s81
    %p93 = scmp.eq.s32.totalorder %s15, 3
    %p94 = por %p92, %p93
    %p96 = scmp.ne.s32.totalorder %s81, %s95
    %p97 = scmp.eq.s32.totalorder %s15, 0
    %p98 = por %p96, %p97
    %s99 = ssub.s32 %s16, %s28
    %s100 = ssub.s32 %s17, %s24
    %s101 = sor.u32 %s99, %s100
    %p102 = scmp.eq.s32.totalorder %s101, 0
    %s104 = sadd.s32 %s103, 1
    %s105 = scalar_select %p102, %s103, %s104
    %p108 = pneg %p102
    %p109 = scmp.eq.s32.totalorder %s9, 3
    %p110 = por %p108, %p109
    %p111 = scmp.ne.s32.totalorder %s103, %s106
    %p112 = scmp.eq.s32.totalorder %s9, 0
    %p113 = por %p111, %p112
    %p114 = scmp.ne.s32.totalorder %s103, %s106
    %p115 = scmp.eq.s32.totalorder %s14, 3
    %p116 = por %p114, %p115
    %p117 = scmp.ne.s32.totalorder %s106, %s107
    %p118 = scmp.eq.s32.totalorder %s14, 0
    %p119 = por %p117, %p118
    %p120 = scmp.ne.s32.totalorder %s106, %s107
    %p121 = scmp.eq.s32.totalorder %s15, 3
    %p122 = por %p120, %p121
    %p124 = scmp.ne.s32.totalorder %s107, %s123
    %p125 = scmp.eq.s32.totalorder %s15, 0
    %p126 = por %p124, %p125
    %p127 = scmp.le.s32.totalorder 1, %s9
    %p128 = scmp.lt.s32.totalorder %s9, 5
    %p129 = pnand %p127, %p128
    %p130 = pneg %p129
    // Predicated region
    $region9: #{vgg16_feature_extractor.4} parent=5 // pred_check
      _
    $region10: #{vgg16_feature_extractor.4} parent=5 // pred_check_branch
      %132 = sbr.rel (%p129) target = $region12
    $region11: #{vgg16_feature_extractor.4} parent=5 // pred_region
      %s133 = ssub.s32 %s9, 1
      // Predicated region
      $region13: #{vgg16_feature_extractor.4} parent=11 // pred_check
        %p134 = pneg %p70
      $region14: #{vgg16_feature_extractor.4} parent=11 // pred_check_branch
        %136 = sbr.rel (%p134) target = $region16
      $region15: #{vgg16_feature_extractor.4} parent=11 // pred_region
        _
      $region16: #{vgg16_feature_extractor.4} parent=11 // pred_fallthru
        _
      // Predicated region
      $region17: #{vgg16_feature_extractor.4} parent=11 // pred_check
        %p137 = pneg %p91
      $region18: #{vgg16_feature_extractor.4} parent=11 // pred_check_branch
        %139 = sbr.rel (%p137) target = $region20
      $region19: #{vgg16_feature_extractor.4} parent=11 // pred_region
        _
      $region20: #{vgg16_feature_extractor.4} parent=11 // pred_fallthru
        _
    $region12: #{vgg16_feature_extractor.4} parent=5 // pred_fallthru
      _
    %p140 = scmp.lt.s32.totalorder %s9, 4
    // Predicated region
    $region21: #{vgg16_feature_extractor.4} parent=5 // pred_check
      %p141 = pneg %p140
    $region22: #{vgg16_feature_extractor.4} parent=5 // pred_check_branch
      %143 = sbr.rel (%p141) target = $region24
    $region23: #{vgg16_feature_extractor.4} parent=5 // pred_region
      // Predicated region
      $region25: #{vgg16_feature_extractor.4} parent=23 // pred_check
        %p144 = pneg %p43
      $region26: #{vgg16_feature_extractor.4} parent=23 // pred_check_branch
        %146 = sbr.rel (%p144) target = $region28
      $region27: #{vgg16_feature_extractor.4} parent=23 // pred_region
        %s147 = smul.u32 8, %s17
        %p148 = scmp.lt.s32.totalorder %s16, 1
        %s149 = scalar_select %p148, %s16, 1
        %p150 = scmp.lt.s32.totalorder %s147, 15
        %s151 = scalar_select %p150, %s147, 15
        %s152 = smul.addr %s151, 2
        %s153 = smul.addr %s149, 32
        %s154 = sadd.s32 %s152, %s153
        %s155 = smul.addr %s154, 4
        %s156 = scalar_lea.vmem %s0, %s155
        %s157 = smul.u32 8, %s17
      $region28: #{vgg16_feature_extractor.4} parent=23 // pred_fallthru
        _
    $region24: #{vgg16_feature_extractor.4} parent=5 // pred_fallthru
      _
    %p158 = scmp.le.s32.totalorder 1, %s9
    %p159 = scmp.lt.s32.totalorder %s9, 5
    %p160 = pnand %p158, %p159
    %p161 = pneg %p160
    // Predicated region
    $region29: #{vgg16_feature_extractor.4} parent=5 // pred_check
      _
    $region30: #{vgg16_feature_extractor.4} parent=5 // pred_check_branch
      %163 = sbr.rel (%p160) target = $region32
    $region31: #{vgg16_feature_extractor.4} parent=5 // pred_region
      %s164 = ssub.s32 %s9, 1
      %s165 = smul.u32 8, %s19
      %p166 = scmp.lt.s32.totalorder %s18, 1
      %s167 = scalar_select %p166, %s18, 1
      %p168 = scmp.lt.s32.totalorder %s165, 15
      %s169 = scalar_select %p168, %s165, 15
      %s170 = smul.addr %s169, 2
      %s171 = smul.addr %s167, 32
      %s172 = sadd.s32 %s170, %s171
      %s173 = smul.addr %s172, 4
      %s174 = scalar_lea.vmem %s0, %s173
      %p175 = pneg %p49
      %p176 = pneg %p46
      %p177 = pneg %p70
      %p178 = pneg %p67
      %p179 = pneg %p91
      %p180 = pneg %p88
      %p181 = pneg %p119
      %p182 = pneg %p116
      %s183 = smul.u32 8, %s19
      %p184 = scmp.lt.s32.totalorder %s18, 1
      %s185 = scalar_select %p184, %s18, 1
      %p186 = scmp.lt.s32.totalorder %s183, 15
      %s187 = scalar_select %p186, %s183, 15
      %s188 = smul.addr %s187, 2
      %s189 = smul.addr %s185, 32
      %s190 = sadd.s32 %s188, %s189
      %s191 = smul.addr %s190, 4
      %s192 = scalar_lea.vmem %s3, %s191
      %s193 = smul.u32 8, %s19
      %p194 = scmp.lt.s32.totalorder %s18, 1
      %s195 = scalar_select %p194, %s18, 1
      %p196 = scmp.lt.s32.totalorder %s193, 15
      %s197 = scalar_select %p196, %s193, 15
      %s198 = smul.addr %s197, 2
      %s199 = smul.addr %s195, 32
      %s200 = sadd.s32 %s198, %s199
      %s201 = smul.addr %s200, 4
      %s202 = scalar_lea.vmem %s0, %s201
      %s203 = smul.u32 8, %s19
      %s204 = smul.u32 8, %s19
      %p205 = scmp.lt.s32.totalorder %s18, 1
      %s206 = scalar_select %p205, %s18, 1
      %p207 = scmp.lt.s32.totalorder %s204, 15
      %s208 = scalar_select %p207, %s204, 15
      %s209 = smul.addr %s208, 2
      %s210 = smul.addr %s206, 32
      %s211 = sadd.s32 %s209, %s210
      %s212 = smul.addr %s211, 4
      %s213 = scalar_lea.vmem %s3, %s212
      %s214 = smul.u32 8, %s19
      %v216 = vld [vmem:[%s202] sm:$0xf]
      %v217 = vld [vmem:[%s202 + $0x4] sm:$0xf]
      %v218 = vld [vmem:[%s202 + $0x8] sm:$0xf]
      %v219 = vld [vmem:[%s202 + $0xc] sm:$0xf]
      %v220 = vld [vmem:[%s202 + $0x10] sm:$0xf]
      %v221 = vld [vmem:[%s202 + $0x14] sm:$0xf]
      %v222 = vld [vmem:[%s202 + $0x18] sm:$0xf]
      %v223 = vld [vmem:[%s202 + $0x1c] sm:$0xf]
      %v224 = vld [vmem:[%s202 + $0x20] sm:$0xf]
      %v225 = vld [vmem:[%s202 + $0x24] sm:$0xf]
      %v226 = vld [vmem:[%s202 + $0x28] sm:$0xf]
      %v227 = vld [vmem:[%s202 + $0x2c] sm:$0xf]
      %v228 = vld [vmem:[%s202 + $0x30] sm:$0xf]
      %v229 = vld [vmem:[%s202 + $0x34] sm:$0xf]
      %v230 = vld [vmem:[%s202 + $0x38] sm:$0xf]
      %v231 = vld [vmem:[%s202 + $0x3c] sm:$0xf]
      %v232 = vld [vmem:[%s1] sm:$0xf]
      %v233 = vld [vmem:[%s1 + $0x4] sm:$0xf]
      %v234 = vld [vmem:[%s1 + $0x8] sm:$0xf]
      %v235 = vld [vmem:[%s1 + $0xc] sm:$0x3]
      %v236 = vld [vmem:[%s2] sm:$0x1]
      %v238 = vlaneseq
      %v239 = vshrl.u32 %v238, 7
      %v240 = vsub.s32 0, %v239
      %v241 = vrot.slane %v236, %v240
      %v259 = vunpack.c.l.b16 %v216
      %v260 = vunpack.c.l.b16 %v217
      %v261 = vunpack.c.l.b16 %v218
      %v262 = vunpack.c.l.b16 %v219
      %v263 = vunpack.c.l.b16 %v220
      %v264 = vunpack.c.l.b16 %v221
      %v265 = vunpack.c.l.b16 %v222
      %v266 = vunpack.c.l.b16 %v223
      %v267 = vunpack.c.l.b16 %v224
      %v268 = vunpack.c.l.b16 %v225
      %v269 = vunpack.c.l.b16 %v226
      %v270 = vunpack.c.l.b16 %v227
      %v271 = vunpack.c.l.b16 %v228
      %v272 = vunpack.c.l.b16 %v229
      %v273 = vunpack.c.l.b16 %v230
      %v274 = vunpack.c.l.b16 %v231
      %v275 = vpack.c.b16 %v260, %v259
      %v276 = vpack.c.b16 %v262, %v261
      %v277 = vpack.c.b16 %v264, %v263
      %v278 = vpack.c.b16 %v266, %v265
      %v279 = vpack.c.b16 %v268, %v267
      %v280 = vpack.c.b16 %v270, %v269
      %v281 = vpack.c.b16 %v272, %v271
      %v282 = vpack.c.b16 %v274, %v273
      %v287 = vunpack.c.l.b16 %v232
      %v288 = vunpack.c.l.b16 %v233
      %v289 = vunpack.c.l.b16 %v234
      %v290 = vunpack.c.l.b16 %v235
      %v291 = vpack.c.b16 %v288, %v287
      %v292 = vpack.c.b16 %v290, %v289
      %vm294 = vcmask 220160
      %v296 = vsel %vm294, %v275, 0
      %v299 = vsel %vm294, %v276, 0
      %v302 = vsel %vm294, %v277, 0
      %v305 = vsel %vm294, %v278, 0
      %v308 = vsel %vm294, %v279, 0
      %v311 = vsel %vm294, %v280, 0
      %v314 = vsel %vm294, %v281, 0
      %v317 = vsel %vm294, %v282, 0
      %vm319 = vcmask 1044480
      %vm320 = vcmask 1045504
      %v321 = vsel %vm319, 4294967295, 65535
      %v322 = vsel %vm320, %v321, 0
      %v324 = vand.u32 %v292, %v322
      %326 = vmatprep.subr.bf16.mxu0 0
      %327 = vmatpush1.bf16.msra.mxu0 %v291
      %328 = vmatprep.subr.bf16.mxu0 0
      %329 = vmatpush1.bf16.msra.mxu0 %v324
      %330 = vmatprep.subr.bf16.mxu0 0
      %331 = vmatpush1.bf16.msra.mxu0 0
      %332 = vmatprep.subr.bf16.mxu0 0
      %333 = vmatpush1.bf16.msra.mxu0 0
      %334 = vmatprep.subr.bf16.mxu0 0
      %335 = vmatpush1.bf16.msra.mxu0 0
      %336 = vmatprep.subr.bf16.mxu0 0
      %337 = vmatpush1.bf16.msra.mxu0 0
      %338 = vmatprep.subr.bf16.mxu0 0
      %339 = vmatpush1.bf16.msra.mxu0 0
      %340 = vmatprep.subr.bf16.mxu0 0
      %341 = vmatpush1.bf16.msra.mxu0 0
      %342 = vmatprep.subr.bf16.mxu0 0
      %343 = vmatpush1.bf16.msra.mxu0 0
      %344 = vmatprep.subr.bf16.mxu0 0
      %345 = vmatpush1.bf16.msra.mxu0 0
      %346 = vmatprep.subr.bf16.mxu0 0
      %347 = vmatpush1.bf16.msra.mxu0 0
      %348 = vmatprep.subr.bf16.mxu0 0
      %349 = vmatpush1.bf16.msra.mxu0 0
      %350 = vmatprep.subr.bf16.mxu0 0
      %351 = vmatpush1.bf16.msra.mxu0 0
      %352 = vmatprep.subr.bf16.mxu0 0
      %353 = vmatpush1.bf16.msra.mxu0 0
      %354 = vmatprep.subr.bf16.mxu0 0
      %355 = vmatpush1.bf16.msra.mxu0 0
      %356 = vmatprep.subr.bf16.mxu0 0
      %357 = vmatpush1.bf16.msra.mxu0 0
      %358 = vmatprep.mubr.bf16.mxu0 0
      %359 = vmatmul.mubr.bf16.gmra.mrb[0].mxu0 %v296
      %v360 = vpop.f32.mrb[0].mxu0
      %v361 = vadd.f32 %v241, %v360
      %v362 = vpop.f32.mrb[0].mxu0
      %v363 = vpop.f32.mrb[0].mxu0
      %v364 = vadd.f32 %v241, %v363
      %v365 = vpop.f32.mrb[0].mxu0
      %366 = vmatprep.mubr.bf16.mxu0 0
      %367 = vmatmul.mubr.bf16.gmra.mrb[0].mxu0 %v299
      %v368 = vpop.f32.mrb[0].mxu0
      %v369 = vadd.f32 %v241, %v368
      %v370 = vpop.f32.mrb[0].mxu0
      %v371 = vpop.f32.mrb[0].mxu0
      %v372 = vadd.f32 %v241, %v371
      %v373 = vpop.f32.mrb[0].mxu0
      %374 = vmatprep.mubr.bf16.mxu0 0
      %375 = vmatmul.mubr.bf16.gmra.mrb[0].mxu0 %v302
      %v376 = vpop.f32.mrb[0].mxu0
      %v377 = vadd.f32 %v241, %v376
      %v378 = vpop.f32.mrb[0].mxu0
      %v379 = vpop.f32.mrb[0].mxu0
      %v380 = vadd.f32 %v241, %v379
      %v381 = vpop.f32.mrb[0].mxu0
      %382 = vmatprep.mubr.bf16.mxu0 0
      %383 = vmatmul.mubr.bf16.gmra.mrb[0].mxu0 %v305
      %v384 = vpop.f32.mrb[0].mxu0
      %v385 = vadd.f32 %v241, %v384
      %v386 = vpop.f32.mrb[0].mxu0
      %v387 = vpop.f32.mrb[0].mxu0
      %v388 = vadd.f32 %v241, %v387
      %v389 = vpop.f32.mrb[0].mxu0
      %390 = vmatprep.mubr.bf16.mxu0 0
      %391 = vmatmul.mubr.bf16.gmra.mrb[0].mxu0 %v308
      %v392 = vpop.f32.mrb[0].mxu0
      %v393 = vadd.f32 %v241, %v392
      %v394 = vpop.f32.mrb[0].mxu0
      %v395 = vpop.f32.mrb[0].mxu0
      %v396 = vadd.f32 %v241, %v395
      %v397 = vpop.f32.mrb[0].mxu0
      %398 = vmatprep.mubr.bf16.mxu0 0
      %399 = vmatmul.mubr.bf16.gmra.mrb[0].mxu0 %v311
      %v400 = vpop.f32.mrb[0].mxu0
      %v401 = vadd.f32 %v241, %v400
      %v402 = vpop.f32.mrb[0].mxu0
      %v403 = vpop.f32.mrb[0].mxu0
      %v404 = vadd.f32 %v241, %v403
      %v405 = vpop.f32.mrb[0].mxu0
      %406 = vmatprep.mubr.bf16.mxu0 0
      %407 = vmatmul.mubr.bf16.gmra.mrb[0].mxu0 %v314
      %v408 = vpop.f32.mrb[0].mxu0
      %v409 = vadd.f32 %v241, %v408
      %v410 = vpop.f32.mrb[0].mxu0
      %v411 = vpop.f32.mrb[0].mxu0
      %v412 = vadd.f32 %v241, %v411
      %v413 = vpop.f32.mrb[0].mxu0
      %414 = vmatprep.mubr.bf16.mxu0 0
      %415 = vmatmul.mubr.bf16.gmra.mrb[0].mxu0 %v317
      %v416 = vpop.f32.mrb[0].mxu0
      %v417 = vadd.f32 %v241, %v416
      %v418 = vpop.f32.mrb[0].mxu0
      %v419 = vpop.f32.mrb[0].mxu0
      %v420 = vadd.f32 %v241, %v419
      %v421 = vpop.f32.mrb[0].mxu0
      %422 = vdwg.mxu0
      %v423 = vmax.f32 %v361, 0.0
      %v424 = vmax.f32 %v364, 0.0
      %v425 = vmax.f32 %v369, 0.0
      %v426 = vmax.f32 %v372, 0.0
      %v427 = vmax.f32 %v377, 0.0
      %v428 = vmax.f32 %v380, 0.0
      %v429 = vmax.f32 %v385, 0.0
      %v430 = vmax.f32 %v388, 0.0
      %v431 = vmax.f32 %v393, 0.0
      %v432 = vmax.f32 %v396, 0.0
      %v433 = vmax.f32 %v401, 0.0
      %v434 = vmax.f32 %v404, 0.0
      %v435 = vmax.f32 %v409, 0.0
      %v436 = vmax.f32 %v412, 0.0
      %v437 = vmax.f32 %v417, 0.0
      %v438 = vmax.f32 %v420, 0.0
      %v439 = vpack.c.bf16 %v424, %v423
      %v440 = vpack.c.bf16 %v426, %v425
      %v441 = vpack.c.bf16 %v428, %v427
      %v442 = vpack.c.bf16 %v430, %v429
      %v443 = vpack.c.bf16 %v432, %v431
      %v444 = vpack.c.bf16 %v434, %v433
      %v445 = vpack.c.bf16 %v436, %v435
      %v446 = vpack.c.bf16 %v438, %v437
      %v455 = vunpack.c.l.b16 %v439
      %v456 = vunpack.c.h.b16 %v439
      %v457 = vunpack.c.l.b16 %v440
      %v458 = vunpack.c.h.b16 %v440
      %v459 = vunpack.c.l.b16 %v441
      %v460 = vunpack.c.h.b16 %v441
      %v461 = vunpack.c.l.b16 %v442
      %v462 = vunpack.c.h.b16 %v442
      %v463 = vunpack.c.l.b16 %v443
      %v464 = vunpack.c.h.b16 %v443
      %v465 = vunpack.c.l.b16 %v444
      %v466 = vunpack.c.h.b16 %v444
      %v467 = vunpack.c.l.b16 %v445
      %v468 = vunpack.c.h.b16 %v445
      %v469 = vunpack.c.l.b16 %v446
      %v470 = vunpack.c.h.b16 %v446
      %v471 = vpack.c.b16 %v455, %v455
      %v472 = vpack.c.b16 %v456, %v456
      %v473 = vpack.c.b16 %v457, %v457
      %v474 = vpack.c.b16 %v458, %v458
      %v475 = vpack.c.b16 %v459, %v459
      %v476 = vpack.c.b16 %v460, %v460
      %v477 = vpack.c.b16 %v461, %v461
      %v478 = vpack.c.b16 %v462, %v462
      %v479 = vpack.c.b16 %v463, %v463
      %v480 = vpack.c.b16 %v464, %v464
      %v481 = vpack.c.b16 %v465, %v465
      %v482 = vpack.c.b16 %v466, %v466
      %v483 = vpack.c.b16 %v467, %v467
      %v484 = vpack.c.b16 %v468, %v468
      %v485 = vpack.c.b16 %v469, %v469
      %v486 = vpack.c.b16 %v470, %v470
      %vm503 = vcmask 519168
      %504 = vst.msk [vmem:[%s213] sm:$0xf] %vm503, %v471
      %505 = vst.msk [vmem:[%s213 + $0x4] sm:$0xf] %vm503, %v472
      %506 = vst.msk [vmem:[%s213 + $0x8] sm:$0xf] %vm503, %v473
      %507 = vst.msk [vmem:[%s213 + $0xc] sm:$0xf] %vm503, %v474
      %508 = vst.msk [vmem:[%s213 + $0x10] sm:$0xf] %vm503, %v475
      %509 = vst.msk [vmem:[%s213 + $0x14] sm:$0xf] %vm503, %v476
      %510 = vst.msk [vmem:[%s213 + $0x18] sm:$0xf] %vm503, %v477
      %511 = vst.msk [vmem:[%s213 + $0x1c] sm:$0xf] %vm503, %v478
      %512 = vst.msk [vmem:[%s213 + $0x20] sm:$0xf] %vm503, %v479
      %513 = vst.msk [vmem:[%s213 + $0x24] sm:$0xf] %vm503, %v480
      %514 = vst.msk [vmem:[%s213 + $0x28] sm:$0xf] %vm503, %v481
      %515 = vst.msk [vmem:[%s213 + $0x2c] sm:$0xf] %vm503, %v482
      %516 = vst.msk [vmem:[%s213 + $0x30] sm:$0xf] %vm503, %v483
      %517 = vst.msk [vmem:[%s213 + $0x34] sm:$0xf] %vm503, %v484
      %518 = vst.msk [vmem:[%s213 + $0x38] sm:$0xf] %vm503, %v485
      %519 = vst.msk [vmem:[%s213 + $0x3c] sm:$0xf] %vm503, %v486
      %s520 = smul.u32 8, %s19
      %p521 = scmp.lt.s32.totalorder %s18, 1
      %s522 = scalar_select %p521, %s18, 1
      %p523 = scmp.lt.s32.totalorder %s520, 15
      %s524 = scalar_select %p523, %s520, 15
      %s525 = smul.addr %s524, 2
      %s526 = smul.addr %s522, 32
      %s527 = sadd.s32 %s525, %s526
      %s528 = smul.addr %s527, 4
      %s529 = scalar_lea.vmem %s3, %s528
      // Predicated region
      $region33: #{vgg16_feature_extractor.4} parent=31 // pred_check
        %p530 = pneg %p116
      $region34: #{vgg16_feature_extractor.4} parent=31 // pred_check_branch
        %532 = sbr.rel (%p530) target = $region36
      $region35: #{vgg16_feature_extractor.4} parent=31 // pred_region
        %s533 = smul.u32 8, %s19
      $region36: #{vgg16_feature_extractor.4} parent=31 // pred_fallthru
        _
    $region32: #{vgg16_feature_extractor.4} parent=5 // pred_fallthru
      _
    %p534 = scmp.le.s32.totalorder 2, %s9
    // Predicated region
    $region37: #{vgg16_feature_extractor.4} parent=5 // pred_check
      %p535 = pneg %p534
    $region38: #{vgg16_feature_extractor.4} parent=5 // pred_check_branch
      %537 = sbr.rel (%p535) target = $region40
    $region39: #{vgg16_feature_extractor.4} parent=5 // pred_region
      %s538 = ssub.s32 %s9, 2
      // Predicated region
      $region41: #{vgg16_feature_extractor.4} parent=39 // pred_check
        %p539 = pneg %p122
      $region42: #{vgg16_feature_extractor.4} parent=39 // pred_check_branch
        %541 = sbr.rel (%p539) target = $region44
      $region43: #{vgg16_feature_extractor.4} parent=39 // pred_region
        %s542 = smul.u32 8, %s21
        %p543 = scmp.lt.s32.totalorder %s20, 1
        %s544 = scalar_select %p543, %s20, 1
        %p545 = scmp.lt.s32.totalorder %s542, 15
        %s546 = scalar_select %p545, %s542, 15
        %s547 = smul.addr %s546, 2
        %s548 = smul.addr %s544, 32
        %s549 = sadd.s32 %s547, %s548
        %s550 = smul.addr %s549, 4
        %s551 = scalar_lea.vmem %s3, %s550
      $region44: #{vgg16_feature_extractor.4} parent=39 // pred_fallthru
        _
    $region40: #{vgg16_feature_extractor.4} parent=5 // pred_fallthru
      _
  $region6: #{vgg16_feature_extractor.4} parent=0 // loop_footer
    %s13 = sadd.s32 1, %s9
  $region7: #{vgg16_feature_extractor.4} parent=0 // loop_footer_branch
    %8 = sbr.rel target = $region3
  $region8: #{vgg16_feature_extractor.4} parent=0 // loop_exit
    _

// kernel: vgg16_feature_extractor.6
$region0: #{vgg16_feature_extractor.6}
  #allocation0 [shape = 'u32[]', space=smem, size = 0x4, offset = 0x4, fixed_abs, tag = 'smem constant byte address 0x4 - core index']
  #allocation1 [shape = 'u32[144,128]{1,0:T(1,128)}', space=vmem, size = 0x12000, scoped, tag = 'internal scratch']
  %s0 = inlined_call_operand.vmem [shape: bf16[2,10,10,64], index: 0, kind: input, shape index: {}]
  %s1 = inlined_call_operand.vmem [shape: bf16[3,192,128], index: 1, kind: input, shape index: {}]
  %s2 = inlined_call_operand.vmem [shape: f32[1,128], index: 2, kind: input, shape index: {}]
  %s3 = inlined_call_operand.vmem [shape: bf16[2,8,8,128], index: 3, kind: output, shape index: {}]
  %s4 = sld [smem:[#allocation0]]
  $region45: #{vgg16_feature_extractor.6} parent=0
    _
  %s6 = ssub.s32 1, %s4
  %s7 = scalar_select 0, %s6, %s4
  loop: start=0, step=1, limit=6
  $region2: #{vgg16_feature_extractor.6} parent=0 // loop_pre_header
    _
  $region3: #{vgg16_feature_extractor.6} parent=0 // loop_header
    %s9 = sphi 0, %s13
    %p10 = scmp.ge.s32.totalorder %s9, 6
    %s16 = sphi 0, %s28
    %s17 = sphi 0, %s24
    %s18 = sphi 0, %s16
    %s19 = sphi 0, %s17
    %s20 = sphi 0, %s18
    %s21 = sphi 0, %s19
    %s31 = sphi 0, %s33
    %s34 = sphi 0, %s31
    %s35 = sphi 0, %s34
    %s51 = sphi 0, %s35
    %s55 = sphi 0, %s55
    %s57 = sphi 0, %s55
    %s58 = sphi 0, %s57
    %s72 = sphi 0, %s58
    %s76 = sphi 0, %s76
    %s78 = sphi 0, %s76
    %s79 = sphi 0, %s78
    %s93 = sphi 0, %s79
    %s101 = sphi 0, %s103
    %s104 = sphi 0, %s101
    %s105 = sphi 0, %s104
    %s121 = sphi 0, %s105
  $region4: #{vgg16_feature_extractor.6} parent=0 // loop_header_branch
    %12 = sbr.rel (%p10) target = $region8
  $region5: #{vgg16_feature_extractor.6} parent=0 // loop_body
    %s14 = ssub.s32 %s9, 1
    %s15 = ssub.s32 %s9, 2
    %s22 = sadd.s32 1, %s17
    %p23 = scmp.ge.s32.totalorder %s22, 2
    %s24 = scalar_select %p23, 0, %s22
    %s25 = sadd.s32 1, %s16
    %s26 = scalar_select %p23, %s25, %s16
    %p27 = scmp.ge.s32.totalorder %s26, 2
    %s28 = scalar_select %p27, 0, %s26
    %s29 = ssub.s32 %s16, %s28
    %p30 = scmp.eq.s32.totalorder %s29, 0
    %s32 = sadd.s32 %s31, 1
    %s33 = scalar_select %p30, %s31, %s32
    %p36 = pneg %p30
    %p37 = scmp.eq.s32.totalorder %s9, 3
    %p38 = por %p36, %p37
    %p39 = scmp.ne.s32.totalorder %s31, %s34
    %p40 = scmp.eq.s32.totalorder %s9, 0
    %p41 = por %p39, %p40
    %p42 = scmp.ne.s32.totalorder %s31, %s34
    %p43 = scmp.eq.s32.totalorder %s14, 3
    %p44 = por %p42, %p43
    %p45 = scmp.ne.s32.totalorder %s34, %s35
    %p46 = scmp.eq.s32.totalorder %s14, 0
    %p47 = por %p45, %p46
    %p48 = scmp.ne.s32.totalorder %s34, %s35
    %p49 = scmp.eq.s32.totalorder %s15, 3
    %p50 = por %p48, %p49
    %p52 = scmp.ne.s32.totalorder %s35, %s51
    %p53 = scmp.eq.s32.totalorder %s15, 0
    %p54 = por %p52, %p53
    %s56 = sadd.s32 %s55, 1
    %p59 = scmp.eq.s32.totalorder %s9, 3
    %p60 = scmp.ne.s32.totalorder %s55, %s57
    %p61 = scmp.eq.s32.totalorder %s9, 0
    %p62 = por %p60, %p61
    %p63 = scmp.ne.s32.totalorder %s55, %s57
    %p64 = scmp.eq.s32.totalorder %s14, 3
    %p65 = por %p63, %p64
    %p66 = scmp.ne.s32.totalorder %s57, %s58
    %p67 = scmp.eq.s32.totalorder %s14, 0
    %p68 = por %p66, %p67
    %p69 = scmp.ne.s32.totalorder %s57, %s58
    %p70 = scmp.eq.s32.totalorder %s15, 3
    %p71 = por %p69, %p70
    %p73 = scmp.ne.s32.totalorder %s58, %s72
    %p74 = scmp.eq.s32.totalorder %s15, 0
    %p75 = por %p73, %p74
    %s77 = sadd.s32 %s76, 1
    %p80 = scmp.eq.s32.totalorder %s9, 3
    %p81 = scmp.ne.s32.totalorder %s76, %s78
    %p82 = scmp.eq.s32.totalorder %s9, 0
    %p83 = por %p81, %p82
    %p84 = scmp.ne.s32.totalorder %s76, %s78
    %p85 = scmp.eq.s32.totalorder %s14, 3
    %p86 = por %p84, %p85
    %p87 = scmp.ne.s32.totalorder %s78, %s79
    %p88 = scmp.eq.s32.totalorder %s14, 0
    %p89 = por %p87, %p88
    %p90 = scmp.ne.s32.totalorder %s78, %s79
    %p91 = scmp.eq.s32.totalorder %s15, 3
    %p92 = por %p90, %p91
    %p94 = scmp.ne.s32.totalorder %s79, %s93
    %p95 = scmp.eq.s32.totalorder %s15, 0
    %p96 = por %p94, %p95
    %s97 = ssub.s32 %s16, %s28
    %s98 = ssub.s32 %s17, %s24
    %s99 = sor.u32 %s97, %s98
    %p100 = scmp.eq.s32.totalorder %s99, 0
    %s102 = sadd.s32 %s101, 1
    %s103 = scalar_select %p100, %s101, %s102
    %p106 = pneg %p100
    %p107 = scmp.eq.s32.totalorder %s9, 3
    %p108 = por %p106, %p107
    %p109 = scmp.ne.s32.totalorder %s101, %s104
    %p110 = scmp.eq.s32.totalorder %s9, 0
    %p111 = por %p109, %p110
    %p112 = scmp.ne.s32.totalorder %s101, %s104
    %p113 = scmp.eq.s32.totalorder %s14, 3
    %p114 = por %p112, %p113
    %p115 = scmp.ne.s32.totalorder %s104, %s105
    %p116 = scmp.eq.s32.totalorder %s14, 0
    %p117 = por %p115, %p116
    %p118 = scmp.ne.s32.totalorder %s104, %s105
    %p119 = scmp.eq.s32.totalorder %s15, 3
    %p120 = por %p118, %p119
    %p122 = scmp.ne.s32.totalorder %s105, %s121
    %p123 = scmp.eq.s32.totalorder %s15, 0
    %p124 = por %p122, %p123
    %p125 = scmp.le.s32.totalorder 1, %s9
    %p126 = scmp.lt.s32.totalorder %s9, 5
    %p127 = pnand %p125, %p126
    %p128 = pneg %p127
    // Predicated region
    $region9: #{vgg16_feature_extractor.6} parent=5 // pred_check
      _
    $region10: #{vgg16_feature_extractor.6} parent=5 // pred_check_branch
      %130 = sbr.rel (%p127) target = $region12
    $region11: #{vgg16_feature_extractor.6} parent=5 // pred_region
      %s131 = ssub.s32 %s9, 1
      // Predicated region
      $region13: #{vgg16_feature_extractor.6} parent=11 // pred_check
        %p132 = pneg %p68
      $region14: #{vgg16_feature_extractor.6} parent=11 // pred_check_branch
        %134 = sbr.rel (%p132) target = $region16
      $region15: #{vgg16_feature_extractor.6} parent=11 // pred_region
        _
      $region16: #{vgg16_feature_extractor.6} parent=11 // pred_fallthru
        _
      // Predicated region
      $region17: #{vgg16_feature_extractor.6} parent=11 // pred_check
        %p135 = pneg %p89
      $region18: #{vgg16_feature_extractor.6} parent=11 // pred_check_branch
        %137 = sbr.rel (%p135) target = $region20
      $region19: #{vgg16_feature_extractor.6} parent=11 // pred_region
        _
      $region20: #{vgg16_feature_extractor.6} parent=11 // pred_fallthru
        _
    $region12: #{vgg16_feature_extractor.6} parent=5 // pred_fallthru
      _
    %p138 = scmp.lt.s32.totalorder %s9, 4
    // Predicated region
    $region21: #{vgg16_feature_extractor.6} parent=5 // pred_check
      %p139 = pneg %p138
    $region22: #{vgg16_feature_extractor.6} parent=5 // pred_check_branch
      %141 = sbr.rel (%p139) target = $region24
    $region23: #{vgg16_feature_extractor.6} parent=5 // pred_region
      // Predicated region
      $region25: #{vgg16_feature_extractor.6} parent=23 // pred_check
        %p142 = pneg %p41
      $region26: #{vgg16_feature_extractor.6} parent=23 // pred_check_branch
        %144 = sbr.rel (%p142) target = $region28
      $region27: #{vgg16_feature_extractor.6} parent=23 // pred_region
        %p145 = scmp.lt.s32.totalorder %s16, 1
        %s146 = scalar_select %p145, %s16, 1
        %s147 = smul.addr %s146, 20
        %s148 = smul.addr %s147, 4
        %s149 = scalar_lea.vmem %s0, %s148
      $region28: #{vgg16_feature_extractor.6} parent=23 // pred_fallthru
        _
    $region24: #{vgg16_feature_extractor.6} parent=5 // pred_fallthru
      _
    %p150 = scmp.le.s32.totalorder 1, %s9
    %p151 = scmp.lt.s32.totalorder %s9, 5
    %p152 = pnand %p150, %p151
    %p153 = pneg %p152
    // Predicated region
    $region29: #{vgg16_feature_extractor.6} parent=5 // pred_check
      _
    $region30: #{vgg16_feature_extractor.6} parent=5 // pred_check_branch
      %155 = sbr.rel (%p152) target = $region32
    $region31: #{vgg16_feature_extractor.6} parent=5 // pred_region
      %s156 = ssub.s32 %s9, 1
      %p157 = scmp.lt.s32.totalorder %s18, 1
      %s158 = scalar_select %p157, %s18, 1
      %s159 = smul.addr %s158, 20
      %s160 = smul.addr %s159, 4
      %s161 = scalar_lea.vmem %s0, %s160
      %p162 = pneg %p47
      %p163 = pneg %p44
      %p164 = pneg %p68
      %p165 = pneg %p65
      %p166 = pneg %p89
      %p167 = pneg %p86
      %p168 = pneg %p117
      %p169 = pneg %p114
      %s170 = smul.u32 4, %s19
      %p171 = scmp.lt.s32.totalorder %s18, 1
      %s172 = scalar_select %p171, %s18, 1
      %p173 = scmp.lt.s32.totalorder %s170, 7
      %s174 = scalar_select %p173, %s170, 7
      %s175 = smul.addr %s172, 8
      %s176 = sadd.s32 %s174, %s175
      %s177 = smul.addr %s176, 4
      %s178 = scalar_lea.vmem %s3, %s177
      %p179 = scmp.lt.s32.totalorder %s18, 1
      %s180 = scalar_select %p179, %s18, 1
      %s181 = smul.addr %s180, 20
      %s182 = smul.addr %s181, 4
      %s183 = scalar_lea.vmem %s0, %s182
      %s184 = smul.u32 4, %s19
      %p185 = scmp.lt.s32.totalorder %s18, 1
      %s186 = scalar_select %p185, %s18, 1
      %p187 = scmp.lt.s32.totalorder %s184, 7
      %s188 = scalar_select %p187, %s184, 7
      %s189 = smul.addr %s186, 8
      %s190 = sadd.s32 %s188, %s189
      %s191 = smul.addr %s190, 4
      %s192 = scalar_lea.vmem %s3, %s191
      %s193 = smul.u32 4, %s19
      %s195 = smul.u32 %s19, 4
      %s196 = smul.u32 %s195, 2
      %s197 = smul.addr %s196, 4
      %s198 = scalar_lea.vmem %s183, %s197
      %v199 = vld [vmem:[%s198] sm:$0xf]
      %v200 = vld [vmem:[%s198 + $0x4] sm:$0x1]
      %v201 = vld [vmem:[%s198 + $0x8] sm:$0xf]
      %v202 = vld [vmem:[%s198 + $0xc] sm:$0x1]
      %v203 = vld [vmem:[%s198 + $0x10] sm:$0xf]
      %v204 = vld [vmem:[%s198 + $0x14] sm:$0x1]
      %v205 = vld [vmem:[%s198 + $0x18] sm:$0xf]
      %v206 = vld [vmem:[%s198 + $0x1c] sm:$0x1]
      %v215 = vunpack.c.l.b16 %v199
      %v216 = vunpack.c.l.b16 %v200
      %v217 = vunpack.c.l.b16 %v201
      %v218 = vunpack.c.l.b16 %v202
      %v219 = vunpack.c.l.b16 %v203
      %v220 = vunpack.c.l.b16 %v204
      %v221 = vunpack.c.l.b16 %v205
      %v222 = vunpack.c.l.b16 %v206
      %v223 = vpack.c.b16 %v216, %v215
      %v224 = vpack.c.b16 %v218, %v217
      %v225 = vpack.c.b16 %v220, %v219
      %v226 = vpack.c.b16 %v222, %v221
      %v228 = vshrl.u32 %v223, 16
      %v230 = vshll.u32 %v223, 16
      %v232 = vrot.slane %v230, 1
      %v233 = vor.u32 %v228, %v232
      %v235 = vshrl.u32 %v224, 16
      %v237 = vshll.u32 %v224, 16
      %v239 = vrot.slane %v237, 1
      %v240 = vor.u32 %v235, %v239
      %v242 = vshrl.u32 %v225, 16
      %v244 = vshll.u32 %v225, 16
      %v246 = vrot.slane %v244, 1
      %v247 = vor.u32 %v242, %v246
      %v249 = vshrl.u32 %v226, 16
      %v251 = vshll.u32 %v226, 16
      %v253 = vrot.slane %v251, 1
      %v254 = vor.u32 %v249, %v253
      %255 = vrot.lane.b32.xlu0 %v233, 64
      %v256 = vpop.permute.xlu0 %255
      %257 = vrot.lane.b32.xlu0 %v240, 64
      %v258 = vpop.permute.xlu0 %257
      %259 = vrot.lane.b32.xlu0 %v247, 64
      %v260 = vpop.permute.xlu0 %259
      %261 = vrot.lane.b32.xlu0 %v254, 64
      %v262 = vpop.permute.xlu0 %261
      %v263 = vrot.slane %v223, 1
      %v264 = vrot.slane %v224, 1
      %v265 = vrot.slane %v225, 1
      %v266 = vrot.slane %v226, 1
      %vm267 = vcmask 523264
      %v270 = vsel %vm267, %v199, %v256
      %v273 = vsel %vm267, %v201, %v258
      %v276 = vsel %vm267, %v203, %v260
      %v279 = vsel %vm267, %v205, %v262
      %v284 = vunpack.c.l.b16 %v270
      %v285 = vunpack.c.l.b16 %v263
      %v286 = vunpack.c.l.b16 %v273
      %v287 = vunpack.c.l.b16 %v264
      %v288 = vunpack.c.l.b16 %v276
      %v289 = vunpack.c.l.b16 %v265
      %v290 = vunpack.c.l.b16 %v279
      %v291 = vunpack.c.l.b16 %v266
      %v292 = vld [vmem:[%s1] sm:$0xf]
      %v293 = vld [vmem:[%s1 + $0x4] sm:$0xf]
      %v294 = vld [vmem:[%s1 + $0x8] sm:$0xf]
      %v295 = vld [vmem:[%s1 + $0xc] sm:$0xf]
      %v296 = vld [vmem:[%s1 + $0x10] sm:$0xf]
      %v297 = vld [vmem:[%s1 + $0x14] sm:$0xf]
      %v298 = vld [vmem:[%s1 + $0x18] sm:$0xf]
      %v299 = vld [vmem:[%s1 + $0x1c] sm:$0xf]
      %v300 = vld [vmem:[%s1 + $0x20] sm:$0xf]
      %v301 = vld [vmem:[%s1 + $0x24] sm:$0xf]
      %v302 = vld [vmem:[%s1 + $0x28] sm:$0xf]
      %v303 = vld [vmem:[%s1 + $0x2c] sm:$0xf]
      %v304 = vld [vmem:[%s1 + $0x30] sm:$0xf]
      %v305 = vld [vmem:[%s1 + $0x34] sm:$0xf]
      %v306 = vld [vmem:[%s1 + $0x38] sm:$0xf]
      %v307 = vld [vmem:[%s1 + $0x3c] sm:$0xf]
      %v308 = vld [vmem:[%s1 + $0x40] sm:$0xf]
      %v309 = vld [vmem:[%s1 + $0x44] sm:$0xf]
      %v310 = vld [vmem:[%s1 + $0x48] sm:$0xf]
      %v311 = vld [vmem:[%s1 + $0x4c] sm:$0xf]
      %v312 = vld [vmem:[%s1 + $0x50] sm:$0xf]
      %v313 = vld [vmem:[%s1 + $0x54] sm:$0xf]
      %v314 = vld [vmem:[%s1 + $0x58] sm:$0xf]
      %v315 = vld [vmem:[%s1 + $0x5c] sm:$0xf]
      %s316 = sadd.s32 %s195, 1
      %s317 = smul.u32 %s316, 2
      %s318 = smul.addr %s317, 4
      %s319 = scalar_lea.vmem %s183, %s318
      %v320 = vld [vmem:[%s319] sm:$0xf]
      %v321 = vld [vmem:[%s319 + $0x4] sm:$0x1]
      %v322 = vld [vmem:[%s319 + $0x8] sm:$0xf]
      %v323 = vld [vmem:[%s319 + $0xc] sm:$0x1]
      %v324 = vld [vmem:[%s319 + $0x10] sm:$0xf]
      %v325 = vld [vmem:[%s319 + $0x14] sm:$0x1]
      %v326 = vld [vmem:[%s319 + $0x18] sm:$0xf]
      %v327 = vld [vmem:[%s319 + $0x1c] sm:$0x1]
      %v336 = vunpack.c.l.b16 %v320
      %v337 = vunpack.c.l.b16 %v321
      %v338 = vunpack.c.l.b16 %v322
      %v339 = vunpack.c.l.b16 %v323
      %v340 = vunpack.c.l.b16 %v324
      %v341 = vunpack.c.l.b16 %v325
      %v342 = vunpack.c.l.b16 %v326
      %v343 = vunpack.c.l.b16 %v327
      %v344 = vpack.c.b16 %v337, %v336
      %v345 = vpack.c.b16 %v339, %v338
      %v346 = vpack.c.b16 %v341, %v340
      %v347 = vpack.c.b16 %v343, %v342
      %v349 = vshrl.u32 %v344, 16
      %v351 = vshll.u32 %v344, 16
      %v353 = vrot.slane %v351, 1
      %v354 = vor.u32 %v349, %v353
      %v356 = vshrl.u32 %v345, 16
      %v358 = vshll.u32 %v345, 16
      %v360 = vrot.slane %v358, 1
      %v361 = vor.u32 %v356, %v360
      %v363 = vshrl.u32 %v346, 16
      %v365 = vshll.u32 %v346, 16
      %v367 = vrot.slane %v365, 1
      %v368 = vor.u32 %v363, %v367
      %v370 = vshrl.u32 %v347, 16
      %v372 = vshll.u32 %v347, 16
      %v374 = vrot.slane %v372, 1
      %v375 = vor.u32 %v370, %v374
      %376 = vrot.lane.b32.xlu0 %v354, 64
      %v377 = vpop.permute.xlu0 %376
      %378 = vrot.lane.b32.xlu0 %v361, 64
      %v379 = vpop.permute.xlu0 %378
      %380 = vrot.lane.b32.xlu0 %v368, 64
      %v381 = vpop.permute.xlu0 %380
      %382 = vrot.lane.b32.xlu0 %v375, 64
      %v383 = vpop.permute.xlu0 %382
      %v384 = vrot.slane %v344, 1
      %v385 = vrot.slane %v345, 1
      %v386 = vrot.slane %v346, 1
      %v387 = vrot.slane %v347, 1
      %v390 = vsel %vm267, %v320, %v377
      %v393 = vsel %vm267, %v322, %v379
      %v396 = vsel %vm267, %v324, %v381
      %v399 = vsel %vm267, %v326, %v383
      %v404 = vunpack.c.l.b16 %v390
      %v405 = vunpack.c.l.b16 %v384
      %v406 = vunpack.c.l.b16 %v393
      %v407 = vunpack.c.l.b16 %v385
      %v408 = vunpack.c.l.b16 %v396
      %v409 = vunpack.c.l.b16 %v386
      %v410 = vunpack.c.l.b16 %v399
      %v411 = vunpack.c.l.b16 %v387
      %s412 = scalar_lea.vmem %s1, 96
      %v413 = vld [vmem:[%s412] sm:$0xf]
      %v414 = vld [vmem:[%s412 + $0x4] sm:$0xf]
      %v415 = vld [vmem:[%s412 + $0x8] sm:$0xf]
      %v416 = vld [vmem:[%s412 + $0xc] sm:$0xf]
      %v417 = vld [vmem:[%s412 + $0x10] sm:$0xf]
      %v418 = vld [vmem:[%s412 + $0x14] sm:$0xf]
      %v419 = vld [vmem:[%s412 + $0x18] sm:$0xf]
      %v420 = vld [vmem:[%s412 + $0x1c] sm:$0xf]
      %v421 = vld [vmem:[%s412 + $0x20] sm:$0xf]
      %v422 = vld [vmem:[%s412 + $0x24] sm:$0xf]
      %v423 = vld [vmem:[%s412 + $0x28] sm:$0xf]
      %v424 = vld [vmem:[%s412 + $0x2c] sm:$0xf]
      %v425 = vld [vmem:[%s412 + $0x30] sm:$0xf]
      %v426 = vld [vmem:[%s412 + $0x34] sm:$0xf]
      %v427 = vld [vmem:[%s412 + $0x38] sm:$0xf]
      %v428 = vld [vmem:[%s412 + $0x3c] sm:$0xf]
      %v429 = vld [vmem:[%s412 + $0x40] sm:$0xf]
      %v430 = vld [vmem:[%s412 + $0x44] sm:$0xf]
      %v431 = vld [vmem:[%s412 + $0x48] sm:$0xf]
      %v432 = vld [vmem:[%s412 + $0x4c] sm:$0xf]
      %v433 = vld [vmem:[%s412 + $0x50] sm:$0xf]
      %v434 = vld [vmem:[%s412 + $0x54] sm:$0xf]
      %v435 = vld [vmem:[%s412 + $0x58] sm:$0xf]
      %v436 = vld [vmem:[%s412 + $0x5c] sm:$0xf]
      %v437 = vpack.c.b16 %v406, %v404
      %v438 = vpack.c.b16 %v407, %v405
      %v439 = vpack.c.b16 %v410, %v408
      %v440 = vpack.c.b16 %v411, %v409
      %v467 = vunpack.c.l.b16 %v413
      %v468 = vunpack.c.l.b16 %v414
      %v469 = vunpack.c.l.b16 %v415
      %v470 = vunpack.c.l.b16 %v416
      %v471 = vunpack.c.l.b16 %v417
      %v472 = vunpack.c.l.b16 %v418
      %v473 = vunpack.c.l.b16 %v419
      %v474 = vunpack.c.l.b16 %v420
      %v475 = vunpack.c.l.b16 %v421
      %v476 = vunpack.c.l.b16 %v422
      %v477 = vunpack.c.l.b16 %v423
      %v478 = vunpack.c.l.b16 %v424
      %v479 = vunpack.c.l.b16 %v425
      %v480 = vunpack.c.l.b16 %v426
      %v481 = vunpack.c.l.b16 %v427
      %v482 = vunpack.c.l.b16 %v428
      %v483 = vunpack.c.l.b16 %v429
      %v484 = vunpack.c.l.b16 %v430
      %v485 = vunpack.c.l.b16 %v431
      %v486 = vunpack.c.l.b16 %v432
      %v487 = vunpack.c.l.b16 %v433
      %v488 = vunpack.c.l.b16 %v434
      %v489 = vunpack.c.l.b16 %v435
      %v490 = vunpack.c.l.b16 %v436
      %v491 = vpack.c.b16 %v468, %v467
      %v492 = vpack.c.b16 %v470, %v469
      %v493 = vpack.c.b16 %v472, %v471
      %v494 = vpack.c.b16 %v474, %v473
      %v495 = vpack.c.b16 %v476, %v475
      %v496 = vpack.c.b16 %v478, %v477
      %v497 = vpack.c.b16 %v480, %v479
      %v498 = vpack.c.b16 %v482, %v481
      %v499 = vpack.c.b16 %v484, %v483
      %v500 = vpack.c.b16 %v486, %v485
      %v501 = vpack.c.b16 %v488, %v487
      %v502 = vpack.c.b16 %v490, %v489
      %v516 = vsel %vm267, %v438, 0
      %v519 = vsel %vm267, %v440, 0
      %521 = vmatprep.subr.bf16.mxu0 0
      %522 = vmatpush1.bf16.msra.mxu0 %v491
      %523 = vmatprep.subr.bf16.mxu0 0
      %524 = vmatpush1.bf16.msra.mxu0 %v492
      %525 = vmatprep.subr.bf16.mxu0 0
      %526 = vmatpush1.bf16.msra.mxu0 %v493
      %527 = vmatprep.subr.bf16.mxu0 0
      %528 = vmatpush1.bf16.msra.mxu0 %v494
      %529 = vmatprep.subr.bf16.mxu0 0
      %530 = vmatpush1.bf16.msra.mxu0 %v495
      %531 = vmatprep.subr.bf16.mxu0 0
      %532 = vmatpush1.bf16.msra.mxu0 %v496
      %533 = vmatprep.subr.bf16.mxu0 0
      %534 = vmatpush1.bf16.msra.mxu0 %v497
      %535 = vmatprep.subr.bf16.mxu0 0
      %536 = vmatpush1.bf16.msra.mxu0 %v498
      %537 = vmatprep.subr.bf16.mxu0 0
      %538 = vmatpush1.bf16.msra.mxu0 %v499
      %539 = vmatprep.subr.bf16.mxu0 0
      %540 = vmatpush1.bf16.msra.mxu0 %v500
      %541 = vmatprep.subr.bf16.mxu0 0
      %542 = vmatpush1.bf16.msra.mxu0 %v501
      %543 = vmatprep.subr.bf16.mxu0 0
      %544 = vmatpush1.bf16.msra.mxu0 %v502
      %545 = vmatprep.subr.bf16.mxu0 0
      %546 = vmatpush1.bf16.msra.mxu0 0
      %547 = vmatprep.subr.bf16.mxu0 0
      %548 = vmatpush1.bf16.msra.mxu0 0
      %549 = vmatprep.subr.bf16.mxu0 0
      %550 = vmatpush1.bf16.msra.mxu0 0
      %551 = vmatprep.subr.bf16.mxu0 0
      %552 = vmatpush1.bf16.msra.mxu0 0
      %553 = vmatprep.mubr.bf16.mxu0 %v516
      %554 = vmatmul.mubr.bf16.gmra.mrb[0].mxu0 %v437
      %v555 = vpop.f32.mrb[0].mxu0
      %v556 = vadd.f32 0.0, %v555
      %v557 = vpop.f32.mrb[0].mxu0
      %v558 = vpop.f32.mrb[0].mxu0
      %v559 = vadd.f32 0.0, %v558
      %v560 = vpop.f32.mrb[0].mxu0
      %561 = vmatprep.mubr.bf16.mxu0 %v519
      %562 = vmatmul.mubr.bf16.gmra.mrb[0].mxu0 %v439
      %v563 = vpop.f32.mrb[0].mxu0
      %v564 = vadd.f32 0.0, %v563
      %v565 = vpop.f32.mrb[0].mxu0
      %v566 = vpop.f32.mrb[0].mxu0
      %v567 = vadd.f32 0.0, %v566
      %v568 = vpop.f32.mrb[0].mxu0
      %569 = vdwg.mxu0
      %v570 = vpack.c.b16 %v286, %v284
      %v571 = vpack.c.b16 %v287, %v285
      %v572 = vpack.c.b16 %v290, %v288
      %v573 = vpack.c.b16 %v291, %v289
      %v600 = vunpack.c.l.b16 %v292
      %v601 = vunpack.c.l.b16 %v293
      %v602 = vunpack.c.l.b16 %v294
      %v603 = vunpack.c.l.b16 %v295
      %v604 = vunpack.c.l.b16 %v296
      %v605 = vunpack.c.l.b16 %v297
      %v606 = vunpack.c.l.b16 %v298
      %v607 = vunpack.c.l.b16 %v299
      %v608 = vunpack.c.l.b16 %v300
      %v609 = vunpack.c.l.b16 %v301
      %v610 = vunpack.c.l.b16 %v302
      %v611 = vunpack.c.l.b16 %v303
      %v612 = vunpack.c.l.b16 %v304
      %v613 = vunpack.c.l.b16 %v305
      %v614 = vunpack.c.l.b16 %v306
      %v615 = vunpack.c.l.b16 %v307
      %v616 = vunpack.c.l.b16 %v308
      %v617 = vunpack.c.l.b16 %v309
      %v618 = vunpack.c.l.b16 %v310
      %v619 = vunpack.c.l.b16 %v311
      %v620 = vunpack.c.l.b16 %v312
      %v621 = vunpack.c.l.b16 %v313
      %v622 = vunpack.c.l.b16 %v314
      %v623 = vunpack.c.l.b16 %v315
      %v624 = vpack.c.b16 %v601, %v600
      %v625 = vpack.c.b16 %v603, %v602
      %v626 = vpack.c.b16 %v605, %v604
      %v627 = vpack.c.b16 %v607, %v606
      %v628 = vpack.c.b16 %v609, %v608
      %v629 = vpack.c.b16 %v611, %v610
      %v630 = vpack.c.b16 %v613, %v612
      %v631 = vpack.c.b16 %v615, %v614
      %v632 = vpack.c.b16 %v617, %v616
      %v633 = vpack.c.b16 %v619, %v618
      %v634 = vpack.c.b16 %v621, %v620
      %v635 = vpack.c.b16 %v623, %v622
      %v649 = vsel %vm267, %v571, 0
      %v652 = vsel %vm267, %v573, 0
      %654 = vmatprep.subr.bf16.mxu0 0
      %655 = vmatpush1.bf16.msra.mxu0 %v624
      %656 = vmatprep.subr.bf16.mxu0 0
      %657 = vmatpush1.bf16.msra.mxu0 %v625
      %658 = vmatprep.subr.bf16.mxu0 0
      %659 = vmatpush1.bf16.msra.mxu0 %v626
      %660 = vmatprep.subr.bf16.mxu0 0
      %661 = vmatpush1.bf16.msra.mxu0 %v627
      %662 = vmatprep.subr.bf16.mxu0 0
      %663 = vmatpush1.bf16.msra.mxu0 %v628
      %664 = vmatprep.subr.bf16.mxu0 0
      %665 = vmatpush1.bf16.msra.mxu0 %v629
      %666 = vmatprep.subr.bf16.mxu0 0
      %667 = vmatpush1.bf16.msra.mxu0 %v630
      %668 = vmatprep.subr.bf16.mxu0 0
      %669 = vmatpush1.bf16.msra.mxu0 %v631
      %670 = vmatprep.subr.bf16.mxu0 0
      %671 = vmatpush1.bf16.msra.mxu0 %v632
      %672 = vmatprep.subr.bf16.mxu0 0
      %673 = vmatpush1.bf16.msra.mxu0 %v633
      %674 = vmatprep.subr.bf16.mxu0 0
      %675 = vmatpush1.bf16.msra.mxu0 %v634
      %676 = vmatprep.subr.bf16.mxu0 0
      %677 = vmatpush1.bf16.msra.mxu0 %v635
      %678 = vmatprep.subr.bf16.mxu0 0
      %679 = vmatpush1.bf16.msra.mxu0 0
      %680 = vmatprep.subr.bf16.mxu0 0
      %681 = vmatpush1.bf16.msra.mxu0 0
      %682 = vmatprep.subr.bf16.mxu0 0
      %683 = vmatpush1.bf16.msra.mxu0 0
      %684 = vmatprep.subr.bf16.mxu0 0
      %685 = vmatpush1.bf16.msra.mxu0 0
      %686 = vmatprep.mubr.bf16.mxu0 %v649
      %687 = vmatmul.mubr.bf16.gmra.mrb[0].mxu0 %v570
      %v688 = vpop.f32.mrb[0].mxu0
      %v689 = vadd.f32 %v556, %v688
      %v690 = vpop.f32.mrb[0].mxu0
      %v691 = vpop.f32.mrb[0].mxu0
      %v692 = vadd.f32 %v559, %v691
      %v693 = vpop.f32.mrb[0].mxu0
      %694 = vmatprep.mubr.bf16.mxu0 %v652
      %695 = vmatmul.mubr.bf16.gmra.mrb[0].mxu0 %v572
      %v696 = vpop.f32.mrb[0].mxu0
      %v697 = vadd.f32 %v564, %v696
      %v698 = vpop.f32.mrb[0].mxu0
      %v699 = vpop.f32.mrb[0].mxu0
      %v700 = vadd.f32 %v567, %v699
      %v701 = vpop.f32.mrb[0].mxu0
      %702 = vdwg.mxu0
      %s703 = sadd.s32 %s195, 2
      %s704 = smul.u32 %s703, 2
      %s705 = smul.addr %s704, 4
      %s706 = scalar_lea.vmem %s183, %s705
      %v707 = vld [vmem:[%s706] sm:$0xf]
      %v708 = vld [vmem:[%s706 + $0x4] sm:$0x1]
      %v709 = vld [vmem:[%s706 + $0x8] sm:$0xf]
      %v710 = vld [vmem:[%s706 + $0xc] sm:$0x1]
      %v711 = vld [vmem:[%s706 + $0x10] sm:$0xf]
      %v712 = vld [vmem:[%s706 + $0x14] sm:$0x1]
      %v713 = vld [vmem:[%s706 + $0x18] sm:$0xf]
      %v714 = vld [vmem:[%s706 + $0x1c] sm:$0x1]
      %v723 = vunpack.c.l.b16 %v707
      %v724 = vunpack.c.l.b16 %v708
      %v725 = vunpack.c.l.b16 %v709
      %v726 = vunpack.c.l.b16 %v710
      %v727 = vunpack.c.l.b16 %v711
      %v728 = vunpack.c.l.b16 %v712
      %v729 = vunpack.c.l.b16 %v713
      %v730 = vunpack.c.l.b16 %v714
      %v731 = vpack.c.b16 %v724, %v723
      %v732 = vpack.c.b16 %v726, %v725
      %v733 = vpack.c.b16 %v728, %v727
      %v734 = vpack.c.b16 %v730, %v729
      %v736 = vshrl.u32 %v731, 16
      %v738 = vshll.u32 %v731, 16
      %v740 = vrot.slane %v738, 1
      %v741 = vor.u32 %v736, %v740
      %v743 = vshrl.u32 %v732, 16
      %v745 = vshll.u32 %v732, 16
      %v747 = vrot.slane %v745, 1
      %v748 = vor.u32 %v743, %v747
      %v750 = vshrl.u32 %v733, 16
      %v752 = vshll.u32 %v733, 16
      %v754 = vrot.slane %v752, 1
      %v755 = vor.u32 %v750, %v754
      %v757 = vshrl.u32 %v734, 16
      %v759 = vshll.u32 %v734, 16
      %v761 = vrot.slane %v759, 1
      %v762 = vor.u32 %v757, %v761
      %763 = vrot.lane.b32.xlu0 %v741, 64
      %v764 = vpop.permute.xlu0 %763
      %765 = vrot.lane.b32.xlu0 %v748, 64
      %v766 = vpop.permute.xlu0 %765
      %767 = vrot.lane.b32.xlu0 %v755, 64
      %v768 = vpop.permute.xlu0 %767
      %769 = vrot.lane.b32.xlu0 %v762, 64
      %v770 = vpop.permute.xlu0 %769
      %v771 = vrot.slane %v731, 1
      %v772 = vrot.slane %v732, 1
      %v773 = vrot.slane %v733, 1
      %v774 = vrot.slane %v734, 1
      %v777 = vsel %vm267, %v707, %v764
      %v780 = vsel %vm267, %v709, %v766
      %v783 = vsel %vm267, %v711, %v768
      %v786 = vsel %vm267, %v713, %v770
      %v791 = vunpack.c.l.b16 %v777
      %v792 = vunpack.c.l.b16 %v771
      %v793 = vunpack.c.l.b16 %v780
      %v794 = vunpack.c.l.b16 %v772
      %v795 = vunpack.c.l.b16 %v783
      %v796 = vunpack.c.l.b16 %v773
      %v797 = vunpack.c.l.b16 %v786
      %v798 = vunpack.c.l.b16 %v774
      %s799 = scalar_lea.vmem %s1, 192
      %v800 = vld [vmem:[%s799] sm:$0xf]
      %v801 = vld [vmem:[%s799 + $0x4] sm:$0xf]
      %v802 = vld [vmem:[%s799 + $0x8] sm:$0xf]
      %v803 = vld [vmem:[%s799 + $0xc] sm:$0xf]
      %v804 = vld [vmem:[%s799 + $0x10] sm:$0xf]
      %v805 = vld [vmem:[%s799 + $0x14] sm:$0xf]
      %v806 = vld [vmem:[%s799 + $0x18] sm:$0xf]
      %v807 = vld [vmem:[%s799 + $0x1c] sm:$0xf]
      %v808 = vld [vmem:[%s799 + $0x20] sm:$0xf]
      %v809 = vld [vmem:[%s799 + $0x24] sm:$0xf]
      %v810 = vld [vmem:[%s799 + $0x28] sm:$0xf]
      %v811 = vld [vmem:[%s799 + $0x2c] sm:$0xf]
      %v812 = vld [vmem:[%s799 + $0x30] sm:$0xf]
      %v813 = vld [vmem:[%s799 + $0x34] sm:$0xf]
      %v814 = vld [vmem:[%s799 + $0x38] sm:$0xf]
      %v815 = vld [vmem:[%s799 + $0x3c] sm:$0xf]
      %v816 = vld [vmem:[%s799 + $0x40] sm:$0xf]
      %v817 = vld [vmem:[%s799 + $0x44] sm:$0xf]
      %v818 = vld [vmem:[%s799 + $0x48] sm:$0xf]
      %v819 = vld [vmem:[%s799 + $0x4c] sm:$0xf]
      %v820 = vld [vmem:[%s799 + $0x50] sm:$0xf]
      %v821 = vld [vmem:[%s799 + $0x54] sm:$0xf]
      %v822 = vld [vmem:[%s799 + $0x58] sm:$0xf]
      %v823 = vld [vmem:[%s799 + $0x5c] sm:$0xf]
      %v824 = vpack.c.b16 %v793, %v791
      %v825 = vpack.c.b16 %v794, %v792
      %v826 = vpack.c.b16 %v797, %v795
      %v827 = vpack.c.b16 %v798, %v796
      %v854 = vunpack.c.l.b16 %v800
      %v855 = vunpack.c.l.b16 %v801
      %v856 = vunpack.c.l.b16 %v802
      %v857 = vunpack.c.l.b16 %v803
      %v858 = vunpack.c.l.b16 %v804
      %v859 = vunpack.c.l.b16 %v805
      %v860 = vunpack.c.l.b16 %v806
      %v861 = vunpack.c.l.b16 %v807
      %v862 = vunpack.c.l.b16 %v808
      %v863 = vunpack.c.l.b16 %v809
      %v864 = vunpack.c.l.b16 %v810
      %v865 = vunpack.c.l.b16 %v811
      %v866 = vunpack.c.l.b16 %v812
      %v867 = vunpack.c.l.b16 %v813
      %v868 = vunpack.c.l.b16 %v814
      %v869 = vunpack.c.l.b16 %v815
      %v870 = vunpack.c.l.b16 %v816
      %v871 = vunpack.c.l.b16 %v817
      %v872 = vunpack.c.l.b16 %v818
      %v873 = vunpack.c.l.b16 %v819
      %v874 = vunpack.c.l.b16 %v820
      %v875 = vunpack.c.l.b16 %v821
      %v876 = vunpack.c.l.b16 %v822
      %v877 = vunpack.c.l.b16 %v823
      %v878 = vpack.c.b16 %v855, %v854
      %v879 = vpack.c.b16 %v857, %v856
      %v880 = vpack.c.b16 %v859, %v858
      %v881 = vpack.c.b16 %v861, %v860
      %v882 = vpack.c.b16 %v863, %v862
      %v883 = vpack.c.b16 %v865, %v864
      %v884 = vpack.c.b16 %v867, %v866
      %v885 = vpack.c.b16 %v869, %v868
      %v886 = vpack.c.b16 %v871, %v870
      %v887 = vpack.c.b16 %v873, %v872
      %v888 = vpack.c.b16 %v875, %v874
      %v889 = vpack.c.b16 %v877, %v876
      %v903 = vsel %vm267, %v825, 0
      %v906 = vsel %vm267, %v827, 0
      %908 = vmatprep.subr.bf16.mxu0 0
      %909 = vmatpush1.bf16.msra.mxu0 %v878
      %910 = vmatprep.subr.bf16.mxu0 0
      %911 = vmatpush1.bf16.msra.mxu0 %v879
      %912 = vmatprep.subr.bf16.mxu0 0
      %913 = vmatpush1.bf16.msra.mxu0 %v880
      %914 = vmatprep.subr.bf16.mxu0 0
      %915 = vmatpush1.bf16.msra.mxu0 %v881
      %916 = vmatprep.subr.bf16.mxu0 0
      %917 = vmatpush1.bf16.msra.mxu0 %v882
      %918 = vmatprep.subr.bf16.mxu0 0
      %919 = vmatpush1.bf16.msra.mxu0 %v883
      %920 = vmatprep.subr.bf16.mxu0 0
      %921 = vmatpush1.bf16.msra.mxu0 %v884
      %922 = vmatprep.subr.bf16.mxu0 0
      %923 = vmatpush1.bf16.msra.mxu0 %v885
      %924 = vmatprep.subr.bf16.mxu0 0
      %925 = vmatpush1.bf16.msra.mxu0 %v886
      %926 = vmatprep.subr.bf16.mxu0 0
      %927 = vmatpush1.bf16.msra.mxu0 %v887
      %928 = vmatprep.subr.bf16.mxu0 0
      %929 = vmatpush1.bf16.msra.mxu0 %v888
      %930 = vmatprep.subr.bf16.mxu0 0
      %931 = vmatpush1.bf16.msra.mxu0 %v889
      %932 = vmatprep.subr.bf16.mxu0 0
      %933 = vmatpush1.bf16.msra.mxu0 0
      %934 = vmatprep.subr.bf16.mxu0 0
      %935 = vmatpush1.bf16.msra.mxu0 0
      %936 = vmatprep.subr.bf16.mxu0 0
      %937 = vmatpush1.bf16.msra.mxu0 0
      %938 = vmatprep.subr.bf16.mxu0 0
      %939 = vmatpush1.bf16.msra.mxu0 0
      %940 = vmatprep.mubr.bf16.mxu0 %v903
      %941 = vmatmul.mubr.bf16.gmra.mrb[0].mxu0 %v824
      %v942 = vpop.f32.mrb[0].mxu0
      %v943 = vadd.f32 0.0, %v942
      %v944 = vpop.f32.mrb[0].mxu0
      %v945 = vpop.f32.mrb[0].mxu0
      %v946 = vadd.f32 0.0, %v945
      %v947 = vpop.f32.mrb[0].mxu0
      %948 = vmatprep.mubr.bf16.mxu0 %v906
      %949 = vmatmul.mubr.bf16.gmra.mrb[0].mxu0 %v826
      %v950 = vpop.f32.mrb[0].mxu0
      %v951 = vadd.f32 0.0, %v950
      %v952 = vpop.f32.mrb[0].mxu0
      %v953 = vpop.f32.mrb[0].mxu0
      %v954 = vadd.f32 0.0, %v953
      %v955 = vpop.f32.mrb[0].mxu0
      %956 = vdwg.mxu0
      %v957 = vadd.f32 %v689, %v943
      %v958 = vadd.f32 %v692, %v946
      %v959 = vadd.f32 %v697, %v951
      %v960 = vadd.f32 %v700, %v954
      %v961 = vld [vmem:[%s2] sm:$0x1]
      %v963 = vlaneseq
      %v964 = vshrl.u32 %v963, 7
      %v965 = vsub.s32 0, %v964
      %v966 = vrot.slane %v961, %v965
      %v968 = vadd.f32 %v957, %v966
      %v969 = vadd.f32 %v958, %v966
      %v970 = vadd.f32 %v959, %v966
      %v971 = vadd.f32 %v960, %v966
      %v972 = vpack.c.bf16 %v968, %v968
      %v973 = vpack.c.bf16 %v969, %v969
      %v974 = vpack.c.bf16 %v970, %v970
      %v975 = vpack.c.bf16 %v971, %v971
      %976 = vst [vmem:[%s192] sm:$0xf] %v972
      %977 = vst [vmem:[%s192 + $0x4] sm:$0xf] %v973
      %978 = vst [vmem:[%s192 + $0x8] sm:$0xf] %v974
      %979 = vst [vmem:[%s192 + $0xc] sm:$0xf] %v975
      %s980 = smul.u32 4, %s19
      %p981 = scmp.lt.s32.totalorder %s18, 1
      %s982 = scalar_select %p981, %s18, 1
      %p983 = scmp.lt.s32.totalorder %s980, 7
      %s984 = scalar_select %p983, %s980, 7
      %s985 = smul.addr %s982, 8
      %s986 = sadd.s32 %s984, %s985
      %s987 = smul.addr %s986, 4
      %s988 = scalar_lea.vmem %s3, %s987
      // Predicated region
      $region33: #{vgg16_feature_extractor.6} parent=31 // pred_check
        %p989 = pneg %p114
      $region34: #{vgg16_feature_extractor.6} parent=31 // pred_check_branch
        %991 = sbr.rel (%p989) target = $region36
      $region35: #{vgg16_feature_extractor.6} parent=31 // pred_region
        %s992 = smul.u32 4, %s19
      $region36: #{vgg16_feature_extractor.6} parent=31 // pred_fallthru
        _
    $region32: #{vgg16_feature_extractor.6} parent=5 // pred_fallthru
      _
    %p993 = scmp.le.s32.totalorder 2, %s9
    // Predicated region
    $region37: #{vgg16_feature_extractor.6} parent=5 // pred_check
      %p994 = pneg %p993
    $region38: #{vgg16_feature_extractor.6} parent=5 // pred_check_branch
      %996 = sbr.rel (%p994) target = $region40
    $region39: #{vgg16_feature_extractor.6} parent=5 // pred_region
      %s997 = ssub.s32 %s9, 2
      // Predicated region
      $region41: #{vgg16_feature_extractor.6} parent=39 // pred_check
        %p998 = pneg %p120
      $region42: #{vgg16_feature_extractor.6} parent=39 // pred_check_branch
        %1000 = sbr.rel (%p998) target = $region44
      $region43: #{vgg16_feature_extractor.6} parent=39 // pred_region
        %s1001 = smul.u32 4, %s21
        %p1002 = scmp.lt.s32.totalorder %s20, 1
        %s1003 = scalar_select %p1002, %s20, 1
        %p1004 = scmp.lt.s32.totalorder %s1001, 7
        %s1005 = scalar_select %p1004, %s1001, 7
        %s1006 = smul.addr %s1003, 8
        %s1007 = sadd.s32 %s1005, %s1006
        %s1008 = smul.addr %s1007, 4
        %s1009 = scalar_lea.vmem %s3, %s1008
      $region44: #{vgg16_feature_extractor.6} parent=39 // pred_fallthru
        _
    $region40: #{vgg16_feature_extractor.6} parent=5 // pred_fallthru
      _
  $region6: #{vgg16_feature_extractor.6} parent=0 // loop_footer
    %s13 = sadd.s32 1, %s9
  $region7: #{vgg16_feature_extractor.6} parent=0 // loop_footer_branch
    %8 = sbr.rel target = $region3
  $region8: #{vgg16_feature_extractor.6} parent=0 // loop_exit
    _

// kernel: vgg16_feature_extractor.5
$region0: #{vgg16_feature_extractor.5}
  #allocation0 [shape = 'u32[]', space=smem, size = 0x4, offset = 0x4, fixed_abs, tag = 'smem constant byte address 0x4 - core index']
  #allocation1 [shape = 'u32[144,128]{1,0:T(1,128)}', space=vmem, size = 0x12000, scoped, tag = 'internal scratch']
  %s0 = inlined_call_operand.vmem [shape: bf16[2,18,18,64], index: 0, kind: input, shape index: {}]
  %s1 = inlined_call_operand.vmem [shape: bf16[3,192,64], index: 1, kind: input, shape index: {}]
  %s2 = inlined_call_operand.vmem [shape: f32[1,64], index: 2, kind: input, shape index: {}]
  %s3 = inlined_call_operand.vmem [shape: bf16[2,16,16,64], index: 3, kind: output, shape index: {0}]
  %s4 = inlined_call_operand.vmem [shape: bf16[2,8,8,64], index: 4, kind: output, shape index: {1}]
  %5 = xla_tuple %s3, %s4
  %s6 = sld [smem:[#allocation0]]
  $region53: #{vgg16_feature_extractor.5} parent=0
    _
  %s8 = ssub.s32 1, %s6
  %s9 = scalar_select 0, %s8, %s6
  loop: start=0, step=1, limit=6
  $region2: #{vgg16_feature_extractor.5} parent=0 // loop_pre_header
    _
  $region3: #{vgg16_feature_extractor.5} parent=0 // loop_header
    %s11 = sphi 0, %s15
    %p12 = scmp.ge.s32.totalorder %s11, 6
    %s18 = sphi 0, %s30
    %s19 = sphi 0, %s26
    %s20 = sphi 0, %s18
    %s21 = sphi 0, %s19
    %s22 = sphi 0, %s20
    %s23 = sphi 0, %s21
    %s33 = sphi 0, %s35
    %s36 = sphi 0, %s33
    %s37 = sphi 0, %s36
    %s53 = sphi 0, %s37
    %s57 = sphi 0, %s57
    %s59 = sphi 0, %s57
    %s60 = sphi 0, %s59
    %s74 = sphi 0, %s60
    %s78 = sphi 0, %s78
    %s80 = sphi 0, %s78
    %s81 = sphi 0, %s80
    %s95 = sphi 0, %s81
    %s103 = sphi 0, %s105
    %s106 = sphi 0, %s103
    %s107 = sphi 0, %s106
    %s123 = sphi 0, %s107
    %s131 = sphi 0, %s133
    %s134 = sphi 0, %s131
    %s135 = sphi 0, %s134
    %s151 = sphi 0, %s135
  $region4: #{vgg16_feature_extractor.5} parent=0 // loop_header_branch
    %14 = sbr.rel (%p12) target = $region8
  $region5: #{vgg16_feature_extractor.5} parent=0 // loop_body
    %s16 = ssub.s32 %s11, 1
    %s17 = ssub.s32 %s11, 2
    %s24 = sadd.s32 1, %s19
    %p25 = scmp.ge.s32.totalorder %s24, 2
    %s26 = scalar_select %p25, 0, %s24
    %s27 = sadd.s32 1, %s18
    %s28 = scalar_select %p25, %s27, %s18
    %p29 = scmp.ge.s32.totalorder %s28, 2
    %s30 = scalar_select %p29, 0, %s28
    %s31 = ssub.s32 %s18, %s30
    %p32 = scmp.eq.s32.totalorder %s31, 0
    %s34 = sadd.s32 %s33, 1
    %s35 = scalar_select %p32, %s33, %s34
    %p38 = pneg %p32
    %p39 = scmp.eq.s32.totalorder %s11, 3
    %p40 = por %p38, %p39
    %p41 = scmp.ne.s32.totalorder %s33, %s36
    %p42 = scmp.eq.s32.totalorder %s11, 0
    %p43 = por %p41, %p42
    %p44 = scmp.ne.s32.totalorder %s33, %s36
    %p45 = scmp.eq.s32.totalorder %s16, 3
    %p46 = por %p44, %p45
    %p47 = scmp.ne.s32.totalorder %s36, %s37
    %p48 = scmp.eq.s32.totalorder %s16, 0
    %p49 = por %p47, %p48
    %p50 = scmp.ne.s32.totalorder %s36, %s37
    %p51 = scmp.eq.s32.totalorder %s17, 3
    %p52 = por %p50, %p51
    %p54 = scmp.ne.s32.totalorder %s37, %s53
    %p55 = scmp.eq.s32.totalorder %s17, 0
    %p56 = por %p54, %p55
    %s58 = sadd.s32 %s57, 1
    %p61 = scmp.eq.s32.totalorder %s11, 3
    %p62 = scmp.ne.s32.totalorder %s57, %s59
    %p63 = scmp.eq.s32.totalorder %s11, 0
    %p64 = por %p62, %p63
    %p65 = scmp.ne.s32.totalorder %s57, %s59
    %p66 = scmp.eq.s32.totalorder %s16, 3
    %p67 = por %p65, %p66
    %p68 = scmp.ne.s32.totalorder %s59, %s60
    %p69 = scmp.eq.s32.totalorder %s16, 0
    %p70 = por %p68, %p69
    %p71 = scmp.ne.s32.totalorder %s59, %s60
    %p72 = scmp.eq.s32.totalorder %s17, 3
    %p73 = por %p71, %p72
    %p75 = scmp.ne.s32.totalorder %s60, %s74
    %p76 = scmp.eq.s32.totalorder %s17, 0
    %p77 = por %p75, %p76
    %s79 = sadd.s32 %s78, 1
    %p82 = scmp.eq.s32.totalorder %s11, 3
    %p83 = scmp.ne.s32.totalorder %s78, %s80
    %p84 = scmp.eq.s32.totalorder %s11, 0
    %p85 = por %p83, %p84
    %p86 = scmp.ne.s32.totalorder %s78, %s80
    %p87 = scmp.eq.s32.totalorder %s16, 3
    %p88 = por %p86, %p87
    %p89 = scmp.ne.s32.totalorder %s80, %s81
    %p90 = scmp.eq.s32.totalorder %s16, 0
    %p91 = por %p89, %p90
    %p92 = scmp.ne.s32.totalorder %s80, %s81
    %p93 = scmp.eq.s32.totalorder %s17, 3
    %p94 = por %p92, %p93
    %p96 = scmp.ne.s32.totalorder %s81, %s95
    %p97 = scmp.eq.s32.totalorder %s17, 0
    %p98 = por %p96, %p97
    %s99 = ssub.s32 %s18, %s30
    %s100 = ssub.s32 %s19, %s26
    %s101 = sor.u32 %s99, %s100
    %p102 = scmp.eq.s32.totalorder %s101, 0
    %s104 = sadd.s32 %s103, 1
    %s105 = scalar_select %p102, %s103, %s104
    %p108 = pneg %p102
    %p109 = scmp.eq.s32.totalorder %s11, 3
    %p110 = por %p108, %p109
    %p111 = scmp.ne.s32.totalorder %s103, %s106
    %p112 = scmp.eq.s32.totalorder %s11, 0
    %p113 = por %p111, %p112
    %p114 = scmp.ne.s32.totalorder %s103, %s106
    %p115 = scmp.eq.s32.totalorder %s16, 3
    %p116 = por %p114, %p115
    %p117 = scmp.ne.s32.totalorder %s106, %s107
    %p118 = scmp.eq.s32.totalorder %s16, 0
    %p119 = por %p117, %p118
    %p120 = scmp.ne.s32.totalorder %s106, %s107
    %p121 = scmp.eq.s32.totalorder %s17, 3
    %p122 = por %p120, %p121
    %p124 = scmp.ne.s32.totalorder %s107, %s123
    %p125 = scmp.eq.s32.totalorder %s17, 0
    %p126 = por %p124, %p125
    %s127 = ssub.s32 %s18, %s30
    %s128 = ssub.s32 %s19, %s26
    %s129 = sor.u32 %s127, %s128
    %p130 = scmp.eq.s32.totalorder %s129, 0
    %s132 = sadd.s32 %s131, 1
    %s133 = scalar_select %p130, %s131, %s132
    %p136 = pneg %p130
    %p137 = scmp.eq.s32.totalorder %s11, 3
    %p138 = por %p136, %p137
    %p139 = scmp.ne.s32.totalorder %s131, %s134
    %p140 = scmp.eq.s32.totalorder %s11, 0
    %p141 = por %p139, %p140
    %p142 = scmp.ne.s32.totalorder %s131, %s134
    %p143 = scmp.eq.s32.totalorder %s16, 3
    %p144 = por %p142, %p143
    %p145 = scmp.ne.s32.totalorder %s134, %s135
    %p146 = scmp.eq.s32.totalorder %s16, 0
    %p147 = por %p145, %p146
    %p148 = scmp.ne.s32.totalorder %s134, %s135
    %p149 = scmp.eq.s32.totalorder %s17, 3
    %p150 = por %p148, %p149
    %p152 = scmp.ne.s32.totalorder %s135, %s151
    %p153 = scmp.eq.s32.totalorder %s17, 0
    %p154 = por %p152, %p153
    %p155 = scmp.le.s32.totalorder 1, %s11
    %p156 = scmp.lt.s32.totalorder %s11, 5
    %p157 = pnand %p155, %p156
    %p158 = pneg %p157
    // Predicated region
    $region9: #{vgg16_feature_extractor.5} parent=5 // pred_check
      _
    $region10: #{vgg16_feature_extractor.5} parent=5 // pred_check_branch
      %160 = sbr.rel (%p157) target = $region12
    $region11: #{vgg16_feature_extractor.5} parent=5 // pred_region
      %s161 = ssub.s32 %s11, 1
      // Predicated region
      $region13: #{vgg16_feature_extractor.5} parent=11 // pred_check
        %p162 = pneg %p70
      $region14: #{vgg16_feature_extractor.5} parent=11 // pred_check_branch
        %164 = sbr.rel (%p162) target = $region16
      $region15: #{vgg16_feature_extractor.5} parent=11 // pred_region
        _
      $region16: #{vgg16_feature_extractor.5} parent=11 // pred_fallthru
        _
      // Predicated region
      $region17: #{vgg16_feature_extractor.5} parent=11 // pred_check
        %p165 = pneg %p91
      $region18: #{vgg16_feature_extractor.5} parent=11 // pred_check_branch
        %167 = sbr.rel (%p165) target = $region20
      $region19: #{vgg16_feature_extractor.5} parent=11 // pred_region
        _
      $region20: #{vgg16_feature_extractor.5} parent=11 // pred_fallthru
        _
    $region12: #{vgg16_feature_extractor.5} parent=5 // pred_fallthru
      _
    %p168 = scmp.lt.s32.totalorder %s11, 4
    // Predicated region
    $region21: #{vgg16_feature_extractor.5} parent=5 // pred_check
      %p169 = pneg %p168
    $region22: #{vgg16_feature_extractor.5} parent=5 // pred_check_branch
      %171 = sbr.rel (%p169) target = $region24
    $region23: #{vgg16_feature_extractor.5} parent=5 // pred_region
      // Predicated region
      $region25: #{vgg16_feature_extractor.5} parent=23 // pred_check
        %p172 = pneg %p43
      $region26: #{vgg16_feature_extractor.5} parent=23 // pred_check_branch
        %174 = sbr.rel (%p172) target = $region28
      $region27: #{vgg16_feature_extractor.5} parent=23 // pred_region
        %p175 = scmp.lt.s32.totalorder %s18, 1
        %s176 = scalar_select %p175, %s18, 1
        %s177 = smul.addr %s176, 54
        %s178 = smul.addr %s177, 4
        %s179 = scalar_lea.vmem %s0, %s178
      $region28: #{vgg16_feature_extractor.5} parent=23 // pred_fallthru
        _
    $region24: #{vgg16_feature_extractor.5} parent=5 // pred_fallthru
      _
    %p180 = scmp.le.s32.totalorder 1, %s11
    %p181 = scmp.lt.s32.totalorder %s11, 5
    %p182 = pnand %p180, %p181
    %p183 = pneg %p182
    // Predicated region
    $region29: #{vgg16_feature_extractor.5} parent=5 // pred_check
      _
    $region30: #{vgg16_feature_extractor.5} parent=5 // pred_check_branch
      %185 = sbr.rel (%p182) target = $region32
    $region31: #{vgg16_feature_extractor.5} parent=5 // pred_region
      %s186 = ssub.s32 %s11, 1
      %p187 = scmp.lt.s32.totalorder %s20, 1
      %s188 = scalar_select %p187, %s20, 1
      %s189 = smul.addr %s188, 54
      %s190 = smul.addr %s189, 4
      %s191 = scalar_lea.vmem %s0, %s190
      %p192 = pneg %p49
      %p193 = pneg %p46
      %p194 = pneg %p70
      %p195 = pneg %p67
      %p196 = pneg %p91
      %p197 = pneg %p88
      %p198 = pneg %p119
      %p199 = pneg %p116
      %s200 = smul.u32 8, %s21
      %p201 = scmp.lt.s32.totalorder %s20, 1
      %s202 = scalar_select %p201, %s20, 1
      %p203 = scmp.lt.s32.totalorder %s200, 15
      %s204 = scalar_select %p203, %s200, 15
      %s205 = smul.addr %s204, 2
      %s206 = smul.addr %s202, 32
      %s207 = sadd.s32 %s205, %s206
      %s208 = smul.addr %s207, 4
      %s209 = scalar_lea.vmem %s3, %s208
      %p210 = pneg %p147
      %p211 = pneg %p144
      %s212 = smul.u32 4, %s21
      %p213 = scmp.lt.s32.totalorder %s20, 1
      %s214 = scalar_select %p213, %s20, 1
      %p215 = scmp.lt.s32.totalorder %s212, 7
      %s216 = scalar_select %p215, %s212, 7
      %s217 = smul.addr %s214, 8
      %s218 = sadd.s32 %s216, %s217
      %s219 = smul.addr %s218, 4
      %s220 = scalar_lea.vmem %s4, %s219
      %p221 = scmp.lt.s32.totalorder %s20, 1
      %s222 = scalar_select %p221, %s20, 1
      %s223 = smul.addr %s222, 54
      %s224 = smul.addr %s223, 4
      %s225 = scalar_lea.vmem %s0, %s224
      %s226 = smul.u32 8, %s21
      %p227 = scmp.lt.s32.totalorder %s20, 1
      %s228 = scalar_select %p227, %s20, 1
      %p229 = scmp.lt.s32.totalorder %s226, 15
      %s230 = scalar_select %p229, %s226, 15
      %s231 = smul.addr %s230, 2
      %s232 = smul.addr %s228, 32
      %s233 = sadd.s32 %s231, %s232
      %s234 = smul.addr %s233, 4
      %s235 = scalar_lea.vmem %s3, %s234
      %s236 = smul.u32 8, %s21
      %s237 = smul.u32 4, %s21
      %p238 = scmp.lt.s32.totalorder %s20, 1
      %s239 = scalar_select %p238, %s20, 1
      %p240 = scmp.lt.s32.totalorder %s237, 7
      %s241 = scalar_select %p240, %s237, 7
      %s242 = smul.addr %s239, 8
      %s243 = sadd.s32 %s241, %s242
      %s244 = smul.addr %s243, 4
      %s245 = scalar_lea.vmem %s4, %s244
      %s246 = smul.u32 4, %s21
      %s248 = smul.u32 %s21, 8
      %s249 = smul.u32 %s248, 3
      %s250 = smul.addr %s249, 4
      %s251 = scalar_lea.vmem %s225, %s250
      %v252 = vld [vmem:[%s251] sm:$0xf]
      %v253 = vld [vmem:[%s251 + $0x4] sm:$0xf]
      %v254 = vld [vmem:[%s251 + $0x8] sm:$0x1]
      %v255 = vld [vmem:[%s251 + $0xc] sm:$0xf]
      %v256 = vld [vmem:[%s251 + $0x10] sm:$0xf]
      %v257 = vld [vmem:[%s251 + $0x14] sm:$0x1]
      %v258 = vld [vmem:[%s251 + $0x18] sm:$0xf]
      %v259 = vld [vmem:[%s251 + $0x1c] sm:$0xf]
      %v260 = vld [vmem:[%s251 + $0x20] sm:$0x1]
      %v261 = vld [vmem:[%s251 + $0x24] sm:$0xf]
      %v262 = vld [vmem:[%s251 + $0x28] sm:$0xf]
      %v263 = vld [vmem:[%s251 + $0x2c] sm:$0x1]
      %v264 = vld [vmem:[%s251 + $0x30] sm:$0xf]
      %v265 = vld [vmem:[%s251 + $0x34] sm:$0xf]
      %v266 = vld [vmem:[%s251 + $0x38] sm:$0x1]
      %v267 = vld [vmem:[%s251 + $0x3c] sm:$0xf]
      %v268 = vld [vmem:[%s251 + $0x40] sm:$0xf]
      %v269 = vld [vmem:[%s251 + $0x44] sm:$0x1]
      %v270 = vld [vmem:[%s251 + $0x48] sm:$0xf]
      %v271 = vld [vmem:[%s251 + $0x4c] sm:$0xf]
      %v272 = vld [vmem:[%s251 + $0x50] sm:$0x1]
      %v273 = vld [vmem:[%s251 + $0x54] sm:$0xf]
      %v274 = vld [vmem:[%s251 + $0x58] sm:$0xf]
      %v275 = vld [vmem:[%s251 + $0x5c] sm:$0x1]
      %v292 = vunpack.c.l.b16 %v252
      %v293 = vunpack.c.l.b16 %v253
      %v294 = vunpack.c.l.b16 %v255
      %v295 = vunpack.c.l.b16 %v256
      %v296 = vunpack.c.l.b16 %v258
      %v297 = vunpack.c.l.b16 %v259
      %v298 = vunpack.c.l.b16 %v261
      %v299 = vunpack.c.l.b16 %v262
      %v300 = vunpack.c.l.b16 %v264
      %v301 = vunpack.c.l.b16 %v265
      %v302 = vunpack.c.l.b16 %v267
      %v303 = vunpack.c.l.b16 %v268
      %v304 = vunpack.c.l.b16 %v270
      %v305 = vunpack.c.l.b16 %v271
      %v306 = vunpack.c.l.b16 %v273
      %v307 = vunpack.c.l.b16 %v274
      %v308 = vpack.c.b16 %v293, %v292
      %v309 = vpack.c.b16 %v295, %v294
      %v310 = vpack.c.b16 %v297, %v296
      %v311 = vpack.c.b16 %v299, %v298
      %v312 = vpack.c.b16 %v301, %v300
      %v313 = vpack.c.b16 %v303, %v302
      %v314 = vpack.c.b16 %v305, %v304
      %v315 = vpack.c.b16 %v307, %v306
      %v324 = vunpack.c.l.b16 %v254
      %v325 = vunpack.c.l.b16 %v257
      %v326 = vunpack.c.l.b16 %v260
      %v327 = vunpack.c.l.b16 %v263
      %v328 = vunpack.c.l.b16 %v266
      %v329 = vunpack.c.l.b16 %v269
      %v330 = vunpack.c.l.b16 %v272
      %v331 = vunpack.c.l.b16 %v275
      %v332 = vpack.c.b16 %v324, %v324
      %v333 = vpack.c.b16 %v325, %v325
      %v334 = vpack.c.b16 %v326, %v326
      %v335 = vpack.c.b16 %v327, %v327
      %v336 = vpack.c.b16 %v328, %v328
      %v337 = vpack.c.b16 %v329, %v329
      %v338 = vpack.c.b16 %v330, %v330
      %v339 = vpack.c.b16 %v331, %v331
      %vm340 = vsmask.f32 7424
      %v342 = vshrl.u32 %v308, 16
      %v344 = vshll.u32 %v308, 16
      %v346 = vrot.slane %v344, 1
      %v347 = vor.u32 %v342, %v346
      %v349 = vshll.u32 %v332, 16
      %v351 = vrot.slane %v349, 1
      %v352 = vsel %vm340, %v347, %v351
      %v354 = vshrl.u32 %v309, 16
      %v356 = vshll.u32 %v309, 16
      %v358 = vrot.slane %v356, 1
      %v359 = vor.u32 %v354, %v358
      %v361 = vshll.u32 %v333, 16
      %v363 = vrot.slane %v361, 1
      %v364 = vsel %vm340, %v359, %v363
      %v366 = vshrl.u32 %v310, 16
      %v368 = vshll.u32 %v310, 16
      %v370 = vrot.slane %v368, 1
      %v371 = vor.u32 %v366, %v370
      %v373 = vshll.u32 %v334, 16
      %v375 = vrot.slane %v373, 1
      %v376 = vsel %vm340, %v371, %v375
      %v378 = vshrl.u32 %v311, 16
      %v380 = vshll.u32 %v311, 16
      %v382 = vrot.slane %v380, 1
      %v383 = vor.u32 %v378, %v382
      %v385 = vshll.u32 %v335, 16
      %v387 = vrot.slane %v385, 1
      %v388 = vsel %vm340, %v383, %v387
      %v390 = vshrl.u32 %v312, 16
      %v392 = vshll.u32 %v312, 16
      %v394 = vrot.slane %v392, 1
      %v395 = vor.u32 %v390, %v394
      %v397 = vshll.u32 %v336, 16
      %v399 = vrot.slane %v397, 1
      %v400 = vsel %vm340, %v395, %v399
      %v402 = vshrl.u32 %v313, 16
      %v404 = vshll.u32 %v313, 16
      %v406 = vrot.slane %v404, 1
      %v407 = vor.u32 %v402, %v406
      %v409 = vshll.u32 %v337, 16
      %v411 = vrot.slane %v409, 1
      %v412 = vsel %vm340, %v407, %v411
      %v414 = vshrl.u32 %v314, 16
      %v416 = vshll.u32 %v314, 16
      %v418 = vrot.slane %v416, 1
      %v419 = vor.u32 %v414, %v418
      %v421 = vshll.u32 %v338, 16
      %v423 = vrot.slane %v421, 1
      %v424 = vsel %vm340, %v419, %v423
      %v426 = vshrl.u32 %v315, 16
      %v428 = vshll.u32 %v315, 16
      %v430 = vrot.slane %v428, 1
      %v431 = vor.u32 %v426, %v430
      %v433 = vshll.u32 %v339, 16
      %v435 = vrot.slane %v433, 1
      %v436 = vsel %vm340, %v431, %v435
      %437 = vrot.lane.b32.xlu0 %v352, 64
      %v438 = vpop.permute.xlu0 %437
      %439 = vrot.lane.b32.xlu0 %v364, 64
      %v440 = vpop.permute.xlu0 %439
      %441 = vrot.lane.b32.xlu0 %v376, 64
      %v442 = vpop.permute.xlu0 %441
      %443 = vrot.lane.b32.xlu0 %v388, 64
      %v444 = vpop.permute.xlu0 %443
      %445 = vrot.lane.b32.xlu0 %v400, 64
      %v446 = vpop.permute.xlu0 %445
      %447 = vrot.lane.b32.xlu0 %v412, 64
      %v448 = vpop.permute.xlu0 %447
      %449 = vrot.lane.b32.xlu0 %v424, 64
      %v450 = vpop.permute.xlu0 %449
      %451 = vrot.lane.b32.xlu0 %v436, 64
      %v452 = vpop.permute.xlu0 %451
      %vm453 = vcmask 1046528
      %v454 = vrot.slane %v308, 1
      %v455 = vrot.slane %v332, 1
      %v456 = vsel %vm453, %v454, %v455
      %v457 = vrot.slane %v309, 1
      %v458 = vrot.slane %v333, 1
      %v459 = vsel %vm453, %v457, %v458
      %v460 = vrot.slane %v310, 1
      %v461 = vrot.slane %v334, 1
      %v462 = vsel %vm453, %v460, %v461
      %v463 = vrot.slane %v311, 1
      %v464 = vrot.slane %v335, 1
      %v465 = vsel %vm453, %v463, %v464
      %v466 = vrot.slane %v312, 1
      %v467 = vrot.slane %v336, 1
      %v468 = vsel %vm453, %v466, %v467
      %v469 = vrot.slane %v313, 1
      %v470 = vrot.slane %v337, 1
      %v471 = vsel %vm453, %v469, %v470
      %v472 = vrot.slane %v314, 1
      %v473 = vrot.slane %v338, 1
      %v474 = vsel %vm453, %v472, %v473
      %v475 = vrot.slane %v315, 1
      %v476 = vrot.slane %v339, 1
      %v477 = vsel %vm453, %v475, %v476
      %vm478 = vcmask 523264
      %v480 = vsel %vm478, %v308, %v438
      %v483 = vsel %vm478, %v309, %v440
      %v486 = vsel %vm478, %v310, %v442
      %v489 = vsel %vm478, %v311, %v444
      %v492 = vsel %vm478, %v312, %v446
      %v495 = vsel %vm478, %v313, %v448
      %v498 = vsel %vm478, %v314, %v450
      %v501 = vsel %vm478, %v315, %v452
      %v503 = vld [vmem:[%s1] sm:$0xf]
      %v504 = vld [vmem:[%s1 + $0x4] sm:$0xf]
      %v505 = vld [vmem:[%s1 + $0x8] sm:$0xf]
      %v506 = vld [vmem:[%s1 + $0xc] sm:$0xf]
      %v507 = vld [vmem:[%s1 + $0x10] sm:$0xf]
      %v508 = vld [vmem:[%s1 + $0x14] sm:$0xf]
      %v509 = vld [vmem:[%s1 + $0x18] sm:$0xf]
      %v510 = vld [vmem:[%s1 + $0x1c] sm:$0xf]
      %v511 = vld [vmem:[%s1 + $0x20] sm:$0xf]
      %v512 = vld [vmem:[%s1 + $0x24] sm:$0xf]
      %v513 = vld [vmem:[%s1 + $0x28] sm:$0xf]
      %v514 = vld [vmem:[%s1 + $0x2c] sm:$0xf]
      %v515 = vld [vmem:[%s1 + $0x30] sm:$0xf]
      %v516 = vld [vmem:[%s1 + $0x34] sm:$0xf]
      %v517 = vld [vmem:[%s1 + $0x38] sm:$0xf]
      %v518 = vld [vmem:[%s1 + $0x3c] sm:$0xf]
      %v519 = vld [vmem:[%s1 + $0x40] sm:$0xf]
      %v520 = vld [vmem:[%s1 + $0x44] sm:$0xf]
      %v521 = vld [vmem:[%s1 + $0x48] sm:$0xf]
      %v522 = vld [vmem:[%s1 + $0x4c] sm:$0xf]
      %v523 = vld [vmem:[%s1 + $0x50] sm:$0xf]
      %v524 = vld [vmem:[%s1 + $0x54] sm:$0xf]
      %v525 = vld [vmem:[%s1 + $0x58] sm:$0xf]
      %v526 = vld [vmem:[%s1 + $0x5c] sm:$0xf]
      %s527 = sadd.s32 %s248, 1
      %s528 = smul.u32 %s527, 3
      %s529 = smul.addr %s528, 4
      %s530 = scalar_lea.vmem %s225, %s529
      %v531 = vld [vmem:[%s530] sm:$0xf]
      %v532 = vld [vmem:[%s530 + $0x4] sm:$0xf]
      %v533 = vld [vmem:[%s530 + $0x8] sm:$0x1]
      %v534 = vld [vmem:[%s530 + $0xc] sm:$0xf]
      %v535 = vld [vmem:[%s530 + $0x10] sm:$0xf]
      %v536 = vld [vmem:[%s530 + $0x14] sm:$0x1]
      %v537 = vld [vmem:[%s530 + $0x18] sm:$0xf]
      %v538 = vld [vmem:[%s530 + $0x1c] sm:$0xf]
      %v539 = vld [vmem:[%s530 + $0x20] sm:$0x1]
      %v540 = vld [vmem:[%s530 + $0x24] sm:$0xf]
      %v541 = vld [vmem:[%s530 + $0x28] sm:$0xf]
      %v542 = vld [vmem:[%s530 + $0x2c] sm:$0x1]
      %v543 = vld [vmem:[%s530 + $0x30] sm:$0xf]
      %v544 = vld [vmem:[%s530 + $0x34] sm:$0xf]
      %v545 = vld [vmem:[%s530 + $0x38] sm:$0x1]
      %v546 = vld [vmem:[%s530 + $0x3c] sm:$0xf]
      %v547 = vld [vmem:[%s530 + $0x40] sm:$0xf]
      %v548 = vld [vmem:[%s530 + $0x44] sm:$0x1]
      %v549 = vld [vmem:[%s530 + $0x48] sm:$0xf]
      %v550 = vld [vmem:[%s530 + $0x4c] sm:$0xf]
      %v551 = vld [vmem:[%s530 + $0x50] sm:$0x1]
      %v552 = vld [vmem:[%s530 + $0x54] sm:$0xf]
      %v553 = vld [vmem:[%s530 + $0x58] sm:$0xf]
      %v554 = vld [vmem:[%s530 + $0x5c] sm:$0x1]
      %v571 = vunpack.c.l.b16 %v531
      %v572 = vunpack.c.l.b16 %v532
      %v573 = vunpack.c.l.b16 %v534
      %v574 = vunpack.c.l.b16 %v535
      %v575 = vunpack.c.l.b16 %v537
      %v576 = vunpack.c.l.b16 %v538
      %v577 = vunpack.c.l.b16 %v540
      %v578 = vunpack.c.l.b16 %v541
      %v579 = vunpack.c.l.b16 %v543
      %v580 = vunpack.c.l.b16 %v544
      %v581 = vunpack.c.l.b16 %v546
      %v582 = vunpack.c.l.b16 %v547
      %v583 = vunpack.c.l.b16 %v549
      %v584 = vunpack.c.l.b16 %v550
      %v585 = vunpack.c.l.b16 %v552
      %v586 = vunpack.c.l.b16 %v553
      %v587 = vpack.c.b16 %v572, %v571
      %v588 = vpack.c.b16 %v574, %v573
      %v589 = vpack.c.b16 %v576, %v575
      %v590 = vpack.c.b16 %v578, %v577
      %v591 = vpack.c.b16 %v580, %v579
      %v592 = vpack.c.b16 %v582, %v581
      %v593 = vpack.c.b16 %v584, %v583
      %v594 = vpack.c.b16 %v586, %v585
      %v603 = vunpack.c.l.b16 %v533
      %v604 = vunpack.c.l.b16 %v536
      %v605 = vunpack.c.l.b16 %v539
      %v606 = vunpack.c.l.b16 %v542
      %v607 = vunpack.c.l.b16 %v545
      %v608 = vunpack.c.l.b16 %v548
      %v609 = vunpack.c.l.b16 %v551
      %v610 = vunpack.c.l.b16 %v554
      %v611 = vpack.c.b16 %v603, %v603
      %v612 = vpack.c.b16 %v604, %v604
      %v613 = vpack.c.b16 %v605, %v605
      %v614 = vpack.c.b16 %v606, %v606
      %v615 = vpack.c.b16 %v607, %v607
      %v616 = vpack.c.b16 %v608, %v608
      %v617 = vpack.c.b16 %v609, %v609
      %v618 = vpack.c.b16 %v610, %v610
      %v620 = vshrl.u32 %v587, 16
      %v622 = vshll.u32 %v587, 16
      %v624 = vrot.slane %v622, 1
      %v625 = vor.u32 %v620, %v624
      %v627 = vshll.u32 %v611, 16
      %v629 = vrot.slane %v627, 1
      %v630 = vsel %vm340, %v625, %v629
      %v632 = vshrl.u32 %v588, 16
      %v634 = vshll.u32 %v588, 16
      %v636 = vrot.slane %v634, 1
      %v637 = vor.u32 %v632, %v636
      %v639 = vshll.u32 %v612, 16
      %v641 = vrot.slane %v639, 1
      %v642 = vsel %vm340, %v637, %v641
      %v644 = vshrl.u32 %v589, 16
      %v646 = vshll.u32 %v589, 16
      %v648 = vrot.slane %v646, 1
      %v649 = vor.u32 %v644, %v648
      %v651 = vshll.u32 %v613, 16
      %v653 = vrot.slane %v651, 1
      %v654 = vsel %vm340, %v649, %v653
      %v656 = vshrl.u32 %v590, 16
      %v658 = vshll.u32 %v590, 16
      %v660 = vrot.slane %v658, 1
      %v661 = vor.u32 %v656, %v660
      %v663 = vshll.u32 %v614, 16
      %v665 = vrot.slane %v663, 1
      %v666 = vsel %vm340, %v661, %v665
      %v668 = vshrl.u32 %v591, 16
      %v670 = vshll.u32 %v591, 16
      %v672 = vrot.slane %v670, 1
      %v673 = vor.u32 %v668, %v672
      %v675 = vshll.u32 %v615, 16
      %v677 = vrot.slane %v675, 1
      %v678 = vsel %vm340, %v673, %v677
      %v680 = vshrl.u32 %v592, 16
      %v682 = vshll.u32 %v592, 16
      %v684 = vrot.slane %v682, 1
      %v685 = vor.u32 %v680, %v684
      %v687 = vshll.u32 %v616, 16
      %v689 = vrot.slane %v687, 1
      %v690 = vsel %vm340, %v685, %v689
      %v692 = vshrl.u32 %v593, 16
      %v694 = vshll.u32 %v593, 16
      %v696 = vrot.slane %v694, 1
      %v697 = vor.u32 %v692, %v696
      %v699 = vshll.u32 %v617, 16
      %v701 = vrot.slane %v699, 1
      %v702 = vsel %vm340, %v697, %v701
      %v704 = vshrl.u32 %v594, 16
      %v706 = vshll.u32 %v594, 16
      %v708 = vrot.slane %v706, 1
      %v709 = vor.u32 %v704, %v708
      %v711 = vshll.u32 %v618, 16
      %v713 = vrot.slane %v711, 1
      %v714 = vsel %vm340, %v709, %v713
      %715 = vrot.lane.b32.xlu0 %v630, 64
      %v716 = vpop.permute.xlu0 %715
      %717 = vrot.lane.b32.xlu0 %v642, 64
      %v718 = vpop.permute.xlu0 %717
      %719 = vrot.lane.b32.xlu0 %v654, 64
      %v720 = vpop.permute.xlu0 %719
      %721 = vrot.lane.b32.xlu0 %v666, 64
      %v722 = vpop.permute.xlu0 %721
      %723 = vrot.lane.b32.xlu0 %v678, 64
      %v724 = vpop.permute.xlu0 %723
      %725 = vrot.lane.b32.xlu0 %v690, 64
      %v726 = vpop.permute.xlu0 %725
      %727 = vrot.lane.b32.xlu0 %v702, 64
      %v728 = vpop.permute.xlu0 %727
      %729 = vrot.lane.b32.xlu0 %v714, 64
      %v730 = vpop.permute.xlu0 %729
      %v731 = vrot.slane %v587, 1
      %v732 = vrot.slane %v611, 1
      %v733 = vsel %vm453, %v731, %v732
      %v734 = vrot.slane %v588, 1
      %v735 = vrot.slane %v612, 1
      %v736 = vsel %vm453, %v734, %v735
      %v737 = vrot.slane %v589, 1
      %v738 = vrot.slane %v613, 1
      %v739 = vsel %vm453, %v737, %v738
      %v740 = vrot.slane %v590, 1
      %v741 = vrot.slane %v614, 1
      %v742 = vsel %vm453, %v740, %v741
      %v743 = vrot.slane %v591, 1
      %v744 = vrot.slane %v615, 1
      %v745 = vsel %vm453, %v743, %v744
      %v746 = vrot.slane %v592, 1
      %v747 = vrot.slane %v616, 1
      %v748 = vsel %vm453, %v746, %v747
      %v749 = vrot.slane %v593, 1
      %v750 = vrot.slane %v617, 1
      %v751 = vsel %vm453, %v749, %v750
      %v752 = vrot.slane %v594, 1
      %v753 = vrot.slane %v618, 1
      %v754 = vsel %vm453, %v752, %v753
      %v756 = vsel %vm478, %v587, %v716
      %v759 = vsel %vm478, %v588, %v718
      %v762 = vsel %vm478, %v589, %v720
      %v765 = vsel %vm478, %v590, %v722
      %v768 = vsel %vm478, %v591, %v724
      %v771 = vsel %vm478, %v592, %v726
      %v774 = vsel %vm478, %v593, %v728
      %v777 = vsel %vm478, %v594, %v730
      %s779 = scalar_lea.vmem %s1, 96
      %v780 = vld [vmem:[%s779] sm:$0xf]
      %v781 = vld [vmem:[%s779 + $0x4] sm:$0xf]
      %v782 = vld [vmem:[%s779 + $0x8] sm:$0xf]
      %v783 = vld [vmem:[%s779 + $0xc] sm:$0xf]
      %v784 = vld [vmem:[%s779 + $0x10] sm:$0xf]
      %v785 = vld [vmem:[%s779 + $0x14] sm:$0xf]
      %v786 = vld [vmem:[%s779 + $0x18] sm:$0xf]
      %v787 = vld [vmem:[%s779 + $0x1c] sm:$0xf]
      %v788 = vld [vmem:[%s779 + $0x20] sm:$0xf]
      %v789 = vld [vmem:[%s779 + $0x24] sm:$0xf]
      %v790 = vld [vmem:[%s779 + $0x28] sm:$0xf]
      %v791 = vld [vmem:[%s779 + $0x2c] sm:$0xf]
      %v792 = vld [vmem:[%s779 + $0x30] sm:$0xf]
      %v793 = vld [vmem:[%s779 + $0x34] sm:$0xf]
      %v794 = vld [vmem:[%s779 + $0x38] sm:$0xf]
      %v795 = vld [vmem:[%s779 + $0x3c] sm:$0xf]
      %v796 = vld [vmem:[%s779 + $0x40] sm:$0xf]
      %v797 = vld [vmem:[%s779 + $0x44] sm:$0xf]
      %v798 = vld [vmem:[%s779 + $0x48] sm:$0xf]
      %v799 = vld [vmem:[%s779 + $0x4c] sm:$0xf]
      %v800 = vld [vmem:[%s779 + $0x50] sm:$0xf]
      %v801 = vld [vmem:[%s779 + $0x54] sm:$0xf]
      %v802 = vld [vmem:[%s779 + $0x58] sm:$0xf]
      %v803 = vld [vmem:[%s779 + $0x5c] sm:$0xf]
      %v828 = vunpack.c.l.b16 %v780
      %v829 = vunpack.c.l.b16 %v781
      %v830 = vunpack.c.l.b16 %v782
      %v831 = vunpack.c.l.b16 %v783
      %v832 = vunpack.c.l.b16 %v784
      %v833 = vunpack.c.l.b16 %v785
      %v834 = vunpack.c.l.b16 %v786
      %v835 = vunpack.c.l.b16 %v787
      %v836 = vunpack.c.l.b16 %v788
      %v837 = vunpack.c.l.b16 %v789
      %v838 = vunpack.c.l.b16 %v790
      %v839 = vunpack.c.l.b16 %v791
      %v840 = vunpack.c.l.b16 %v792
      %v841 = vunpack.c.l.b16 %v793
      %v842 = vunpack.c.l.b16 %v794
      %v843 = vunpack.c.l.b16 %v795
      %v844 = vunpack.c.l.b16 %v796
      %v845 = vunpack.c.l.b16 %v797
      %v846 = vunpack.c.l.b16 %v798
      %v847 = vunpack.c.l.b16 %v799
      %v848 = vunpack.c.l.b16 %v800
      %v849 = vunpack.c.l.b16 %v801
      %v850 = vunpack.c.l.b16 %v802
      %v851 = vunpack.c.l.b16 %v803
      %v852 = vpack.c.b16 %v829, %v828
      %v853 = vpack.c.b16 %v831, %v830
      %v854 = vpack.c.b16 %v833, %v832
      %v855 = vpack.c.b16 %v835, %v834
      %v856 = vpack.c.b16 %v837, %v836
      %v857 = vpack.c.b16 %v839, %v838
      %v858 = vpack.c.b16 %v841, %v840
      %v859 = vpack.c.b16 %v843, %v842
      %v860 = vpack.c.b16 %v845, %v844
      %v861 = vpack.c.b16 %v847, %v846
      %v862 = vpack.c.b16 %v849, %v848
      %v863 = vpack.c.b16 %v851, %v850
      %v877 = vsel %vm478, %v733, 0
      %v880 = vsel %vm478, %v736, 0
      %v883 = vsel %vm478, %v739, 0
      %v886 = vsel %vm478, %v742, 0
      %v889 = vsel %vm478, %v745, 0
      %v892 = vsel %vm478, %v748, 0
      %v895 = vsel %vm478, %v751, 0
      %v898 = vsel %vm478, %v754, 0
      %900 = vmatprep.subr.bf16.mxu0 0
      %901 = vmatpush1.bf16.msra.mxu0 %v852
      %902 = vmatprep.subr.bf16.mxu0 0
      %903 = vmatpush1.bf16.msra.mxu0 %v853
      %904 = vmatprep.subr.bf16.mxu0 0
      %905 = vmatpush1.bf16.msra.mxu0 %v854
      %906 = vmatprep.subr.bf16.mxu0 0
      %907 = vmatpush1.bf16.msra.mxu0 %v855
      %908 = vmatprep.subr.bf16.mxu0 0
      %909 = vmatpush1.bf16.msra.mxu0 %v856
      %910 = vmatprep.subr.bf16.mxu0 0
      %911 = vmatpush1.bf16.msra.mxu0 %v857
      %912 = vmatprep.subr.bf16.mxu0 0
      %913 = vmatpush1.bf16.msra.mxu0 %v858
      %914 = vmatprep.subr.bf16.mxu0 0
      %915 = vmatpush1.bf16.msra.mxu0 %v859
      %916 = vmatprep.subr.bf16.mxu0 0
      %917 = vmatpush1.bf16.msra.mxu0 %v860
      %918 = vmatprep.subr.bf16.mxu0 0
      %919 = vmatpush1.bf16.msra.mxu0 %v861
      %920 = vmatprep.subr.bf16.mxu0 0
      %921 = vmatpush1.bf16.msra.mxu0 %v862
      %922 = vmatprep.subr.bf16.mxu0 0
      %923 = vmatpush1.bf16.msra.mxu0 %v863
      %924 = vmatprep.subr.bf16.mxu0 0
      %925 = vmatpush1.bf16.msra.mxu0 0
      %926 = vmatprep.subr.bf16.mxu0 0
      %927 = vmatpush1.bf16.msra.mxu0 0
      %928 = vmatprep.subr.bf16.mxu0 0
      %929 = vmatpush1.bf16.msra.mxu0 0
      %930 = vmatprep.subr.bf16.mxu0 0
      %931 = vmatpush1.bf16.msra.mxu0 0
      %932 = vmatprep.mubr.bf16.mxu0 %v877
      %933 = vmatmul.mubr.bf16.gmra.mrb[0].mxu0 %v756
      %v934 = vpop.f32.mrb[0].mxu0
      %v935 = vadd.f32 0.0, %v934
      %v936 = vpop.f32.mrb[0].mxu0
      %v937 = vpop.f32.mrb[0].mxu0
      %v938 = vadd.f32 0.0, %v937
      %v939 = vpop.f32.mrb[0].mxu0
      %940 = vmatprep.mubr.bf16.mxu0 %v880
      %941 = vmatmul.mubr.bf16.gmra.mrb[0].mxu0 %v759
      %v942 = vpop.f32.mrb[0].mxu0
      %v943 = vadd.f32 0.0, %v942
      %v944 = vpop.f32.mrb[0].mxu0
      %v945 = vpop.f32.mrb[0].mxu0
      %v946 = vadd.f32 0.0, %v945
      %v947 = vpop.f32.mrb[0].mxu0
      %948 = vmatprep.mubr.bf16.mxu0 %v883
      %949 = vmatmul.mubr.bf16.gmra.mrb[0].mxu0 %v762
      %v950 = vpop.f32.mrb[0].mxu0
      %v951 = vadd.f32 0.0, %v950
      %v952 = vpop.f32.mrb[0].mxu0
      %v953 = vpop.f32.mrb[0].mxu0
      %v954 = vadd.f32 0.0, %v953
      %v955 = vpop.f32.mrb[0].mxu0
      %956 = vmatprep.mubr.bf16.mxu0 %v886
      %957 = vmatmul.mubr.bf16.gmra.mrb[0].mxu0 %v765
      %v958 = vpop.f32.mrb[0].mxu0
      %v959 = vadd.f32 0.0, %v958
      %v960 = vpop.f32.mrb[0].mxu0
      %v961 = vpop.f32.mrb[0].mxu0
      %v962 = vadd.f32 0.0, %v961
      %v963 = vpop.f32.mrb[0].mxu0
      %964 = vmatprep.mubr.bf16.mxu0 %v889
      %965 = vmatmul.mubr.bf16.gmra.mrb[0].mxu0 %v768
      %v966 = vpop.f32.mrb[0].mxu0
      %v967 = vadd.f32 0.0, %v966
      %v968 = vpop.f32.mrb[0].mxu0
      %v969 = vpop.f32.mrb[0].mxu0
      %v970 = vadd.f32 0.0, %v969
      %v971 = vpop.f32.mrb[0].mxu0
      %972 = vmatprep.mubr.bf16.mxu0 %v892
      %973 = vmatmul.mubr.bf16.gmra.mrb[0].mxu0 %v771
      %v974 = vpop.f32.mrb[0].mxu0
      %v975 = vadd.f32 0.0, %v974
      %v976 = vpop.f32.mrb[0].mxu0
      %v977 = vpop.f32.mrb[0].mxu0
      %v978 = vadd.f32 0.0, %v977
      %v979 = vpop.f32.mrb[0].mxu0
      %980 = vmatprep.mubr.bf16.mxu0 %v895
      %981 = vmatmul.mubr.bf16.gmra.mrb[0].mxu0 %v774
      %v982 = vpop.f32.mrb[0].mxu0
      %v983 = vadd.f32 0.0, %v982
      %v984 = vpop.f32.mrb[0].mxu0
      %v985 = vpop.f32.mrb[0].mxu0
      %v986 = vadd.f32 0.0, %v985
      %v987 = vpop.f32.mrb[0].mxu0
      %988 = vmatprep.mubr.bf16.mxu0 %v898
      %989 = vmatmul.mubr.bf16.gmra.mrb[0].mxu0 %v777
      %v990 = vpop.f32.mrb[0].mxu0
      %v991 = vadd.f32 0.0, %v990
      %v992 = vpop.f32.mrb[0].mxu0
      %v993 = vpop.f32.mrb[0].mxu0
      %v994 = vadd.f32 0.0, %v993
      %v995 = vpop.f32.mrb[0].mxu0
      %996 = vdwg.mxu0
      %v1021 = vunpack.c.l.b16 %v503
      %v1022 = vunpack.c.l.b16 %v504
      %v1023 = vunpack.c.l.b16 %v505
      %v1024 = vunpack.c.l.b16 %v506
      %v1025 = vunpack.c.l.b16 %v507
      %v1026 = vunpack.c.l.b16 %v508
      %v1027 = vunpack.c.l.b16 %v509
      %v1028 = vunpack.c.l.b16 %v510
      %v1029 = vunpack.c.l.b16 %v511
      %v1030 = vunpack.c.l.b16 %v512
      %v1031 = vunpack.c.l.b16 %v513
      %v1032 = vunpack.c.l.b16 %v514
      %v1033 = vunpack.c.l.b16 %v515
      %v1034 = vunpack.c.l.b16 %v516
      %v1035 = vunpack.c.l.b16 %v517
      %v1036 = vunpack.c.l.b16 %v518
      %v1037 = vunpack.c.l.b16 %v519
      %v1038 = vunpack.c.l.b16 %v520
      %v1039 = vunpack.c.l.b16 %v521
      %v1040 = vunpack.c.l.b16 %v522
      %v1041 = vunpack.c.l.b16 %v523
      %v1042 = vunpack.c.l.b16 %v524
      %v1043 = vunpack.c.l.b16 %v525
      %v1044 = vunpack.c.l.b16 %v526
      %v1045 = vpack.c.b16 %v1022, %v1021
      %v1046 = vpack.c.b16 %v1024, %v1023
      %v1047 = vpack.c.b16 %v1026, %v1025
      %v1048 = vpack.c.b16 %v1028, %v1027
      %v1049 = vpack.c.b16 %v1030, %v1029
      %v1050 = vpack.c.b16 %v1032, %v1031
      %v1051 = vpack.c.b16 %v1034, %v1033
      %v1052 = vpack.c.b16 %v1036, %v1035
      %v1053 = vpack.c.b16 %v1038, %v1037
      %v1054 = vpack.c.b16 %v1040, %v1039
      %v1055 = vpack.c.b16 %v1042, %v1041
      %v1056 = vpack.c.b16 %v1044, %v1043
      %v1070 = vsel %vm478, %v456, 0
      %v1073 = vsel %vm478, %v459, 0
      %v1076 = vsel %vm478, %v462, 0
      %v1079 = vsel %vm478, %v465, 0
      %v1082 = vsel %vm478, %v468, 0
      %v1085 = vsel %vm478, %v471, 0
      %v1088 = vsel %vm478, %v474, 0
      %v1091 = vsel %vm478, %v477, 0
      %1093 = vmatprep.subr.bf16.mxu0 0
      %1094 = vmatpush1.bf16.msra.mxu0 %v1045
      %1095 = vmatprep.subr.bf16.mxu0 0
      %1096 = vmatpush1.bf16.msra.mxu0 %v1046
      %1097 = vmatprep.subr.bf16.mxu0 0
      %1098 = vmatpush1.bf16.msra.mxu0 %v1047
      %1099 = vmatprep.subr.bf16.mxu0 0
      %1100 = vmatpush1.bf16.msra.mxu0 %v1048
      %1101 = vmatprep.subr.bf16.mxu0 0
      %1102 = vmatpush1.bf16.msra.mxu0 %v1049
      %1103 = vmatprep.subr.bf16.mxu0 0
      %1104 = vmatpush1.bf16.msra.mxu0 %v1050
      %1105 = vmatprep.subr.bf16.mxu0 0
      %1106 = vmatpush1.bf16.msra.mxu0 %v1051
      %1107 = vmatprep.subr.bf16.mxu0 0
      %1108 = vmatpush1.bf16.msra.mxu0 %v1052
      %1109 = vmatprep.subr.bf16.mxu0 0
      %1110 = vmatpush1.bf16.msra.mxu0 %v1053
      %1111 = vmatprep.subr.bf16.mxu0 0
      %1112 = vmatpush1.bf16.msra.mxu0 %v1054
      %1113 = vmatprep.subr.bf16.mxu0 0
      %1114 = vmatpush1.bf16.msra.mxu0 %v1055
      %1115 = vmatprep.subr.bf16.mxu0 0
      %1116 = vmatpush1.bf16.msra.mxu0 %v1056
      %1117 = vmatprep.subr.bf16.mxu0 0
      %1118 = vmatpush1.bf16.msra.mxu0 0
      %1119 = vmatprep.subr.bf16.mxu0 0
      %1120 = vmatpush1.bf16.msra.mxu0 0
      %1121 = vmatprep.subr.bf16.mxu0 0
      %1122 = vmatpush1.bf16.msra.mxu0 0
      %1123 = vmatprep.subr.bf16.mxu0 0
      %1124 = vmatpush1.bf16.msra.mxu0 0
      %1125 = vmatprep.mubr.bf16.mxu0 %v1070
      %1126 = vmatmul.mubr.bf16.gmra.mrb[0].mxu0 %v480
      %v1127 = vpop.f32.mrb[0].mxu0
      %v1128 = vadd.f32 %v935, %v1127
      %v1129 = vpop.f32.mrb[0].mxu0
      %v1130 = vpop.f32.mrb[0].mxu0
      %v1131 = vadd.f32 %v938, %v1130
      %v1132 = vpop.f32.mrb[0].mxu0
      %1133 = vmatprep.mubr.bf16.mxu0 %v1073
      %1134 = vmatmul.mubr.bf16.gmra.mrb[0].mxu0 %v483
      %v1135 = vpop.f32.mrb[0].mxu0
      %v1136 = vadd.f32 %v943, %v1135
      %v1137 = vpop.f32.mrb[0].mxu0
      %v1138 = vpop.f32.mrb[0].mxu0
      %v1139 = vadd.f32 %v946, %v1138
      %v1140 = vpop.f32.mrb[0].mxu0
      %1141 = vmatprep.mubr.bf16.mxu0 %v1076
      %1142 = vmatmul.mubr.bf16.gmra.mrb[0].mxu0 %v486
      %v1143 = vpop.f32.mrb[0].mxu0
      %v1144 = vadd.f32 %v951, %v1143
      %v1145 = vpop.f32.mrb[0].mxu0
      %v1146 = vpop.f32.mrb[0].mxu0
      %v1147 = vadd.f32 %v954, %v1146
      %v1148 = vpop.f32.mrb[0].mxu0
      %1149 = vmatprep.mubr.bf16.mxu0 %v1079
      %1150 = vmatmul.mubr.bf16.gmra.mrb[0].mxu0 %v489
      %v1151 = vpop.f32.mrb[0].mxu0
      %v1152 = vadd.f32 %v959, %v1151
      %v1153 = vpop.f32.mrb[0].mxu0
      %v1154 = vpop.f32.mrb[0].mxu0
      %v1155 = vadd.f32 %v962, %v1154
      %v1156 = vpop.f32.mrb[0].mxu0
      %1157 = vmatprep.mubr.bf16.mxu0 %v1082
      %1158 = vmatmul.mubr.bf16.gmra.mrb[0].mxu0 %v492
      %v1159 = vpop.f32.mrb[0].mxu0
      %v1160 = vadd.f32 %v967, %v1159
      %v1161 = vpop.f32.mrb[0].mxu0
      %v1162 = vpop.f32.mrb[0].mxu0
      %v1163 = vadd.f32 %v970, %v1162
      %v1164 = vpop.f32.mrb[0].mxu0
      %1165 = vmatprep.mubr.bf16.mxu0 %v1085
      %1166 = vmatmul.mubr.bf16.gmra.mrb[0].mxu0 %v495
      %v1167 = vpop.f32.mrb[0].mxu0
      %v1168 = vadd.f32 %v975, %v1167
      %v1169 = vpop.f32.mrb[0].mxu0
      %v1170 = vpop.f32.mrb[0].mxu0
      %v1171 = vadd.f32 %v978, %v1170
      %v1172 = vpop.f32.mrb[0].mxu0
      %1173 = vmatprep.mubr.bf16.mxu0 %v1088
      %1174 = vmatmul.mubr.bf16.gmra.mrb[0].mxu0 %v498
      %v1175 = vpop.f32.mrb[0].mxu0
      %v1176 = vadd.f32 %v983, %v1175
      %v1177 = vpop.f32.mrb[0].mxu0
      %v1178 = vpop.f32.mrb[0].mxu0
      %v1179 = vadd.f32 %v986, %v1178
      %v1180 = vpop.f32.mrb[0].mxu0
      %1181 = vmatprep.mubr.bf16.mxu0 %v1091
      %1182 = vmatmul.mubr.bf16.gmra.mrb[0].mxu0 %v501
      %v1183 = vpop.f32.mrb[0].mxu0
      %v1184 = vadd.f32 %v991, %v1183
      %v1185 = vpop.f32.mrb[0].mxu0
      %v1186 = vpop.f32.mrb[0].mxu0
      %v1187 = vadd.f32 %v994, %v1186
      %v1188 = vpop.f32.mrb[0].mxu0
      %1189 = vdwg.mxu0
      %s1190 = sadd.s32 %s248, 2
      %s1191 = smul.u32 %s1190, 3
      %s1192 = smul.addr %s1191, 4
      %s1193 = scalar_lea.vmem %s225, %s1192
      %v1194 = vld [vmem:[%s1193] sm:$0xf]
      %v1195 = vld [vmem:[%s1193 + $0x4] sm:$0xf]
      %v1196 = vld [vmem:[%s1193 + $0x8] sm:$0x1]
      %v1197 = vld [vmem:[%s1193 + $0xc] sm:$0xf]
      %v1198 = vld [vmem:[%s1193 + $0x10] sm:$0xf]
      %v1199 = vld [vmem:[%s1193 + $0x14] sm:$0x1]
      %v1200 = vld [vmem:[%s1193 + $0x18] sm:$0xf]
      %v1201 = vld [vmem:[%s1193 + $0x1c] sm:$0xf]
      %v1202 = vld [vmem:[%s1193 + $0x20] sm:$0x1]
      %v1203 = vld [vmem:[%s1193 + $0x24] sm:$0xf]
      %v1204 = vld [vmem:[%s1193 + $0x28] sm:$0xf]
      %v1205 = vld [vmem:[%s1193 + $0x2c] sm:$0x1]
      %v1206 = vld [vmem:[%s1193 + $0x30] sm:$0xf]
      %v1207 = vld [vmem:[%s1193 + $0x34] sm:$0xf]
      %v1208 = vld [vmem:[%s1193 + $0x38] sm:$0x1]
      %v1209 = vld [vmem:[%s1193 + $0x3c] sm:$0xf]
      %v1210 = vld [vmem:[%s1193 + $0x40] sm:$0xf]
      %v1211 = vld [vmem:[%s1193 + $0x44] sm:$0x1]
      %v1212 = vld [vmem:[%s1193 + $0x48] sm:$0xf]
      %v1213 = vld [vmem:[%s1193 + $0x4c] sm:$0xf]
      %v1214 = vld [vmem:[%s1193 + $0x50] sm:$0x1]
      %v1215 = vld [vmem:[%s1193 + $0x54] sm:$0xf]
      %v1216 = vld [vmem:[%s1193 + $0x58] sm:$0xf]
      %v1217 = vld [vmem:[%s1193 + $0x5c] sm:$0x1]
      %v1234 = vunpack.c.l.b16 %v1194
      %v1235 = vunpack.c.l.b16 %v1195
      %v1236 = vunpack.c.l.b16 %v1197
      %v1237 = vunpack.c.l.b16 %v1198
      %v1238 = vunpack.c.l.b16 %v1200
      %v1239 = vunpack.c.l.b16 %v1201
      %v1240 = vunpack.c.l.b16 %v1203
      %v1241 = vunpack.c.l.b16 %v1204
      %v1242 = vunpack.c.l.b16 %v1206
      %v1243 = vunpack.c.l.b16 %v1207
      %v1244 = vunpack.c.l.b16 %v1209
      %v1245 = vunpack.c.l.b16 %v1210
      %v1246 = vunpack.c.l.b16 %v1212
      %v1247 = vunpack.c.l.b16 %v1213
      %v1248 = vunpack.c.l.b16 %v1215
      %v1249 = vunpack.c.l.b16 %v1216
      %v1250 = vpack.c.b16 %v1235, %v1234
      %v1251 = vpack.c.b16 %v1237, %v1236
      %v1252 = vpack.c.b16 %v1239, %v1238
      %v1253 = vpack.c.b16 %v1241, %v1240
      %v1254 = vpack.c.b16 %v1243, %v1242
      %v1255 = vpack.c.b16 %v1245, %v1244
      %v1256 = vpack.c.b16 %v1247, %v1246
      %v1257 = vpack.c.b16 %v1249, %v1248
      %v1266 = vunpack.c.l.b16 %v1196
      %v1267 = vunpack.c.l.b16 %v1199
      %v1268 = vunpack.c.l.b16 %v1202
      %v1269 = vunpack.c.l.b16 %v1205
      %v1270 = vunpack.c.l.b16 %v1208
      %v1271 = vunpack.c.l.b16 %v1211
      %v1272 = vunpack.c.l.b16 %v1214
      %v1273 = vunpack.c.l.b16 %v1217
      %v1274 = vpack.c.b16 %v1266, %v1266
      %v1275 = vpack.c.b16 %v1267, %v1267
      %v1276 = vpack.c.b16 %v1268, %v1268
      %v1277 = vpack.c.b16 %v1269, %v1269
      %v1278 = vpack.c.b16 %v1270, %v1270
      %v1279 = vpack.c.b16 %v1271, %v1271
      %v1280 = vpack.c.b16 %v1272, %v1272
      %v1281 = vpack.c.b16 %v1273, %v1273
      %v1283 = vshrl.u32 %v1250, 16
      %v1285 = vshll.u32 %v1250, 16
      %v1287 = vrot.slane %v1285, 1
      %v1288 = vor.u32 %v1283, %v1287
      %v1290 = vshll.u32 %v1274, 16
      %v1292 = vrot.slane %v1290, 1
      %v1293 = vsel %vm340, %v1288, %v1292
      %v1295 = vshrl.u32 %v1251, 16
      %v1297 = vshll.u32 %v1251, 16
      %v1299 = vrot.slane %v1297, 1
      %v1300 = vor.u32 %v1295, %v1299
      %v1302 = vshll.u32 %v1275, 16
      %v1304 = vrot.slane %v1302, 1
      %v1305 = vsel %vm340, %v1300, %v1304
      %v1307 = vshrl.u32 %v1252, 16
      %v1309 = vshll.u32 %v1252, 16
      %v1311 = vrot.slane %v1309, 1
      %v1312 = vor.u32 %v1307, %v1311
      %v1314 = vshll.u32 %v1276, 16
      %v1316 = vrot.slane %v1314, 1
      %v1317 = vsel %vm340, %v1312, %v1316
      %v1319 = vshrl.u32 %v1253, 16
      %v1321 = vshll.u32 %v1253, 16
      %v1323 = vrot.slane %v1321, 1
      %v1324 = vor.u32 %v1319, %v1323
      %v1326 = vshll.u32 %v1277, 16
      %v1328 = vrot.slane %v1326, 1
      %v1329 = vsel %vm340, %v1324, %v1328
      %v1331 = vshrl.u32 %v1254, 16
      %v1333 = vshll.u32 %v1254, 16
      %v1335 = vrot.slane %v1333, 1
      %v1336 = vor.u32 %v1331, %v1335
      %v1338 = vshll.u32 %v1278, 16
      %v1340 = vrot.slane %v1338, 1
      %v1341 = vsel %vm340, %v1336, %v1340
      %v1343 = vshrl.u32 %v1255, 16
      %v1345 = vshll.u32 %v1255, 16
      %v1347 = vrot.slane %v1345, 1
      %v1348 = vor.u32 %v1343, %v1347
      %v1350 = vshll.u32 %v1279, 16
      %v1352 = vrot.slane %v1350, 1
      %v1353 = vsel %vm340, %v1348, %v1352
      %v1355 = vshrl.u32 %v1256, 16
      %v1357 = vshll.u32 %v1256, 16
      %v1359 = vrot.slane %v1357, 1
      %v1360 = vor.u32 %v1355, %v1359
      %v1362 = vshll.u32 %v1280, 16
      %v1364 = vrot.slane %v1362, 1
      %v1365 = vsel %vm340, %v1360, %v1364
      %v1367 = vshrl.u32 %v1257, 16
      %v1369 = vshll.u32 %v1257, 16
      %v1371 = vrot.slane %v1369, 1
      %v1372 = vor.u32 %v1367, %v1371
      %v1374 = vshll.u32 %v1281, 16
      %v1376 = vrot.slane %v1374, 1
      %v1377 = vsel %vm340, %v1372, %v1376
      %1378 = vrot.lane.b32.xlu0 %v1293, 64
      %v1379 = vpop.permute.xlu0 %1378
      %1380 = vrot.lane.b32.xlu0 %v1305, 64
      %v1381 = vpop.permute.xlu0 %1380
      %1382 = vrot.lane.b32.xlu0 %v1317, 64
      %v1383 = vpop.permute.xlu0 %1382
      %1384 = vrot.lane.b32.xlu0 %v1329, 64
      %v1385 = vpop.permute.xlu0 %1384
      %1386 = vrot.lane.b32.xlu0 %v1341, 64
      %v1387 = vpop.permute.xlu0 %1386
      %1388 = vrot.lane.b32.xlu0 %v1353, 64
      %v1389 = vpop.permute.xlu0 %1388
      %1390 = vrot.lane.b32.xlu0 %v1365, 64
      %v1391 = vpop.permute.xlu0 %1390
      %1392 = vrot.lane.b32.xlu0 %v1377, 64
      %v1393 = vpop.permute.xlu0 %1392
      %v1394 = vrot.slane %v1250, 1
      %v1395 = vrot.slane %v1274, 1
      %v1396 = vsel %vm453, %v1394, %v1395
      %v1397 = vrot.slane %v1251, 1
      %v1398 = vrot.slane %v1275, 1
      %v1399 = vsel %vm453, %v1397, %v1398
      %v1400 = vrot.slane %v1252, 1
      %v1401 = vrot.slane %v1276, 1
      %v1402 = vsel %vm453, %v1400, %v1401
      %v1403 = vrot.slane %v1253, 1
      %v1404 = vrot.slane %v1277, 1
      %v1405 = vsel %vm453, %v1403, %v1404
      %v1406 = vrot.slane %v1254, 1
      %v1407 = vrot.slane %v1278, 1
      %v1408 = vsel %vm453, %v1406, %v1407
      %v1409 = vrot.slane %v1255, 1
      %v1410 = vrot.slane %v1279, 1
      %v1411 = vsel %vm453, %v1409, %v1410
      %v1412 = vrot.slane %v1256, 1
      %v1413 = vrot.slane %v1280, 1
      %v1414 = vsel %vm453, %v1412, %v1413
      %v1415 = vrot.slane %v1257, 1
      %v1416 = vrot.slane %v1281, 1
      %v1417 = vsel %vm453, %v1415, %v1416
      %v1419 = vsel %vm478, %v1250, %v1379
      %v1422 = vsel %vm478, %v1251, %v1381
      %v1425 = vsel %vm478, %v1252, %v1383
      %v1428 = vsel %vm478, %v1253, %v1385
      %v1431 = vsel %vm478, %v1254, %v1387
      %v1434 = vsel %vm478, %v1255, %v1389
      %v1437 = vsel %vm478, %v1256, %v1391
      %v1440 = vsel %vm478, %v1257, %v1393
      %s1442 = scalar_lea.vmem %s1, 192
      %v1443 = vld [vmem:[%s1442] sm:$0xf]
      %v1444 = vld [vmem:[%s1442 + $0x4] sm:$0xf]
      %v1445 = vld [vmem:[%s1442 + $0x8] sm:$0xf]
      %v1446 = vld [vmem:[%s1442 + $0xc] sm:$0xf]
      %v1447 = vld [vmem:[%s1442 + $0x10] sm:$0xf]
      %v1448 = vld [vmem:[%s1442 + $0x14] sm:$0xf]
      %v1449 = vld [vmem:[%s1442 + $0x18] sm:$0xf]
      %v1450 = vld [vmem:[%s1442 + $0x1c] sm:$0xf]
      %v1451 = vld [vmem:[%s1442 + $0x20] sm:$0xf]
      %v1452 = vld [vmem:[%s1442 + $0x24] sm:$0xf]
      %v1453 = vld [vmem:[%s1442 + $0x28] sm:$0xf]
      %v1454 = vld [vmem:[%s1442 + $0x2c] sm:$0xf]
      %v1455 = vld [vmem:[%s1442 + $0x30] sm:$0xf]
      %v1456 = vld [vmem:[%s1442 + $0x34] sm:$0xf]
      %v1457 = vld [vmem:[%s1442 + $0x38] sm:$0xf]
      %v1458 = vld [vmem:[%s1442 + $0x3c] sm:$0xf]
      %v1459 = vld [vmem:[%s1442 + $0x40] sm:$0xf]
      %v1460 = vld [vmem:[%s1442 + $0x44] sm:$0xf]
      %v1461 = vld [vmem:[%s1442 + $0x48] sm:$0xf]
      %v1462 = vld [vmem:[%s1442 + $0x4c] sm:$0xf]
      %v1463 = vld [vmem:[%s1442 + $0x50] sm:$0xf]
      %v1464 = vld [vmem:[%s1442 + $0x54] sm:$0xf]
      %v1465 = vld [vmem:[%s1442 + $0x58] sm:$0xf]
      %v1466 = vld [vmem:[%s1442 + $0x5c] sm:$0xf]
      %v1491 = vunpack.c.l.b16 %v1443
      %v1492 = vunpack.c.l.b16 %v1444
      %v1493 = vunpack.c.l.b16 %v1445
      %v1494 = vunpack.c.l.b16 %v1446
      %v1495 = vunpack.c.l.b16 %v1447
      %v1496 = vunpack.c.l.b16 %v1448
      %v1497 = vunpack.c.l.b16 %v1449
      %v1498 = vunpack.c.l.b16 %v1450
      %v1499 = vunpack.c.l.b16 %v1451
      %v1500 = vunpack.c.l.b16 %v1452
      %v1501 = vunpack.c.l.b16 %v1453
      %v1502 = vunpack.c.l.b16 %v1454
      %v1503 = vunpack.c.l.b16 %v1455
      %v1504 = vunpack.c.l.b16 %v1456
      %v1505 = vunpack.c.l.b16 %v1457
      %v1506 = vunpack.c.l.b16 %v1458
      %v1507 = vunpack.c.l.b16 %v1459
      %v1508 = vunpack.c.l.b16 %v1460
      %v1509 = vunpack.c.l.b16 %v1461
      %v1510 = vunpack.c.l.b16 %v1462
      %v1511 = vunpack.c.l.b16 %v1463
      %v1512 = vunpack.c.l.b16 %v1464
      %v1513 = vunpack.c.l.b16 %v1465
      %v1514 = vunpack.c.l.b16 %v1466
      %v1515 = vpack.c.b16 %v1492, %v1491
      %v1516 = vpack.c.b16 %v1494, %v1493
      %v1517 = vpack.c.b16 %v1496, %v1495
      %v1518 = vpack.c.b16 %v1498, %v1497
      %v1519 = vpack.c.b16 %v1500, %v1499
      %v1520 = vpack.c.b16 %v1502, %v1501
      %v1521 = vpack.c.b16 %v1504, %v1503
      %v1522 = vpack.c.b16 %v1506, %v1505
      %v1523 = vpack.c.b16 %v1508, %v1507
      %v1524 = vpack.c.b16 %v1510, %v1509
      %v1525 = vpack.c.b16 %v1512, %v1511
      %v1526 = vpack.c.b16 %v1514, %v1513
      %v1540 = vsel %vm478, %v1396, 0
      %v1543 = vsel %vm478, %v1399, 0
      %v1546 = vsel %vm478, %v1402, 0
      %v1549 = vsel %vm478, %v1405, 0
      %v1552 = vsel %vm478, %v1408, 0
      %v1555 = vsel %vm478, %v1411, 0
      %v1558 = vsel %vm478, %v1414, 0
      %v1561 = vsel %vm478, %v1417, 0
      %1563 = vmatprep.subr.bf16.mxu0 0
      %1564 = vmatpush1.bf16.msra.mxu0 %v1515
      %1565 = vmatprep.subr.bf16.mxu0 0
      %1566 = vmatpush1.bf16.msra.mxu0 %v1516
      %1567 = vmatprep.subr.bf16.mxu0 0
      %1568 = vmatpush1.bf16.msra.mxu0 %v1517
      %1569 = vmatprep.subr.bf16.mxu0 0
      %1570 = vmatpush1.bf16.msra.mxu0 %v1518
      %1571 = vmatprep.subr.bf16.mxu0 0
      %1572 = vmatpush1.bf16.msra.mxu0 %v1519
      %1573 = vmatprep.subr.bf16.mxu0 0
      %1574 = vmatpush1.bf16.msra.mxu0 %v1520
      %1575 = vmatprep.subr.bf16.mxu0 0
      %1576 = vmatpush1.bf16.msra.mxu0 %v1521
      %1577 = vmatprep.subr.bf16.mxu0 0
      %1578 = vmatpush1.bf16.msra.mxu0 %v1522
      %1579 = vmatprep.subr.bf16.mxu0 0
      %1580 = vmatpush1.bf16.msra.mxu0 %v1523
      %1581 = vmatprep.subr.bf16.mxu0 0
      %1582 = vmatpush1.bf16.msra.mxu0 %v1524
      %1583 = vmatprep.subr.bf16.mxu0 0
      %1584 = vmatpush1.bf16.msra.mxu0 %v1525
      %1585 = vmatprep.subr.bf16.mxu0 0
      %1586 = vmatpush1.bf16.msra.mxu0 %v1526
      %1587 = vmatprep.subr.bf16.mxu0 0
      %1588 = vmatpush1.bf16.msra.mxu0 0
      %1589 = vmatprep.subr.bf16.mxu0 0
      %1590 = vmatpush1.bf16.msra.mxu0 0
      %1591 = vmatprep.subr.bf16.mxu0 0
      %1592 = vmatpush1.bf16.msra.mxu0 0
      %1593 = vmatprep.subr.bf16.mxu0 0
      %1594 = vmatpush1.bf16.msra.mxu0 0
      %1595 = vmatprep.mubr.bf16.mxu0 %v1540
      %1596 = vmatmul.mubr.bf16.gmra.mrb[0].mxu0 %v1419
      %v1597 = vpop.f32.mrb[0].mxu0
      %v1598 = vadd.f32 0.0, %v1597
      %v1599 = vpop.f32.mrb[0].mxu0
      %v1600 = vpop.f32.mrb[0].mxu0
      %v1601 = vadd.f32 0.0, %v1600
      %v1602 = vpop.f32.mrb[0].mxu0
      %1603 = vmatprep.mubr.bf16.mxu0 %v1543
      %1604 = vmatmul.mubr.bf16.gmra.mrb[0].mxu0 %v1422
      %v1605 = vpop.f32.mrb[0].mxu0
      %v1606 = vadd.f32 0.0, %v1605
      %v1607 = vpop.f32.mrb[0].mxu0
      %v1608 = vpop.f32.mrb[0].mxu0
      %v1609 = vadd.f32 0.0, %v1608
      %v1610 = vpop.f32.mrb[0].mxu0
      %1611 = vmatprep.mubr.bf16.mxu0 %v1546
      %1612 = vmatmul.mubr.bf16.gmra.mrb[0].mxu0 %v1425
      %v1613 = vpop.f32.mrb[0].mxu0
      %v1614 = vadd.f32 0.0, %v1613
      %v1615 = vpop.f32.mrb[0].mxu0
      %v1616 = vpop.f32.mrb[0].mxu0
      %v1617 = vadd.f32 0.0, %v1616
      %v1618 = vpop.f32.mrb[0].mxu0
      %1619 = vmatprep.mubr.bf16.mxu0 %v1549
      %1620 = vmatmul.mubr.bf16.gmra.mrb[0].mxu0 %v1428
      %v1621 = vpop.f32.mrb[0].mxu0
      %v1622 = vadd.f32 0.0, %v1621
      %v1623 = vpop.f32.mrb[0].mxu0
      %v1624 = vpop.f32.mrb[0].mxu0
      %v1625 = vadd.f32 0.0, %v1624
      %v1626 = vpop.f32.mrb[0].mxu0
      %1627 = vmatprep.mubr.bf16.mxu0 %v1552
      %1628 = vmatmul.mubr.bf16.gmra.mrb[0].mxu0 %v1431
      %v1629 = vpop.f32.mrb[0].mxu0
      %v1630 = vadd.f32 0.0, %v1629
      %v1631 = vpop.f32.mrb[0].mxu0
      %v1632 = vpop.f32.mrb[0].mxu0
      %v1633 = vadd.f32 0.0, %v1632
      %v1634 = vpop.f32.mrb[0].mxu0
      %1635 = vmatprep.mubr.bf16.mxu0 %v1555
      %1636 = vmatmul.mubr.bf16.gmra.mrb[0].mxu0 %v1434
      %v1637 = vpop.f32.mrb[0].mxu0
      %v1638 = vadd.f32 0.0, %v1637
      %v1639 = vpop.f32.mrb[0].mxu0
      %v1640 = vpop.f32.mrb[0].mxu0
      %v1641 = vadd.f32 0.0, %v1640
      %v1642 = vpop.f32.mrb[0].mxu0
      %1643 = vmatprep.mubr.bf16.mxu0 %v1558
      %1644 = vmatmul.mubr.bf16.gmra.mrb[0].mxu0 %v1437
      %v1645 = vpop.f32.mrb[0].mxu0
      %v1646 = vadd.f32 0.0, %v1645
      %v1647 = vpop.f32.mrb[0].mxu0
      %v1648 = vpop.f32.mrb[0].mxu0
      %v1649 = vadd.f32 0.0, %v1648
      %v1650 = vpop.f32.mrb[0].mxu0
      %1651 = vmatprep.mubr.bf16.mxu0 %v1561
      %1652 = vmatmul.mubr.bf16.gmra.mrb[0].mxu0 %v1440
      %v1653 = vpop.f32.mrb[0].mxu0
      %v1654 = vadd.f32 0.0, %v1653
      %v1655 = vpop.f32.mrb[0].mxu0
      %v1656 = vpop.f32.mrb[0].mxu0
      %v1657 = vadd.f32 0.0, %v1656
      %v1658 = vpop.f32.mrb[0].mxu0
      %1659 = vdwg.mxu0
      %v1660 = vadd.f32 %v1128, %v1598
      %v1661 = vadd.f32 %v1131, %v1601
      %v1662 = vadd.f32 %v1136, %v1606
      %v1663 = vadd.f32 %v1139, %v1609
      %v1664 = vadd.f32 %v1144, %v1614
      %v1665 = vadd.f32 %v1147, %v1617
      %v1666 = vadd.f32 %v1152, %v1622
      %v1667 = vadd.f32 %v1155, %v1625
      %v1668 = vadd.f32 %v1160, %v1630
      %v1669 = vadd.f32 %v1163, %v1633
      %v1670 = vadd.f32 %v1168, %v1638
      %v1671 = vadd.f32 %v1171, %v1641
      %v1672 = vadd.f32 %v1176, %v1646
      %v1673 = vadd.f32 %v1179, %v1649
      %v1674 = vadd.f32 %v1184, %v1654
      %v1675 = vadd.f32 %v1187, %v1657
      %v1676 = vld [vmem:[%s2] sm:$0x1]
      %v1678 = vlaneseq
      %v1679 = vshrl.u32 %v1678, 7
      %v1680 = vsub.s32 0, %v1679
      %v1681 = vrot.slane %v1676, %v1680
      %v1683 = vadd.f32 %v1660, %v1681
      %v1684 = vadd.f32 %v1661, %v1681
      %v1685 = vadd.f32 %v1662, %v1681
      %v1686 = vadd.f32 %v1663, %v1681
      %v1687 = vadd.f32 %v1664, %v1681
      %v1688 = vadd.f32 %v1665, %v1681
      %v1689 = vadd.f32 %v1666, %v1681
      %v1690 = vadd.f32 %v1667, %v1681
      %v1691 = vadd.f32 %v1668, %v1681
      %v1692 = vadd.f32 %v1669, %v1681
      %v1693 = vadd.f32 %v1670, %v1681
      %v1694 = vadd.f32 %v1671, %v1681
      %v1695 = vadd.f32 %v1672, %v1681
      %v1696 = vadd.f32 %v1673, %v1681
      %v1697 = vadd.f32 %v1674, %v1681
      %v1698 = vadd.f32 %v1675, %v1681
      %v1699 = vmax.f32 %v1683, 0.0
      %v1700 = vmax.f32 %v1684, 0.0
      %v1701 = vmax.f32 %v1685, 0.0
      %v1702 = vmax.f32 %v1686, 0.0
      %v1703 = vmax.f32 %v1687, 0.0
      %v1704 = vmax.f32 %v1688, 0.0
      %v1705 = vmax.f32 %v1689, 0.0
      %v1706 = vmax.f32 %v1690, 0.0
      %v1707 = vmax.f32 %v1691, 0.0
      %v1708 = vmax.f32 %v1692, 0.0
      %v1709 = vmax.f32 %v1693, 0.0
      %v1710 = vmax.f32 %v1694, 0.0
      %v1711 = vmax.f32 %v1695, 0.0
      %v1712 = vmax.f32 %v1696, 0.0
      %v1713 = vmax.f32 %v1697, 0.0
      %v1714 = vmax.f32 %v1698, 0.0
      %v1715 = vpack.c.bf16 %v1700, %v1699
      %v1716 = vpack.c.bf16 %v1702, %v1701
      %v1717 = vpack.c.bf16 %v1704, %v1703
      %v1718 = vpack.c.bf16 %v1706, %v1705
      %v1719 = vpack.c.bf16 %v1708, %v1707
      %v1720 = vpack.c.bf16 %v1710, %v1709
      %v1721 = vpack.c.bf16 %v1712, %v1711
      %v1722 = vpack.c.bf16 %v1714, %v1713
      %v1731 = vunpack.c.l.b16 %v1715
      %v1732 = vunpack.c.h.b16 %v1715
      %v1733 = vunpack.c.l.b16 %v1716
      %v1734 = vunpack.c.h.b16 %v1716
      %v1735 = vunpack.c.l.b16 %v1717
      %v1736 = vunpack.c.h.b16 %v1717
      %v1737 = vunpack.c.l.b16 %v1718
      %v1738 = vunpack.c.h.b16 %v1718
      %v1739 = vunpack.c.l.b16 %v1719
      %v1740 = vunpack.c.h.b16 %v1719
      %v1741 = vunpack.c.l.b16 %v1720
      %v1742 = vunpack.c.h.b16 %v1720
      %v1743 = vunpack.c.l.b16 %v1721
      %v1744 = vunpack.c.h.b16 %v1721
      %v1745 = vunpack.c.l.b16 %v1722
      %v1746 = vunpack.c.h.b16 %v1722
      %v1747 = vpack.c.b16 %v1731, %v1731
      %v1748 = vpack.c.b16 %v1732, %v1732
      %v1749 = vpack.c.b16 %v1733, %v1733
      %v1750 = vpack.c.b16 %v1734, %v1734
      %v1751 = vpack.c.b16 %v1735, %v1735
      %v1752 = vpack.c.b16 %v1736, %v1736
      %v1753 = vpack.c.b16 %v1737, %v1737
      %v1754 = vpack.c.b16 %v1738, %v1738
      %v1755 = vpack.c.b16 %v1739, %v1739
      %v1756 = vpack.c.b16 %v1740, %v1740
      %v1757 = vpack.c.b16 %v1741, %v1741
      %v1758 = vpack.c.b16 %v1742, %v1742
      %v1759 = vpack.c.b16 %v1743, %v1743
      %v1760 = vpack.c.b16 %v1744, %v1744
      %v1761 = vpack.c.b16 %v1745, %v1745
      %v1762 = vpack.c.b16 %v1746, %v1746
      %vm1779 = vcmask 519168
      %1780 = vst.msk [vmem:[%s235] sm:$0xf] %vm1779, %v1747
      %1781 = vst.msk [vmem:[%s235 + $0x4] sm:$0xf] %vm1779, %v1748
      %1782 = vst.msk [vmem:[%s235 + $0x8] sm:$0xf] %vm1779, %v1749
      %1783 = vst.msk [vmem:[%s235 + $0xc] sm:$0xf] %vm1779, %v1750
      %1784 = vst.msk [vmem:[%s235 + $0x10] sm:$0xf] %vm1779, %v1751
      %1785 = vst.msk [vmem:[%s235 + $0x14] sm:$0xf] %vm1779, %v1752
      %1786 = vst.msk [vmem:[%s235 + $0x18] sm:$0xf] %vm1779, %v1753
      %1787 = vst.msk [vmem:[%s235 + $0x1c] sm:$0xf] %vm1779, %v1754
      %1788 = vst.msk [vmem:[%s235 + $0x20] sm:$0xf] %vm1779, %v1755
      %1789 = vst.msk [vmem:[%s235 + $0x24] sm:$0xf] %vm1779, %v1756
      %1790 = vst.msk [vmem:[%s235 + $0x28] sm:$0xf] %vm1779, %v1757
      %1791 = vst.msk [vmem:[%s235 + $0x2c] sm:$0xf] %vm1779, %v1758
      %1792 = vst.msk [vmem:[%s235 + $0x30] sm:$0xf] %vm1779, %v1759
      %1793 = vst.msk [vmem:[%s235 + $0x34] sm:$0xf] %vm1779, %v1760
      %1794 = vst.msk [vmem:[%s235 + $0x38] sm:$0xf] %vm1779, %v1761
      %1795 = vst.msk [vmem:[%s235 + $0x3c] sm:$0xf] %vm1779, %v1762
      %v1812 = vcombine.high %v1699, %v1699
      %v1814 = vunpack.c.l.s4 1983009808
      %v1815 = vunpack.c.0.s8 %v1814
      %v1816 = vlaneseq
      %v1817 = vshrl.u32 %v1816, 7
      %v1818 = vsub.s32 %v1815, %v1817
      %v1819 = vrot.slane %v1699, %v1818
      %v1821 = vunpack.c.l.s4 1983009808
      %v1822 = vunpack.c.0.s8 %v1821
      %v1823 = vlaneseq
      %v1824 = vshrl.u32 %v1823, 7
      %v1825 = vsub.s32 %v1822, %v1824
      %v1826 = vrot.slane %v1812, %v1825
      %v1827 = vcombine.high %v1819, %v1819
      %v1828 = vcombine.high %v1826, %v1826
      %v1829 = vcombine.high %v1700, %v1700
      %v1831 = vunpack.c.l.s4 1983009808
      %v1832 = vunpack.c.0.s8 %v1831
      %v1833 = vlaneseq
      %v1834 = vshrl.u32 %v1833, 7
      %v1835 = vsub.s32 %v1832, %v1834
      %v1836 = vrot.slane %v1700, %v1835
      %v1838 = vunpack.c.l.s4 1983009808
      %v1839 = vunpack.c.0.s8 %v1838
      %v1840 = vlaneseq
      %v1841 = vshrl.u32 %v1840, 7
      %v1842 = vsub.s32 %v1839, %v1841
      %v1843 = vrot.slane %v1829, %v1842
      %v1844 = vcombine.high %v1836, %v1836
      %v1845 = vcombine.high %v1843, %v1843
      %v1846 = vcombine.high %v1701, %v1701
      %v1848 = vunpack.c.l.s4 1983009808
      %v1849 = vunpack.c.0.s8 %v1848
      %v1850 = vlaneseq
      %v1851 = vshrl.u32 %v1850, 7
      %v1852 = vsub.s32 %v1849, %v1851
      %v1853 = vrot.slane %v1701, %v1852
      %v1855 = vunpack.c.l.s4 1983009808
      %v1856 = vunpack.c.0.s8 %v1855
      %v1857 = vlaneseq
      %v1858 = vshrl.u32 %v1857, 7
      %v1859 = vsub.s32 %v1856, %v1858
      %v1860 = vrot.slane %v1846, %v1859
      %v1861 = vcombine.high %v1853, %v1853
      %v1862 = vcombine.high %v1860, %v1860
      %v1863 = vcombine.high %v1702, %v1702
      %v1865 = vunpack.c.l.s4 1983009808
      %v1866 = vunpack.c.0.s8 %v1865
      %v1867 = vlaneseq
      %v1868 = vshrl.u32 %v1867, 7
      %v1869 = vsub.s32 %v1866, %v1868
      %v1870 = vrot.slane %v1702, %v1869
      %v1872 = vunpack.c.l.s4 1983009808
      %v1873 = vunpack.c.0.s8 %v1872
      %v1874 = vlaneseq
      %v1875 = vshrl.u32 %v1874, 7
      %v1876 = vsub.s32 %v1873, %v1875
      %v1877 = vrot.slane %v1863, %v1876
      %v1878 = vcombine.high %v1870, %v1870
      %v1879 = vcombine.high %v1877, %v1877
      %v1880 = vcombine.high %v1703, %v1703
      %v1882 = vunpack.c.l.s4 1983009808
      %v1883 = vunpack.c.0.s8 %v1882
      %v1884 = vlaneseq
      %v1885 = vshrl.u32 %v1884, 7
      %v1886 = vsub.s32 %v1883, %v1885
      %v1887 = vrot.slane %v1703, %v1886
      %v1889 = vunpack.c.l.s4 1983009808
      %v1890 = vunpack.c.0.s8 %v1889
      %v1891 = vlaneseq
      %v1892 = vshrl.u32 %v1891, 7
      %v1893 = vsub.s32 %v1890, %v1892
      %v1894 = vrot.slane %v1880, %v1893
      %v1895 = vcombine.high %v1887, %v1887
      %v1896 = vcombine.high %v1894, %v1894
      %v1897 = vcombine.high %v1704, %v1704
      %v1899 = vunpack.c.l.s4 1983009808
      %v1900 = vunpack.c.0.s8 %v1899
      %v1901 = vlaneseq
      %v1902 = vshrl.u32 %v1901, 7
      %v1903 = vsub.s32 %v1900, %v1902
      %v1904 = vrot.slane %v1704, %v1903
      %v1906 = vunpack.c.l.s4 1983009808
      %v1907 = vunpack.c.0.s8 %v1906
      %v1908 = vlaneseq
      %v1909 = vshrl.u32 %v1908, 7
      %v1910 = vsub.s32 %v1907, %v1909
      %v1911 = vrot.slane %v1897, %v1910
      %v1912 = vcombine.high %v1904, %v1904
      %v1913 = vcombine.high %v1911, %v1911
      %v1914 = vcombine.high %v1705, %v1705
      %v1916 = vunpack.c.l.s4 1983009808
      %v1917 = vunpack.c.0.s8 %v1916
      %v1918 = vlaneseq
      %v1919 = vshrl.u32 %v1918, 7
      %v1920 = vsub.s32 %v1917, %v1919
      %v1921 = vrot.slane %v1705, %v1920
      %v1923 = vunpack.c.l.s4 1983009808
      %v1924 = vunpack.c.0.s8 %v1923
      %v1925 = vlaneseq
      %v1926 = vshrl.u32 %v1925, 7
      %v1927 = vsub.s32 %v1924, %v1926
      %v1928 = vrot.slane %v1914, %v1927
      %v1929 = vcombine.high %v1921, %v1921
      %v1930 = vcombine.high %v1928, %v1928
      %v1931 = vcombine.high %v1706, %v1706
      %v1933 = vunpack.c.l.s4 1983009808
      %v1934 = vunpack.c.0.s8 %v1933
      %v1935 = vlaneseq
      %v1936 = vshrl.u32 %v1935, 7
      %v1937 = vsub.s32 %v1934, %v1936
      %v1938 = vrot.slane %v1706, %v1937
      %v1940 = vunpack.c.l.s4 1983009808
      %v1941 = vunpack.c.0.s8 %v1940
      %v1942 = vlaneseq
      %v1943 = vshrl.u32 %v1942, 7
      %v1944 = vsub.s32 %v1941, %v1943
      %v1945 = vrot.slane %v1931, %v1944
      %v1946 = vcombine.high %v1938, %v1938
      %v1947 = vcombine.high %v1945, %v1945
      %v1948 = vcombine.high %v1707, %v1707
      %v1950 = vunpack.c.l.s4 1983009808
      %v1951 = vunpack.c.0.s8 %v1950
      %v1952 = vlaneseq
      %v1953 = vshrl.u32 %v1952, 7
      %v1954 = vsub.s32 %v1951, %v1953
      %v1955 = vrot.slane %v1707, %v1954
      %v1957 = vunpack.c.l.s4 1983009808
      %v1958 = vunpack.c.0.s8 %v1957
      %v1959 = vlaneseq
      %v1960 = vshrl.u32 %v1959, 7
      %v1961 = vsub.s32 %v1958, %v1960
      %v1962 = vrot.slane %v1948, %v1961
      %v1963 = vcombine.high %v1955, %v1955
      %v1964 = vcombine.high %v1962, %v1962
      %v1965 = vcombine.high %v1708, %v1708
      %v1967 = vunpack.c.l.s4 1983009808
      %v1968 = vunpack.c.0.s8 %v1967
      %v1969 = vlaneseq
      %v1970 = vshrl.u32 %v1969, 7
      %v1971 = vsub.s32 %v1968, %v1970
      %v1972 = vrot.slane %v1708, %v1971
      %v1974 = vunpack.c.l.s4 1983009808
      %v1975 = vunpack.c.0.s8 %v1974
      %v1976 = vlaneseq
      %v1977 = vshrl.u32 %v1976, 7
      %v1978 = vsub.s32 %v1975, %v1977
      %v1979 = vrot.slane %v1965, %v1978
      %v1980 = vcombine.high %v1972, %v1972
      %v1981 = vcombine.high %v1979, %v1979
      %v1982 = vcombine.high %v1709, %v1709
      %v1984 = vunpack.c.l.s4 1983009808
      %v1985 = vunpack.c.0.s8 %v1984
      %v1986 = vlaneseq
      %v1987 = vshrl.u32 %v1986, 7
      %v1988 = vsub.s32 %v1985, %v1987
      %v1989 = vrot.slane %v1709, %v1988
      %v1991 = vunpack.c.l.s4 1983009808
      %v1992 = vunpack.c.0.s8 %v1991
      %v1993 = vlaneseq
      %v1994 = vshrl.u32 %v1993, 7
      %v1995 = vsub.s32 %v1992, %v1994
      %v1996 = vrot.slane %v1982, %v1995
      %v1997 = vcombine.high %v1989, %v1989
      %v1998 = vcombine.high %v1996, %v1996
      %v1999 = vcombine.high %v1710, %v1710
      %v2001 = vunpack.c.l.s4 1983009808
      %v2002 = vunpack.c.0.s8 %v2001
      %v2003 = vlaneseq
      %v2004 = vshrl.u32 %v2003, 7
      %v2005 = vsub.s32 %v2002, %v2004
      %v2006 = vrot.slane %v1710, %v2005
      %v2008 = vunpack.c.l.s4 1983009808
      %v2009 = vunpack.c.0.s8 %v2008
      %v2010 = vlaneseq
      %v2011 = vshrl.u32 %v2010, 7
      %v2012 = vsub.s32 %v2009, %v2011
      %v2013 = vrot.slane %v1999, %v2012
      %v2014 = vcombine.high %v2006, %v2006
      %v2015 = vcombine.high %v2013, %v2013
      %v2016 = vcombine.high %v1711, %v1711
      %v2018 = vunpack.c.l.s4 1983009808
      %v2019 = vunpack.c.0.s8 %v2018
      %v2020 = vlaneseq
      %v2021 = vshrl.u32 %v2020, 7
      %v2022 = vsub.s32 %v2019, %v2021
      %v2023 = vrot.slane %v1711, %v2022
      %v2025 = vunpack.c.l.s4 1983009808
      %v2026 = vunpack.c.0.s8 %v2025
      %v2027 = vlaneseq
      %v2028 = vshrl.u32 %v2027, 7
      %v2029 = vsub.s32 %v2026, %v2028
      %v2030 = vrot.slane %v2016, %v2029
      %v2031 = vcombine.high %v2023, %v2023
      %v2032 = vcombine.high %v2030, %v2030
      %v2033 = vcombine.high %v1712, %v1712
      %v2035 = vunpack.c.l.s4 1983009808
      %v2036 = vunpack.c.0.s8 %v2035
      %v2037 = vlaneseq
      %v2038 = vshrl.u32 %v2037, 7
      %v2039 = vsub.s32 %v2036, %v2038
      %v2040 = vrot.slane %v1712, %v2039
      %v2042 = vunpack.c.l.s4 1983009808
      %v2043 = vunpack.c.0.s8 %v2042
      %v2044 = vlaneseq
      %v2045 = vshrl.u32 %v2044, 7
      %v2046 = vsub.s32 %v2043, %v2045
      %v2047 = vrot.slane %v2033, %v2046
      %v2048 = vcombine.high %v2040, %v2040
      %v2049 = vcombine.high %v2047, %v2047
      %v2050 = vcombine.high %v1713, %v1713
      %v2052 = vunpack.c.l.s4 1983009808
      %v2053 = vunpack.c.0.s8 %v2052
      %v2054 = vlaneseq
      %v2055 = vshrl.u32 %v2054, 7
      %v2056 = vsub.s32 %v2053, %v2055
      %v2057 = vrot.slane %v1713, %v2056
      %v2059 = vunpack.c.l.s4 1983009808
      %v2060 = vunpack.c.0.s8 %v2059
      %v2061 = vlaneseq
      %v2062 = vshrl.u32 %v2061, 7
      %v2063 = vsub.s32 %v2060, %v2062
      %v2064 = vrot.slane %v2050, %v2063
      %v2065 = vcombine.high %v2057, %v2057
      %v2066 = vcombine.high %v2064, %v2064
      %v2067 = vcombine.high %v1714, %v1714
      %v2069 = vunpack.c.l.s4 1983009808
      %v2070 = vunpack.c.0.s8 %v2069
      %v2071 = vlaneseq
      %v2072 = vshrl.u32 %v2071, 7
      %v2073 = vsub.s32 %v2070, %v2072
      %v2074 = vrot.slane %v1714, %v2073
      %v2076 = vunpack.c.l.s4 1983009808
      %v2077 = vunpack.c.0.s8 %v2076
      %v2078 = vlaneseq
      %v2079 = vshrl.u32 %v2078, 7
      %v2080 = vsub.s32 %v2077, %v2079
      %v2081 = vrot.slane %v2067, %v2080
      %v2082 = vcombine.high %v2074, %v2074
      %v2083 = vcombine.high %v2081, %v2081
      %v2148 = vrot.slane %v1819, 7
      %v2149 = vrot.slane %v2148, 2
      %v2150 = vrot.slane %v1827, 7
      %v2151 = vrot.slane %v2150, 2
      %v2152 = vrot.slane %v1826, 7
      %v2153 = vrot.slane %v2152, 2
      %v2154 = vrot.slane %v1828, 7
      %v2155 = vrot.slane %v2154, 2
      %v2156 = vrot.slane %v1836, 7
      %v2157 = vrot.slane %v2156, 2
      %v2158 = vrot.slane %v1844, 7
      %v2159 = vrot.slane %v2158, 2
      %v2160 = vrot.slane %v1843, 7
      %v2161 = vrot.slane %v2160, 2
      %v2162 = vrot.slane %v1845, 7
      %v2163 = vrot.slane %v2162, 2
      %v2164 = vrot.slane %v1853, 7
      %v2165 = vrot.slane %v2164, 2
      %v2166 = vrot.slane %v1861, 7
      %v2167 = vrot.slane %v2166, 2
      %v2168 = vrot.slane %v1860, 7
      %v2169 = vrot.slane %v2168, 2
      %v2170 = vrot.slane %v1862, 7
      %v2171 = vrot.slane %v2170, 2
      %v2172 = vrot.slane %v1870, 7
      %v2173 = vrot.slane %v2172, 2
      %v2174 = vrot.slane %v1878, 7
      %v2175 = vrot.slane %v2174, 2
      %v2176 = vrot.slane %v1877, 7
      %v2177 = vrot.slane %v2176, 2
      %v2178 = vrot.slane %v1879, 7
      %v2179 = vrot.slane %v2178, 2
      %v2180 = vrot.slane %v1887, 7
      %v2181 = vrot.slane %v2180, 2
      %v2182 = vrot.slane %v1895, 7
      %v2183 = vrot.slane %v2182, 2
      %v2184 = vrot.slane %v1894, 7
      %v2185 = vrot.slane %v2184, 2
      %v2186 = vrot.slane %v1896, 7
      %v2187 = vrot.slane %v2186, 2
      %v2188 = vrot.slane %v1904, 7
      %v2189 = vrot.slane %v2188, 2
      %v2190 = vrot.slane %v1912, 7
      %v2191 = vrot.slane %v2190, 2
      %v2192 = vrot.slane %v1911, 7
      %v2193 = vrot.slane %v2192, 2
      %v2194 = vrot.slane %v1913, 7
      %v2195 = vrot.slane %v2194, 2
      %v2196 = vrot.slane %v1921, 7
      %v2197 = vrot.slane %v2196, 2
      %v2198 = vrot.slane %v1929, 7
      %v2199 = vrot.slane %v2198, 2
      %v2200 = vrot.slane %v1928, 7
      %v2201 = vrot.slane %v2200, 2
      %v2202 = vrot.slane %v1930, 7
      %v2203 = vrot.slane %v2202, 2
      %v2204 = vrot.slane %v1938, 7
      %v2205 = vrot.slane %v2204, 2
      %v2206 = vrot.slane %v1946, 7
      %v2207 = vrot.slane %v2206, 2
      %v2208 = vrot.slane %v1945, 7
      %v2209 = vrot.slane %v2208, 2
      %v2210 = vrot.slane %v1947, 7
      %v2211 = vrot.slane %v2210, 2
      %v2212 = vrot.slane %v1955, 7
      %v2213 = vrot.slane %v2212, 2
      %v2214 = vrot.slane %v1963, 7
      %v2215 = vrot.slane %v2214, 2
      %v2216 = vrot.slane %v1962, 7
      %v2217 = vrot.slane %v2216, 2
      %v2218 = vrot.slane %v1964, 7
      %v2219 = vrot.slane %v2218, 2
      %v2220 = vrot.slane %v1972, 7
      %v2221 = vrot.slane %v2220, 2
      %v2222 = vrot.slane %v1980, 7
      %v2223 = vrot.slane %v2222, 2
      %v2224 = vrot.slane %v1979, 7
      %v2225 = vrot.slane %v2224, 2
      %v2226 = vrot.slane %v1981, 7
      %v2227 = vrot.slane %v2226, 2
      %v2228 = vrot.slane %v1989, 7
      %v2229 = vrot.slane %v2228, 2
      %v2230 = vrot.slane %v1997, 7
      %v2231 = vrot.slane %v2230, 2
      %v2232 = vrot.slane %v1996, 7
      %v2233 = vrot.slane %v2232, 2
      %v2234 = vrot.slane %v1998, 7
      %v2235 = vrot.slane %v2234, 2
      %v2236 = vrot.slane %v2006, 7
      %v2237 = vrot.slane %v2236, 2
      %v2238 = vrot.slane %v2014, 7
      %v2239 = vrot.slane %v2238, 2
      %v2240 = vrot.slane %v2013, 7
      %v2241 = vrot.slane %v2240, 2
      %v2242 = vrot.slane %v2015, 7
      %v2243 = vrot.slane %v2242, 2
      %v2244 = vrot.slane %v2023, 7
      %v2245 = vrot.slane %v2244, 2
      %v2246 = vrot.slane %v2031, 7
      %v2247 = vrot.slane %v2246, 2
      %v2248 = vrot.slane %v2030, 7
      %v2249 = vrot.slane %v2248, 2
      %v2250 = vrot.slane %v2032, 7
      %v2251 = vrot.slane %v2250, 2
      %v2252 = vrot.slane %v2040, 7
      %v2253 = vrot.slane %v2252, 2
      %v2254 = vrot.slane %v2048, 7
      %v2255 = vrot.slane %v2254, 2
      %v2256 = vrot.slane %v2047, 7
      %v2257 = vrot.slane %v2256, 2
      %v2258 = vrot.slane %v2049, 7
      %v2259 = vrot.slane %v2258, 2
      %v2260 = vrot.slane %v2057, 7
      %v2261 = vrot.slane %v2260, 2
      %v2262 = vrot.slane %v2065, 7
      %v2263 = vrot.slane %v2262, 2
      %v2264 = vrot.slane %v2064, 7
      %v2265 = vrot.slane %v2264, 2
      %v2266 = vrot.slane %v2066, 7
      %v2267 = vrot.slane %v2266, 2
      %v2268 = vrot.slane %v2074, 7
      %v2269 = vrot.slane %v2268, 2
      %v2270 = vrot.slane %v2082, 7
      %v2271 = vrot.slane %v2270, 2
      %v2272 = vrot.slane %v2081, 7
      %v2273 = vrot.slane %v2272, 2
      %v2274 = vrot.slane %v2083, 7
      %v2275 = vrot.slane %v2274, 2
      %v2340 = vmax.f32 %v1819, %v2149
      %v2341 = vmax.f32 %v1827, %v2151
      %v2342 = vmax.f32 %v1826, %v2153
      %v2343 = vmax.f32 %v1828, %v2155
      %v2344 = vmax.f32 %v1836, %v2157
      %v2345 = vmax.f32 %v1844, %v2159
      %v2346 = vmax.f32 %v1843, %v2161
      %v2347 = vmax.f32 %v1845, %v2163
      %v2348 = vmax.f32 %v1853, %v2165
      %v2349 = vmax.f32 %v1861, %v2167
      %v2350 = vmax.f32 %v1860, %v2169
      %v2351 = vmax.f32 %v1862, %v2171
      %v2352 = vmax.f32 %v1870, %v2173
      %v2353 = vmax.f32 %v1878, %v2175
      %v2354 = vmax.f32 %v1877, %v2177
      %v2355 = vmax.f32 %v1879, %v2179
      %v2356 = vmax.f32 %v1887, %v2181
      %v2357 = vmax.f32 %v1895, %v2183
      %v2358 = vmax.f32 %v1894, %v2185
      %v2359 = vmax.f32 %v1896, %v2187
      %v2360 = vmax.f32 %v1904, %v2189
      %v2361 = vmax.f32 %v1912, %v2191
      %v2362 = vmax.f32 %v1911, %v2193
      %v2363 = vmax.f32 %v1913, %v2195
      %v2364 = vmax.f32 %v1921, %v2197
      %v2365 = vmax.f32 %v1929, %v2199
      %v2366 = vmax.f32 %v1928, %v2201
      %v2367 = vmax.f32 %v1930, %v2203
      %v2368 = vmax.f32 %v1938, %v2205
      %v2369 = vmax.f32 %v1946, %v2207
      %v2370 = vmax.f32 %v1945, %v2209
      %v2371 = vmax.f32 %v1947, %v2211
      %v2372 = vmax.f32 %v1955, %v2213
      %v2373 = vmax.f32 %v1963, %v2215
      %v2374 = vmax.f32 %v1962, %v2217
      %v2375 = vmax.f32 %v1964, %v2219
      %v2376 = vmax.f32 %v1972, %v2221
      %v2377 = vmax.f32 %v1980, %v2223
      %v2378 = vmax.f32 %v1979, %v2225
      %v2379 = vmax.f32 %v1981, %v2227
      %v2380 = vmax.f32 %v1989, %v2229
      %v2381 = vmax.f32 %v1997, %v2231
      %v2382 = vmax.f32 %v1996, %v2233
      %v2383 = vmax.f32 %v1998, %v2235
      %v2384 = vmax.f32 %v2006, %v2237
      %v2385 = vmax.f32 %v2014, %v2239
      %v2386 = vmax.f32 %v2013, %v2241
      %v2387 = vmax.f32 %v2015, %v2243
      %v2388 = vmax.f32 %v2023, %v2245
      %v2389 = vmax.f32 %v2031, %v2247
      %v2390 = vmax.f32 %v2030, %v2249
      %v2391 = vmax.f32 %v2032, %v2251
      %v2392 = vmax.f32 %v2040, %v2253
      %v2393 = vmax.f32 %v2048, %v2255
      %v2394 = vmax.f32 %v2047, %v2257
      %v2395 = vmax.f32 %v2049, %v2259
      %v2396 = vmax.f32 %v2057, %v2261
      %v2397 = vmax.f32 %v2065, %v2263
      %v2398 = vmax.f32 %v2064, %v2265
      %v2399 = vmax.f32 %v2066, %v2267
      %v2400 = vmax.f32 %v2074, %v2269
      %v2401 = vmax.f32 %v2082, %v2271
      %v2402 = vmax.f32 %v2081, %v2273
      %v2403 = vmax.f32 %v2083, %v2275
      %v2404 = vmax.f32 %v2340, %v2348
      %v2405 = vmax.f32 %v2341, %v2349
      %v2406 = vmax.f32 %v2342, %v2350
      %v2407 = vmax.f32 %v2343, %v2351
      %v2408 = vmax.f32 %v2344, %v2352
      %v2409 = vmax.f32 %v2345, %v2353
      %v2410 = vmax.f32 %v2346, %v2354
      %v2411 = vmax.f32 %v2347, %v2355
      %v2412 = vmax.f32 %v2356, %v2364
      %v2413 = vmax.f32 %v2357, %v2365
      %v2414 = vmax.f32 %v2358, %v2366
      %v2415 = vmax.f32 %v2359, %v2367
      %v2416 = vmax.f32 %v2360, %v2368
      %v2417 = vmax.f32 %v2361, %v2369
      %v2418 = vmax.f32 %v2362, %v2370
      %v2419 = vmax.f32 %v2363, %v2371
      %v2420 = vmax.f32 %v2372, %v2380
      %v2421 = vmax.f32 %v2373, %v2381
      %v2422 = vmax.f32 %v2374, %v2382
      %v2423 = vmax.f32 %v2375, %v2383
      %v2424 = vmax.f32 %v2376, %v2384
      %v2425 = vmax.f32 %v2377, %v2385
      %v2426 = vmax.f32 %v2378, %v2386
      %v2427 = vmax.f32 %v2379, %v2387
      %v2428 = vmax.f32 %v2388, %v2396
      %v2429 = vmax.f32 %v2389, %v2397
      %v2430 = vmax.f32 %v2390, %v2398
      %v2431 = vmax.f32 %v2391, %v2399
      %v2432 = vmax.f32 %v2392, %v2400
      %v2433 = vmax.f32 %v2393, %v2401
      %v2434 = vmax.f32 %v2394, %v2402
      %v2435 = vmax.f32 %v2395, %v2403
      %v2436 = vpack.c.bf16 %v2404, %v2404
      %v2437 = vpack.c.bf16 %v2405, %v2405
      %v2438 = vpack.c.bf16 %v2406, %v2406
      %v2439 = vpack.c.bf16 %v2407, %v2407
      %v2440 = vpack.c.bf16 %v2408, %v2408
      %v2441 = vpack.c.bf16 %v2409, %v2409
      %v2442 = vpack.c.bf16 %v2410, %v2410
      %v2443 = vpack.c.bf16 %v2411, %v2411
      %v2444 = vpack.c.bf16 %v2412, %v2412
      %v2445 = vpack.c.bf16 %v2413, %v2413
      %v2446 = vpack.c.bf16 %v2414, %v2414
      %v2447 = vpack.c.bf16 %v2415, %v2415
      %v2448 = vpack.c.bf16 %v2416, %v2416
      %v2449 = vpack.c.bf16 %v2417, %v2417
      %v2450 = vpack.c.bf16 %v2418, %v2418
      %v2451 = vpack.c.bf16 %v2419, %v2419
      %v2452 = vpack.c.bf16 %v2420, %v2420
      %v2453 = vpack.c.bf16 %v2421, %v2421
      %v2454 = vpack.c.bf16 %v2422, %v2422
      %v2455 = vpack.c.bf16 %v2423, %v2423
      %v2456 = vpack.c.bf16 %v2424, %v2424
      %v2457 = vpack.c.bf16 %v2425, %v2425
      %v2458 = vpack.c.bf16 %v2426, %v2426
      %v2459 = vpack.c.bf16 %v2427, %v2427
      %v2460 = vpack.c.bf16 %v2428, %v2428
      %v2461 = vpack.c.bf16 %v2429, %v2429
      %v2462 = vpack.c.bf16 %v2430, %v2430
      %v2463 = vpack.c.bf16 %v2431, %v2431
      %v2464 = vpack.c.bf16 %v2432, %v2432
      %v2465 = vpack.c.bf16 %v2433, %v2433
      %v2466 = vpack.c.bf16 %v2434, %v2434
      %v2467 = vpack.c.bf16 %v2435, %v2435
      %v2500 = vunpack.c.l.b16 %v2436
      %v2501 = vunpack.c.l.b16 %v2437
      %v2502 = vunpack.c.l.b16 %v2438
      %v2503 = vunpack.c.l.b16 %v2439
      %v2504 = vunpack.c.l.b16 %v2440
      %v2505 = vunpack.c.l.b16 %v2441
      %v2506 = vunpack.c.l.b16 %v2442
      %v2507 = vunpack.c.l.b16 %v2443
      %v2508 = vunpack.c.l.b16 %v2444
      %v2509 = vunpack.c.l.b16 %v2445
      %v2510 = vunpack.c.l.b16 %v2446
      %v2511 = vunpack.c.l.b16 %v2447
      %v2512 = vunpack.c.l.b16 %v2448
      %v2513 = vunpack.c.l.b16 %v2449
      %v2514 = vunpack.c.l.b16 %v2450
      %v2515 = vunpack.c.l.b16 %v2451
      %v2516 = vunpack.c.l.b16 %v2452
      %v2517 = vunpack.c.l.b16 %v2453
      %v2518 = vunpack.c.l.b16 %v2454
      %v2519 = vunpack.c.l.b16 %v2455
      %v2520 = vunpack.c.l.b16 %v2456
      %v2521 = vunpack.c.l.b16 %v2457
      %v2522 = vunpack.c.l.b16 %v2458
      %v2523 = vunpack.c.l.b16 %v2459
      %v2524 = vunpack.c.l.b16 %v2460
      %v2525 = vunpack.c.l.b16 %v2461
      %v2526 = vunpack.c.l.b16 %v2462
      %v2527 = vunpack.c.l.b16 %v2463
      %v2528 = vunpack.c.l.b16 %v2464
      %v2529 = vunpack.c.l.b16 %v2465
      %v2530 = vunpack.c.l.b16 %v2466
      %v2531 = vunpack.c.l.b16 %v2467
      %v2532 = vpack.c.b16 %v2500, %v2500
      %v2533 = vpack.c.b16 %v2501, %v2501
      %v2534 = vpack.c.b16 %v2502, %v2502
      %v2535 = vpack.c.b16 %v2503, %v2503
      %v2536 = vpack.c.b16 %v2504, %v2504
      %v2537 = vpack.c.b16 %v2505, %v2505
      %v2538 = vpack.c.b16 %v2506, %v2506
      %v2539 = vpack.c.b16 %v2507, %v2507
      %v2540 = vpack.c.b16 %v2508, %v2508
      %v2541 = vpack.c.b16 %v2509, %v2509
      %v2542 = vpack.c.b16 %v2510, %v2510
      %v2543 = vpack.c.b16 %v2511, %v2511
      %v2544 = vpack.c.b16 %v2512, %v2512
      %v2545 = vpack.c.b16 %v2513, %v2513
      %v2546 = vpack.c.b16 %v2514, %v2514
      %v2547 = vpack.c.b16 %v2515, %v2515
      %v2548 = vpack.c.b16 %v2516, %v2516
      %v2549 = vpack.c.b16 %v2517, %v2517
      %v2550 = vpack.c.b16 %v2518, %v2518
      %v2551 = vpack.c.b16 %v2519, %v2519
      %v2552 = vpack.c.b16 %v2520, %v2520
      %v2553 = vpack.c.b16 %v2521, %v2521
      %v2554 = vpack.c.b16 %v2522, %v2522
      %v2555 = vpack.c.b16 %v2523, %v2523
      %v2556 = vpack.c.b16 %v2524, %v2524
      %v2557 = vpack.c.b16 %v2525, %v2525
      %v2558 = vpack.c.b16 %v2526, %v2526
      %v2559 = vpack.c.b16 %v2527, %v2527
      %v2560 = vpack.c.b16 %v2528, %v2528
      %v2561 = vpack.c.b16 %v2529, %v2529
      %v2562 = vpack.c.b16 %v2530, %v2530
      %v2563 = vpack.c.b16 %v2531, %v2531
      %v2564 = vunpack.c.l.b16 %v2532
      %v2565 = vunpack.c.l.b16 %v2533
      %v2566 = vunpack.c.l.b16 %v2534
      %v2567 = vunpack.c.l.b16 %v2535
      %v2568 = vunpack.c.l.b16 %v2536
      %v2569 = vunpack.c.l.b16 %v2537
      %v2570 = vunpack.c.l.b16 %v2538
      %v2571 = vunpack.c.l.b16 %v2539
      %v2572 = vunpack.c.l.b16 %v2540
      %v2573 = vunpack.c.l.b16 %v2541
      %v2574 = vunpack.c.l.b16 %v2542
      %v2575 = vunpack.c.l.b16 %v2543
      %v2576 = vunpack.c.l.b16 %v2544
      %v2577 = vunpack.c.l.b16 %v2545
      %v2578 = vunpack.c.l.b16 %v2546
      %v2579 = vunpack.c.l.b16 %v2547
      %v2580 = vunpack.c.l.b16 %v2548
      %v2581 = vunpack.c.l.b16 %v2549
      %v2582 = vunpack.c.l.b16 %v2550
      %v2583 = vunpack.c.l.b16 %v2551
      %v2584 = vunpack.c.l.b16 %v2552
      %v2585 = vunpack.c.l.b16 %v2553
      %v2586 = vunpack.c.l.b16 %v2554
      %v2587 = vunpack.c.l.b16 %v2555
      %v2588 = vunpack.c.l.b16 %v2556
      %v2589 = vunpack.c.l.b16 %v2557
      %v2590 = vunpack.c.l.b16 %v2558
      %v2591 = vunpack.c.l.b16 %v2559
      %v2592 = vunpack.c.l.b16 %v2560
      %v2593 = vunpack.c.l.b16 %v2561
      %v2594 = vunpack.c.l.b16 %v2562
      %v2595 = vunpack.c.l.b16 %v2563
      %v2596 = vrot.slane %v2565, 7
      %vm2597 = vcmask 1041409
      %v2598 = vsel %vm2597, %v2596, %v2564
      %v2599 = vrot.slane %v2566, 6
      %vm2600 = vcmask 1042434
      %v2601 = vsel %vm2600, %v2599, %v2598
      %v2602 = vrot.slane %v2567, 5
      %vm2603 = vcmask 1043459
      %v2604 = vsel %vm2603, %v2602, %v2601
      %v2605 = vrot.slane %v2568, 4
      %vm2606 = vcmask 1044484
      %v2607 = vsel %vm2606, %v2605, %v2604
      %v2608 = vrot.slane %v2569, 3
      %vm2609 = vcmask 1045509
      %v2610 = vsel %vm2609, %v2608, %v2607
      %v2611 = vrot.slane %v2570, 2
      %vm2612 = vcmask 1046534
      %v2613 = vsel %vm2612, %v2611, %v2610
      %v2614 = vrot.slane %v2571, 1
      %vm2615 = vcmask 1047559
      %v2616 = vsel %vm2615, %v2614, %v2613
      %v2617 = vrot.slane %v2573, 7
      %v2618 = vsel %vm2597, %v2617, %v2572
      %v2619 = vrot.slane %v2574, 6
      %v2620 = vsel %vm2600, %v2619, %v2618
      %v2621 = vrot.slane %v2575, 5
      %v2622 = vsel %vm2603, %v2621, %v2620
      %v2623 = vrot.slane %v2576, 4
      %v2624 = vsel %vm2606, %v2623, %v2622
      %v2625 = vrot.slane %v2577, 3
      %v2626 = vsel %vm2609, %v2625, %v2624
      %v2627 = vrot.slane %v2578, 2
      %v2628 = vsel %vm2612, %v2627, %v2626
      %v2629 = vrot.slane %v2579, 1
      %v2630 = vsel %vm2615, %v2629, %v2628
      %v2631 = vrot.slane %v2581, 7
      %v2632 = vsel %vm2597, %v2631, %v2580
      %v2633 = vrot.slane %v2582, 6
      %v2634 = vsel %vm2600, %v2633, %v2632
      %v2635 = vrot.slane %v2583, 5
      %v2636 = vsel %vm2603, %v2635, %v2634
      %v2637 = vrot.slane %v2584, 4
      %v2638 = vsel %vm2606, %v2637, %v2636
      %v2639 = vrot.slane %v2585, 3
      %v2640 = vsel %vm2609, %v2639, %v2638
      %v2641 = vrot.slane %v2586, 2
      %v2642 = vsel %vm2612, %v2641, %v2640
      %v2643 = vrot.slane %v2587, 1
      %v2644 = vsel %vm2615, %v2643, %v2642
      %v2645 = vrot.slane %v2589, 7
      %v2646 = vsel %vm2597, %v2645, %v2588
      %v2647 = vrot.slane %v2590, 6
      %v2648 = vsel %vm2600, %v2647, %v2646
      %v2649 = vrot.slane %v2591, 5
      %v2650 = vsel %vm2603, %v2649, %v2648
      %v2651 = vrot.slane %v2592, 4
      %v2652 = vsel %vm2606, %v2651, %v2650
      %v2653 = vrot.slane %v2593, 3
      %v2654 = vsel %vm2609, %v2653, %v2652
      %v2655 = vrot.slane %v2594, 2
      %v2656 = vsel %vm2612, %v2655, %v2654
      %v2657 = vrot.slane %v2595, 1
      %v2658 = vsel %vm2615, %v2657, %v2656
      %v2659 = vpack.c.b16 %v2616, %v2616
      %v2660 = vpack.c.b16 %v2630, %v2630
      %v2661 = vpack.c.b16 %v2644, %v2644
      %v2662 = vpack.c.b16 %v2658, %v2658
      %2667 = vst.msk [vmem:[%s245] sm:$0xf] %vm1779, %v2659
      %2668 = vst.msk [vmem:[%s245 + $0x4] sm:$0xf] %vm1779, %v2660
      %2669 = vst.msk [vmem:[%s245 + $0x8] sm:$0xf] %vm1779, %v2661
      %2670 = vst.msk [vmem:[%s245 + $0xc] sm:$0xf] %vm1779, %v2662
      %s2671 = smul.u32 8, %s21
      %p2672 = scmp.lt.s32.totalorder %s20, 1
      %s2673 = scalar_select %p2672, %s20, 1
      %p2674 = scmp.lt.s32.totalorder %s2671, 15
      %s2675 = scalar_select %p2674, %s2671, 15
      %s2676 = smul.addr %s2675, 2
      %s2677 = smul.addr %s2673, 32
      %s2678 = sadd.s32 %s2676, %s2677
      %s2679 = smul.addr %s2678, 4
      %s2680 = scalar_lea.vmem %s3, %s2679
      %s2681 = smul.u32 4, %s21
      %p2682 = scmp.lt.s32.totalorder %s20, 1
      %s2683 = scalar_select %p2682, %s20, 1
      %p2684 = scmp.lt.s32.totalorder %s2681, 7
      %s2685 = scalar_select %p2684, %s2681, 7
      %s2686 = smul.addr %s2683, 8
      %s2687 = sadd.s32 %s2685, %s2686
      %s2688 = smul.addr %s2687, 4
      %s2689 = scalar_lea.vmem %s4, %s2688
      // Predicated region
      $region33: #{vgg16_feature_extractor.5} parent=31 // pred_check
        %p2690 = pneg %p116
      $region34: #{vgg16_feature_extractor.5} parent=31 // pred_check_branch
        %2692 = sbr.rel (%p2690) target = $region36
      $region35: #{vgg16_feature_extractor.5} parent=31 // pred_region
        %s2693 = smul.u32 8, %s21
      $region36: #{vgg16_feature_extractor.5} parent=31 // pred_fallthru
        _
      // Predicated region
      $region37: #{vgg16_feature_extractor.5} parent=31 // pred_check
        %p2694 = pneg %p144
      $region38: #{vgg16_feature_extractor.5} parent=31 // pred_check_branch
        %2696 = sbr.rel (%p2694) target = $region40
      $region39: #{vgg16_feature_extractor.5} parent=31 // pred_region
        %s2697 = smul.u32 4, %s21
      $region40: #{vgg16_feature_extractor.5} parent=31 // pred_fallthru
        _
    $region32: #{vgg16_feature_extractor.5} parent=5 // pred_fallthru
      _
    %p2698 = scmp.le.s32.totalorder 2, %s11
    // Predicated region
    $region41: #{vgg16_feature_extractor.5} parent=5 // pred_check
      %p2699 = pneg %p2698
    $region42: #{vgg16_feature_extractor.5} parent=5 // pred_check_branch
      %2701 = sbr.rel (%p2699) target = $region44
    $region43: #{vgg16_feature_extractor.5} parent=5 // pred_region
      %s2702 = ssub.s32 %s11, 2
      // Predicated region
      $region45: #{vgg16_feature_extractor.5} parent=43 // pred_check
        %p2703 = pneg %p122
      $region46: #{vgg16_feature_extractor.5} parent=43 // pred_check_branch
        %2705 = sbr.rel (%p2703) target = $region48
      $region47: #{vgg16_feature_extractor.5} parent=43 // pred_region
        %s2706 = smul.u32 8, %s23
        %p2707 = scmp.lt.s32.totalorder %s22, 1
        %s2708 = scalar_select %p2707, %s22, 1
        %p2709 = scmp.lt.s32.totalorder %s2706, 15
        %s2710 = scalar_select %p2709, %s2706, 15
        %s2711 = smul.addr %s2710, 2
        %s2712 = smul.addr %s2708, 32
        %s2713 = sadd.s32 %s2711, %s2712
        %s2714 = smul.addr %s2713, 4
        %s2715 = scalar_lea.vmem %s3, %s2714
      $region48: #{vgg16_feature_extractor.5} parent=43 // pred_fallthru
        _
      // Predicated region
      $region49: #{vgg16_feature_extractor.5} parent=43 // pred_check
        %p2716 = pneg %p150
      $region50: #{vgg16_feature_extractor.5} parent=43 // pred_check_branch
        %2718 = sbr.rel (%p2716) target = $region52
      $region51: #{vgg16_feature_extractor.5} parent=43 // pred_region
        %s2719 = smul.u32 4, %s23
        %p2720 = scmp.lt.s32.totalorder %s22, 1
        %s2721 = scalar_select %p2720, %s22, 1
        %p2722 = scmp.lt.s32.totalorder %s2719, 7
        %s2723 = scalar_select %p2722, %s2719, 7
        %s2724 = smul.addr %s2721, 8
        %s2725 = sadd.s32 %s2723, %s2724
        %s2726 = smul.addr %s2725, 4
        %s2727 = scalar_lea.vmem %s4, %s2726
      $region52: #{vgg16_feature_extractor.5} parent=43 // pred_fallthru
        _
    $region44: #{vgg16_feature_extractor.5} parent=5 // pred_fallthru
      _
  $region6: #{vgg16_feature_extractor.5} parent=0 // loop_footer
    %s15 = sadd.s32 1, %s11
  $region7: #{vgg16_feature_extractor.5} parent=0 // loop_footer_branch
    %10 = sbr.rel target = $region3
  $region8: #{vgg16_feature_extractor.5} parent=0 // loop_exit
    _

// kernel: vgg16_feature_extractor.7
$region0: #{vgg16_feature_extractor.7}
  #allocation0 [shape = 'u32[]', space=smem, size = 0x4, offset = 0x4, fixed_abs, tag = 'smem constant byte address 0x4 - core index']
  #allocation1 [shape = 'u32[144,128]{1,0:T(1,128)}', space=vmem, size = 0x12000, scoped, tag = 'internal scratch']
  %s0 = inlined_call_operand.vmem [shape: bf16[2,10,10,128], index: 0, kind: input, shape index: {}]
  %s1 = inlined_call_operand.vmem [shape: bf16[3,384,128], index: 1, kind: input, shape index: {}]
  %s2 = inlined_call_operand.vmem [shape: f32[1,128], index: 2, kind: input, shape index: {}]
  %s3 = inlined_call_operand.vmem [shape: bf16[2,8,8,128], index: 3, kind: output, shape index: {}]
  %s4 = sld [smem:[#allocation0]]
  $region45: #{vgg16_feature_extractor.7} parent=0
    _
  %s6 = ssub.s32 1, %s4
  %s7 = scalar_select 0, %s6, %s4
  loop: start=0, step=1, limit=6
  $region2: #{vgg16_feature_extractor.7} parent=0 // loop_pre_header
    _
  $region3: #{vgg16_feature_extractor.7} parent=0 // loop_header
    %s9 = sphi 0, %s13
    %p10 = scmp.ge.s32.totalorder %s9, 6
    %s16 = sphi 0, %s28
    %s17 = sphi 0, %s24
    %s18 = sphi 0, %s16
    %s19 = sphi 0, %s17
    %s20 = sphi 0, %s18
    %s21 = sphi 0, %s19
    %s31 = sphi 0, %s33
    %s34 = sphi 0, %s31
    %s35 = sphi 0, %s34
    %s51 = sphi 0, %s35
    %s55 = sphi 0, %s55
    %s57 = sphi 0, %s55
    %s58 = sphi 0, %s57
    %s72 = sphi 0, %s58
    %s76 = sphi 0, %s76
    %s78 = sphi 0, %s76
    %s79 = sphi 0, %s78
    %s93 = sphi 0, %s79
    %s101 = sphi 0, %s103
    %s104 = sphi 0, %s101
    %s105 = sphi 0, %s104
    %s121 = sphi 0, %s105
  $region4: #{vgg16_feature_extractor.7} parent=0 // loop_header_branch
    %12 = sbr.rel (%p10) target = $region8
  $region5: #{vgg16_feature_extractor.7} parent=0 // loop_body
    %s14 = ssub.s32 %s9, 1
    %s15 = ssub.s32 %s9, 2
    %s22 = sadd.s32 1, %s17
    %p23 = scmp.ge.s32.totalorder %s22, 2
    %s24 = scalar_select %p23, 0, %s22
    %s25 = sadd.s32 1, %s16
    %s26 = scalar_select %p23, %s25, %s16
    %p27 = scmp.ge.s32.totalorder %s26, 2
    %s28 = scalar_select %p27, 0, %s26
    %s29 = ssub.s32 %s16, %s28
    %p30 = scmp.eq.s32.totalorder %s29, 0
    %s32 = sadd.s32 %s31, 1
    %s33 = scalar_select %p30, %s31, %s32
    %p36 = pneg %p30
    %p37 = scmp.eq.s32.totalorder %s9, 3
    %p38 = por %p36, %p37
    %p39 = scmp.ne.s32.totalorder %s31, %s34
    %p40 = scmp.eq.s32.totalorder %s9, 0
    %p41 = por %p39, %p40
    %p42 = scmp.ne.s32.totalorder %s31, %s34
    %p43 = scmp.eq.s32.totalorder %s14, 3
    %p44 = por %p42, %p43
    %p45 = scmp.ne.s32.totalorder %s34, %s35
    %p46 = scmp.eq.s32.totalorder %s14, 0
    %p47 = por %p45, %p46
    %p48 = scmp.ne.s32.totalorder %s34, %s35
    %p49 = scmp.eq.s32.totalorder %s15, 3
    %p50 = por %p48, %p49
    %p52 = scmp.ne.s32.totalorder %s35, %s51
    %p53 = scmp.eq.s32.totalorder %s15, 0
    %p54 = por %p52, %p53
    %s56 = sadd.s32 %s55, 1
    %p59 = scmp.eq.s32.totalorder %s9, 3
    %p60 = scmp.ne.s32.totalorder %s55, %s57
    %p61 = scmp.eq.s32.totalorder %s9, 0
    %p62 = por %p60, %p61
    %p63 = scmp.ne.s32.totalorder %s55, %s57
    %p64 = scmp.eq.s32.totalorder %s14, 3
    %p65 = por %p63, %p64
    %p66 = scmp.ne.s32.totalorder %s57, %s58
    %p67 = scmp.eq.s32.totalorder %s14, 0
    %p68 = por %p66, %p67
    %p69 = scmp.ne.s32.totalorder %s57, %s58
    %p70 = scmp.eq.s32.totalorder %s15, 3
    %p71 = por %p69, %p70
    %p73 = scmp.ne.s32.totalorder %s58, %s72
    %p74 = scmp.eq.s32.totalorder %s15, 0
    %p75 = por %p73, %p74
    %s77 = sadd.s32 %s76, 1
    %p80 = scmp.eq.s32.totalorder %s9, 3
    %p81 = scmp.ne.s32.totalorder %s76, %s78
    %p82 = scmp.eq.s32.totalorder %s9, 0
    %p83 = por %p81, %p82
    %p84 = scmp.ne.s32.totalorder %s76, %s78
    %p85 = scmp.eq.s32.totalorder %s14, 3
    %p86 = por %p84, %p85
    %p87 = scmp.ne.s32.totalorder %s78, %s79
    %p88 = scmp.eq.s32.totalorder %s14, 0
    %p89 = por %p87, %p88
    %p90 = scmp.ne.s32.totalorder %s78, %s79
    %p91 = scmp.eq.s32.totalorder %s15, 3
    %p92 = por %p90, %p91
    %p94 = scmp.ne.s32.totalorder %s79, %s93
    %p95 = scmp.eq.s32.totalorder %s15, 0
    %p96 = por %p94, %p95
    %s97 = ssub.s32 %s16, %s28
    %s98 = ssub.s32 %s17, %s24
    %s99 = sor.u32 %s97, %s98
    %p100 = scmp.eq.s32.totalorder %s99, 0
    %s102 = sadd.s32 %s101, 1
    %s103 = scalar_select %p100, %s101, %s102
    %p106 = pneg %p100
    %p107 = scmp.eq.s32.totalorder %s9, 3
    %p108 = por %p106, %p107
    %p109 = scmp.ne.s32.totalorder %s101, %s104
    %p110 = scmp.eq.s32.totalorder %s9, 0
    %p111 = por %p109, %p110
    %p112 = scmp.ne.s32.totalorder %s101, %s104
    %p113 = scmp.eq.s32.totalorder %s14, 3
    %p114 = por %p112, %p113
    %p115 = scmp.ne.s32.totalorder %s104, %s105
    %p116 = scmp.eq.s32.totalorder %s14, 0
    %p117 = por %p115, %p116
    %p118 = scmp.ne.s32.totalorder %s104, %s105
    %p119 = scmp.eq.s32.totalorder %s15, 3
    %p120 = por %p118, %p119
    %p122 = scmp.ne.s32.totalorder %s105, %s121
    %p123 = scmp.eq.s32.totalorder %s15, 0
    %p124 = por %p122, %p123
    %p125 = scmp.le.s32.totalorder 1, %s9
    %p126 = scmp.lt.s32.totalorder %s9, 5
    %p127 = pnand %p125, %p126
    %p128 = pneg %p127
    // Predicated region
    $region9: #{vgg16_feature_extractor.7} parent=5 // pred_check
      _
    $region10: #{vgg16_feature_extractor.7} parent=5 // pred_check_branch
      %130 = sbr.rel (%p127) target = $region12
    $region11: #{vgg16_feature_extractor.7} parent=5 // pred_region
      %s131 = ssub.s32 %s9, 1
      // Predicated region
      $region13: #{vgg16_feature_extractor.7} parent=11 // pred_check
        %p132 = pneg %p68
      $region14: #{vgg16_feature_extractor.7} parent=11 // pred_check_branch
        %134 = sbr.rel (%p132) target = $region16
      $region15: #{vgg16_feature_extractor.7} parent=11 // pred_region
        _
      $region16: #{vgg16_feature_extractor.7} parent=11 // pred_fallthru
        _
      // Predicated region
      $region17: #{vgg16_feature_extractor.7} parent=11 // pred_check
        %p135 = pneg %p89
      $region18: #{vgg16_feature_extractor.7} parent=11 // pred_check_branch
        %137 = sbr.rel (%p135) target = $region20
      $region19: #{vgg16_feature_extractor.7} parent=11 // pred_region
        _
      $region20: #{vgg16_feature_extractor.7} parent=11 // pred_fallthru
        _
    $region12: #{vgg16_feature_extractor.7} parent=5 // pred_fallthru
      _
    %p138 = scmp.lt.s32.totalorder %s9, 4
    // Predicated region
    $region21: #{vgg16_feature_extractor.7} parent=5 // pred_check
      %p139 = pneg %p138
    $region22: #{vgg16_feature_extractor.7} parent=5 // pred_check_branch
      %141 = sbr.rel (%p139) target = $region24
    $region23: #{vgg16_feature_extractor.7} parent=5 // pred_region
      // Predicated region
      $region25: #{vgg16_feature_extractor.7} parent=23 // pred_check
        %p142 = pneg %p41
      $region26: #{vgg16_feature_extractor.7} parent=23 // pred_check_branch
        %144 = sbr.rel (%p142) target = $region28
      $region27: #{vgg16_feature_extractor.7} parent=23 // pred_region
        %p145 = scmp.lt.s32.totalorder %s16, 1
        %s146 = scalar_select %p145, %s16, 1
        %s147 = smul.addr %s146, 20
        %s148 = smul.addr %s147, 4
        %s149 = scalar_lea.vmem %s0, %s148
      $region28: #{vgg16_feature_extractor.7} parent=23 // pred_fallthru
        _
    $region24: #{vgg16_feature_extractor.7} parent=5 // pred_fallthru
      _
    %p150 = scmp.le.s32.totalorder 1, %s9
    %p151 = scmp.lt.s32.totalorder %s9, 5
    %p152 = pnand %p150, %p151
    %p153 = pneg %p152
    // Predicated region
    $region29: #{vgg16_feature_extractor.7} parent=5 // pred_check
      _
    $region30: #{vgg16_feature_extractor.7} parent=5 // pred_check_branch
      %155 = sbr.rel (%p152) target = $region32
    $region31: #{vgg16_feature_extractor.7} parent=5 // pred_region
      %s156 = ssub.s32 %s9, 1
      %p157 = scmp.lt.s32.totalorder %s18, 1
      %s158 = scalar_select %p157, %s18, 1
      %s159 = smul.addr %s158, 20
      %s160 = smul.addr %s159, 4
      %s161 = scalar_lea.vmem %s0, %s160
      %p162 = pneg %p47
      %p163 = pneg %p44
      %p164 = pneg %p68
      %p165 = pneg %p65
      %p166 = pneg %p89
      %p167 = pneg %p86
      %p168 = pneg %p117
      %p169 = pneg %p114
      %s170 = smul.u32 4, %s19
      %p171 = scmp.lt.s32.totalorder %s18, 1
      %s172 = scalar_select %p171, %s18, 1
      %p173 = scmp.lt.s32.totalorder %s170, 7
      %s174 = scalar_select %p173, %s170, 7
      %s175 = smul.addr %s172, 8
      %s176 = sadd.s32 %s174, %s175
      %s177 = smul.addr %s176, 4
      %s178 = scalar_lea.vmem %s3, %s177
      %p179 = scmp.lt.s32.totalorder %s18, 1
      %s180 = scalar_select %p179, %s18, 1
      %s181 = smul.addr %s180, 20
      %s182 = smul.addr %s181, 4
      %s183 = scalar_lea.vmem %s0, %s182
      %s184 = smul.u32 4, %s19
      %p185 = scmp.lt.s32.totalorder %s18, 1
      %s186 = scalar_select %p185, %s18, 1
      %p187 = scmp.lt.s32.totalorder %s184, 7
      %s188 = scalar_select %p187, %s184, 7
      %s189 = smul.addr %s186, 8
      %s190 = sadd.s32 %s188, %s189
      %s191 = smul.addr %s190, 4
      %s192 = scalar_lea.vmem %s3, %s191
      %s193 = smul.u32 4, %s19
      %s195 = smul.u32 %s19, 4
      %s196 = smul.u32 %s195, 2
      %s197 = smul.addr %s196, 4
      %s198 = scalar_lea.vmem %s183, %s197
      %v199 = vld [vmem:[%s198] sm:$0xf]
      %v200 = vld [vmem:[%s198 + $0x4] sm:$0x1]
      %v201 = vld [vmem:[%s198 + $0x8] sm:$0xf]
      %v202 = vld [vmem:[%s198 + $0xc] sm:$0x1]
      %v203 = vld [vmem:[%s198 + $0x10] sm:$0xf]
      %v204 = vld [vmem:[%s198 + $0x14] sm:$0x1]
      %v205 = vld [vmem:[%s198 + $0x18] sm:$0xf]
      %v206 = vld [vmem:[%s198 + $0x1c] sm:$0x1]
      %v207 = vmax.bf16 %v199, 0
      %v208 = vmax.bf16 %v200, 0
      %v209 = vmax.bf16 %v201, 0
      %v210 = vmax.bf16 %v202, 0
      %v211 = vmax.bf16 %v203, 0
      %v212 = vmax.bf16 %v204, 0
      %v213 = vmax.bf16 %v205, 0
      %v214 = vmax.bf16 %v206, 0
      %v223 = vunpack.c.l.b16 %v207
      %v224 = vunpack.c.l.b16 %v208
      %v225 = vunpack.c.l.b16 %v209
      %v226 = vunpack.c.l.b16 %v210
      %v227 = vunpack.c.l.b16 %v211
      %v228 = vunpack.c.l.b16 %v212
      %v229 = vunpack.c.l.b16 %v213
      %v230 = vunpack.c.l.b16 %v214
      %v231 = vpack.c.b16 %v224, %v223
      %v232 = vpack.c.b16 %v226, %v225
      %v233 = vpack.c.b16 %v228, %v227
      %v234 = vpack.c.b16 %v230, %v229
      %v236 = vshrl.u32 %v231, 16
      %v238 = vshll.u32 %v231, 16
      %v240 = vrot.slane %v238, 1
      %v241 = vor.u32 %v236, %v240
      %v243 = vshrl.u32 %v232, 16
      %v245 = vshll.u32 %v232, 16
      %v247 = vrot.slane %v245, 1
      %v248 = vor.u32 %v243, %v247
      %v250 = vshrl.u32 %v233, 16
      %v252 = vshll.u32 %v233, 16
      %v254 = vrot.slane %v252, 1
      %v255 = vor.u32 %v250, %v254
      %v257 = vshrl.u32 %v234, 16
      %v259 = vshll.u32 %v234, 16
      %v261 = vrot.slane %v259, 1
      %v262 = vor.u32 %v257, %v261
      %v263 = vrot.slane %v231, 1
      %v264 = vrot.slane %v232, 1
      %v265 = vrot.slane %v233, 1
      %v266 = vrot.slane %v234, 1
      %v267 = vunpack.c.l.b16 %v241
      %v268 = vunpack.c.l.b16 %v263
      %v269 = vunpack.c.l.b16 %v248
      %v270 = vunpack.c.l.b16 %v264
      %v271 = vunpack.c.l.b16 %v255
      %v272 = vunpack.c.l.b16 %v265
      %v273 = vunpack.c.l.b16 %v262
      %v274 = vunpack.c.l.b16 %v266
      %v275 = vld [vmem:[%s1] sm:$0xf]
      %v276 = vld [vmem:[%s1 + $0x4] sm:$0xf]
      %v277 = vld [vmem:[%s1 + $0x8] sm:$0xf]
      %v278 = vld [vmem:[%s1 + $0xc] sm:$0xf]
      %v279 = vld [vmem:[%s1 + $0x10] sm:$0xf]
      %v280 = vld [vmem:[%s1 + $0x14] sm:$0xf]
      %v281 = vld [vmem:[%s1 + $0x18] sm:$0xf]
      %v282 = vld [vmem:[%s1 + $0x1c] sm:$0xf]
      %v283 = vld [vmem:[%s1 + $0x20] sm:$0xf]
      %v284 = vld [vmem:[%s1 + $0x24] sm:$0xf]
      %v285 = vld [vmem:[%s1 + $0x28] sm:$0xf]
      %v286 = vld [vmem:[%s1 + $0x2c] sm:$0xf]
      %v287 = vld [vmem:[%s1 + $0x30] sm:$0xf]
      %v288 = vld [vmem:[%s1 + $0x34] sm:$0xf]
      %v289 = vld [vmem:[%s1 + $0x38] sm:$0xf]
      %v290 = vld [vmem:[%s1 + $0x3c] sm:$0xf]
      %v291 = vld [vmem:[%s1 + $0x40] sm:$0xf]
      %v292 = vld [vmem:[%s1 + $0x44] sm:$0xf]
      %v293 = vld [vmem:[%s1 + $0x48] sm:$0xf]
      %v294 = vld [vmem:[%s1 + $0x4c] sm:$0xf]
      %v295 = vld [vmem:[%s1 + $0x50] sm:$0xf]
      %v296 = vld [vmem:[%s1 + $0x54] sm:$0xf]
      %v297 = vld [vmem:[%s1 + $0x58] sm:$0xf]
      %v298 = vld [vmem:[%s1 + $0x5c] sm:$0xf]
      %v299 = vld [vmem:[%s1 + $0x60] sm:$0xf]
      %v300 = vld [vmem:[%s1 + $0x64] sm:$0xf]
      %v301 = vld [vmem:[%s1 + $0x68] sm:$0xf]
      %v302 = vld [vmem:[%s1 + $0x6c] sm:$0xf]
      %v303 = vld [vmem:[%s1 + $0x70] sm:$0xf]
      %v304 = vld [vmem:[%s1 + $0x74] sm:$0xf]
      %v305 = vld [vmem:[%s1 + $0x78] sm:$0xf]
      %v306 = vld [vmem:[%s1 + $0x7c] sm:$0xf]
      %v307 = vld [vmem:[%s1 + $0x80] sm:$0xf]
      %v308 = vld [vmem:[%s1 + $0x84] sm:$0xf]
      %v309 = vld [vmem:[%s1 + $0x88] sm:$0xf]
      %v310 = vld [vmem:[%s1 + $0x8c] sm:$0xf]
      %v311 = vld [vmem:[%s1 + $0x90] sm:$0xf]
      %v312 = vld [vmem:[%s1 + $0x94] sm:$0xf]
      %v313 = vld [vmem:[%s1 + $0x98] sm:$0xf]
      %v314 = vld [vmem:[%s1 + $0x9c] sm:$0xf]
      %v315 = vld [vmem:[%s1 + $0xa0] sm:$0xf]
      %v316 = vld [vmem:[%s1 + $0xa4] sm:$0xf]
      %v317 = vld [vmem:[%s1 + $0xa8] sm:$0xf]
      %v318 = vld [vmem:[%s1 + $0xac] sm:$0xf]
      %v319 = vld [vmem:[%s1 + $0xb0] sm:$0xf]
      %v320 = vld [vmem:[%s1 + $0xb4] sm:$0xf]
      %v321 = vld [vmem:[%s1 + $0xb8] sm:$0xf]
      %v322 = vld [vmem:[%s1 + $0xbc] sm:$0xf]
      %s323 = sadd.s32 %s195, 1
      %s324 = smul.u32 %s323, 2
      %s325 = smul.addr %s324, 4
      %s326 = scalar_lea.vmem %s183, %s325
      %v327 = vld [vmem:[%s326] sm:$0xf]
      %v328 = vld [vmem:[%s326 + $0x4] sm:$0x1]
      %v329 = vld [vmem:[%s326 + $0x8] sm:$0xf]
      %v330 = vld [vmem:[%s326 + $0xc] sm:$0x1]
      %v331 = vld [vmem:[%s326 + $0x10] sm:$0xf]
      %v332 = vld [vmem:[%s326 + $0x14] sm:$0x1]
      %v333 = vld [vmem:[%s326 + $0x18] sm:$0xf]
      %v334 = vld [vmem:[%s326 + $0x1c] sm:$0x1]
      %v335 = vmax.bf16 %v327, 0
      %v336 = vmax.bf16 %v328, 0
      %v337 = vmax.bf16 %v329, 0
      %v338 = vmax.bf16 %v330, 0
      %v339 = vmax.bf16 %v331, 0
      %v340 = vmax.bf16 %v332, 0
      %v341 = vmax.bf16 %v333, 0
      %v342 = vmax.bf16 %v334, 0
      %v351 = vunpack.c.l.b16 %v335
      %v352 = vunpack.c.l.b16 %v336
      %v353 = vunpack.c.l.b16 %v337
      %v354 = vunpack.c.l.b16 %v338
      %v355 = vunpack.c.l.b16 %v339
      %v356 = vunpack.c.l.b16 %v340
      %v357 = vunpack.c.l.b16 %v341
      %v358 = vunpack.c.l.b16 %v342
      %v359 = vpack.c.b16 %v352, %v351
      %v360 = vpack.c.b16 %v354, %v353
      %v361 = vpack.c.b16 %v356, %v355
      %v362 = vpack.c.b16 %v358, %v357
      %v364 = vshrl.u32 %v359, 16
      %v366 = vshll.u32 %v359, 16
      %v368 = vrot.slane %v366, 1
      %v369 = vor.u32 %v364, %v368
      %v371 = vshrl.u32 %v360, 16
      %v373 = vshll.u32 %v360, 16
      %v375 = vrot.slane %v373, 1
      %v376 = vor.u32 %v371, %v375
      %v378 = vshrl.u32 %v361, 16
      %v380 = vshll.u32 %v361, 16
      %v382 = vrot.slane %v380, 1
      %v383 = vor.u32 %v378, %v382
      %v385 = vshrl.u32 %v362, 16
      %v387 = vshll.u32 %v362, 16
      %v389 = vrot.slane %v387, 1
      %v390 = vor.u32 %v385, %v389
      %v391 = vrot.slane %v359, 1
      %v392 = vrot.slane %v360, 1
      %v393 = vrot.slane %v361, 1
      %v394 = vrot.slane %v362, 1
      %v395 = vunpack.c.l.b16 %v369
      %v396 = vunpack.c.l.b16 %v391
      %v397 = vunpack.c.l.b16 %v376
      %v398 = vunpack.c.l.b16 %v392
      %v399 = vunpack.c.l.b16 %v383
      %v400 = vunpack.c.l.b16 %v393
      %v401 = vunpack.c.l.b16 %v390
      %v402 = vunpack.c.l.b16 %v394
      %s403 = scalar_lea.vmem %s1, 192
      %v404 = vld [vmem:[%s403] sm:$0xf]
      %v405 = vld [vmem:[%s403 + $0x4] sm:$0xf]
      %v406 = vld [vmem:[%s403 + $0x8] sm:$0xf]
      %v407 = vld [vmem:[%s403 + $0xc] sm:$0xf]
      %v408 = vld [vmem:[%s403 + $0x10] sm:$0xf]
      %v409 = vld [vmem:[%s403 + $0x14] sm:$0xf]
      %v410 = vld [vmem:[%s403 + $0x18] sm:$0xf]
      %v411 = vld [vmem:[%s403 + $0x1c] sm:$0xf]
      %v412 = vld [vmem:[%s403 + $0x20] sm:$0xf]
      %v413 = vld [vmem:[%s403 + $0x24] sm:$0xf]
      %v414 = vld [vmem:[%s403 + $0x28] sm:$0xf]
      %v415 = vld [vmem:[%s403 + $0x2c] sm:$0xf]
      %v416 = vld [vmem:[%s403 + $0x30] sm:$0xf]
      %v417 = vld [vmem:[%s403 + $0x34] sm:$0xf]
      %v418 = vld [vmem:[%s403 + $0x38] sm:$0xf]
      %v419 = vld [vmem:[%s403 + $0x3c] sm:$0xf]
      %v420 = vld [vmem:[%s403 + $0x40] sm:$0xf]
      %v421 = vld [vmem:[%s403 + $0x44] sm:$0xf]
      %v422 = vld [vmem:[%s403 + $0x48] sm:$0xf]
      %v423 = vld [vmem:[%s403 + $0x4c] sm:$0xf]
      %v424 = vld [vmem:[%s403 + $0x50] sm:$0xf]
      %v425 = vld [vmem:[%s403 + $0x54] sm:$0xf]
      %v426 = vld [vmem:[%s403 + $0x58] sm:$0xf]
      %v427 = vld [vmem:[%s403 + $0x5c] sm:$0xf]
      %v428 = vld [vmem:[%s403 + $0x60] sm:$0xf]
      %v429 = vld [vmem:[%s403 + $0x64] sm:$0xf]
      %v430 = vld [vmem:[%s403 + $0x68] sm:$0xf]
      %v431 = vld [vmem:[%s403 + $0x6c] sm:$0xf]
      %v432 = vld [vmem:[%s403 + $0x70] sm:$0xf]
      %v433 = vld [vmem:[%s403 + $0x74] sm:$0xf]
      %v434 = vld [vmem:[%s403 + $0x78] sm:$0xf]
      %v435 = vld [vmem:[%s403 + $0x7c] sm:$0xf]
      %v436 = vld [vmem:[%s403 + $0x80] sm:$0xf]
      %v437 = vld [vmem:[%s403 + $0x84] sm:$0xf]
      %v438 = vld [vmem:[%s403 + $0x88] sm:$0xf]
      %v439 = vld [vmem:[%s403 + $0x8c] sm:$0xf]
      %v440 = vld [vmem:[%s403 + $0x90] sm:$0xf]
      %v441 = vld [vmem:[%s403 + $0x94] sm:$0xf]
      %v442 = vld [vmem:[%s403 + $0x98] sm:$0xf]
      %v443 = vld [vmem:[%s403 + $0x9c] sm:$0xf]
      %v444 = vld [vmem:[%s403 + $0xa0] sm:$0xf]
      %v445 = vld [vmem:[%s403 + $0xa4] sm:$0xf]
      %v446 = vld [vmem:[%s403 + $0xa8] sm:$0xf]
      %v447 = vld [vmem:[%s403 + $0xac] sm:$0xf]
      %v448 = vld [vmem:[%s403 + $0xb0] sm:$0xf]
      %v449 = vld [vmem:[%s403 + $0xb4] sm:$0xf]
      %v450 = vld [vmem:[%s403 + $0xb8] sm:$0xf]
      %v451 = vld [vmem:[%s403 + $0xbc] sm:$0xf]
      %v452 = vpack.c.b16 %v353, %v351
      %v453 = vpack.c.b16 %v397, %v395
      %v454 = vpack.c.b16 %v398, %v396
      %v455 = vpack.c.b16 %v357, %v355
      %v456 = vpack.c.b16 %v401, %v399
      %v457 = vpack.c.b16 %v402, %v400
      %v512 = vunpack.c.l.b16 %v404
      %v513 = vunpack.c.l.b16 %v405
      %v514 = vunpack.c.l.b16 %v406
      %v515 = vunpack.c.l.b16 %v407
      %v516 = vunpack.c.l.b16 %v408
      %v517 = vunpack.c.l.b16 %v409
      %v518 = vunpack.c.l.b16 %v410
      %v519 = vunpack.c.l.b16 %v411
      %v520 = vunpack.c.l.b16 %v412
      %v521 = vunpack.c.l.b16 %v413
      %v522 = vunpack.c.l.b16 %v414
      %v523 = vunpack.c.l.b16 %v415
      %v524 = vunpack.c.l.b16 %v416
      %v525 = vunpack.c.l.b16 %v417
      %v526 = vunpack.c.l.b16 %v418
      %v527 = vunpack.c.l.b16 %v419
      %v528 = vunpack.c.l.b16 %v420
      %v529 = vunpack.c.l.b16 %v421
      %v530 = vunpack.c.l.b16 %v422
      %v531 = vunpack.c.l.b16 %v423
      %v532 = vunpack.c.l.b16 %v424
      %v533 = vunpack.c.l.b16 %v425
      %v534 = vunpack.c.l.b16 %v426
      %v535 = vunpack.c.l.b16 %v427
      %v536 = vunpack.c.l.b16 %v428
      %v537 = vunpack.c.l.b16 %v429
      %v538 = vunpack.c.l.b16 %v430
      %v539 = vunpack.c.l.b16 %v431
      %v540 = vunpack.c.l.b16 %v432
      %v541 = vunpack.c.l.b16 %v433
      %v542 = vunpack.c.l.b16 %v434
      %v543 = vunpack.c.l.b16 %v435
      %v544 = vunpack.c.l.b16 %v436
      %v545 = vunpack.c.l.b16 %v437
      %v546 = vunpack.c.l.b16 %v438
      %v547 = vunpack.c.l.b16 %v439
      %v548 = vunpack.c.l.b16 %v440
      %v549 = vunpack.c.l.b16 %v441
      %v550 = vunpack.c.l.b16 %v442
      %v551 = vunpack.c.l.b16 %v443
      %v552 = vunpack.c.l.b16 %v444
      %v553 = vunpack.c.l.b16 %v445
      %v554 = vunpack.c.l.b16 %v446
      %v555 = vunpack.c.l.b16 %v447
      %v556 = vunpack.c.l.b16 %v448
      %v557 = vunpack.c.l.b16 %v449
      %v558 = vunpack.c.l.b16 %v450
      %v559 = vunpack.c.l.b16 %v451
      %v560 = vpack.c.b16 %v513, %v512
      %v561 = vpack.c.b16 %v515, %v514
      %v562 = vpack.c.b16 %v517, %v516
      %v563 = vpack.c.b16 %v519, %v518
      %v564 = vpack.c.b16 %v521, %v520
      %v565 = vpack.c.b16 %v523, %v522
      %v566 = vpack.c.b16 %v525, %v524
      %v567 = vpack.c.b16 %v527, %v526
      %v568 = vpack.c.b16 %v529, %v528
      %v569 = vpack.c.b16 %v531, %v530
      %v570 = vpack.c.b16 %v533, %v532
      %v571 = vpack.c.b16 %v535, %v534
      %v572 = vpack.c.b16 %v537, %v536
      %v573 = vpack.c.b16 %v539, %v538
      %v574 = vpack.c.b16 %v541, %v540
      %v575 = vpack.c.b16 %v543, %v542
      %v576 = vpack.c.b16 %v545, %v544
      %v577 = vpack.c.b16 %v547, %v546
      %v578 = vpack.c.b16 %v549, %v548
      %v579 = vpack.c.b16 %v551, %v550
      %v580 = vpack.c.b16 %v553, %v552
      %v581 = vpack.c.b16 %v555, %v554
      %v582 = vpack.c.b16 %v557, %v556
      %v583 = vpack.c.b16 %v559, %v558
      %608 = vmatprep.subr.bf16.mxu0 0
      %609 = vmatpush1.bf16.msra.mxu0 %v560
      %610 = vmatprep.subr.bf16.mxu0 0
      %611 = vmatpush1.bf16.msra.mxu0 %v561
      %612 = vmatprep.subr.bf16.mxu0 0
      %613 = vmatpush1.bf16.msra.mxu0 %v562
      %614 = vmatprep.subr.bf16.mxu0 0
      %615 = vmatpush1.bf16.msra.mxu0 %v563
      %616 = vmatprep.subr.bf16.mxu0 0
      %617 = vmatpush1.bf16.msra.mxu0 %v564
      %618 = vmatprep.subr.bf16.mxu0 0
      %619 = vmatpush1.bf16.msra.mxu0 %v565
      %620 = vmatprep.subr.bf16.mxu0 0
      %621 = vmatpush1.bf16.msra.mxu0 %v566
      %622 = vmatprep.subr.bf16.mxu0 0
      %623 = vmatpush1.bf16.msra.mxu0 %v567
      %624 = vmatprep.subr.bf16.mxu0 0
      %625 = vmatpush1.bf16.msra.mxu0 %v568
      %626 = vmatprep.subr.bf16.mxu0 0
      %627 = vmatpush1.bf16.msra.mxu0 %v569
      %628 = vmatprep.subr.bf16.mxu0 0
      %629 = vmatpush1.bf16.msra.mxu0 %v570
      %630 = vmatprep.subr.bf16.mxu0 0
      %631 = vmatpush1.bf16.msra.mxu0 %v571
      %632 = vmatprep.subr.bf16.mxu0 0
      %633 = vmatpush1.bf16.msra.mxu0 %v572
      %634 = vmatprep.subr.bf16.mxu0 0
      %635 = vmatpush1.bf16.msra.mxu0 %v573
      %636 = vmatprep.subr.bf16.mxu0 0
      %637 = vmatpush1.bf16.msra.mxu0 %v574
      %638 = vmatprep.subr.bf16.mxu0 0
      %639 = vmatpush1.bf16.msra.mxu0 %v575
      %640 = vmatprep.mubr.bf16.mxu0 %v453
      %641 = vmatmul.mubr.bf16.gmra.mrb[0].mxu0 %v452
      %v642 = vpop.f32.mrb[0].mxu0
      %v643 = vadd.f32 0.0, %v642
      %v644 = vpop.f32.mrb[0].mxu0
      %v645 = vpop.f32.mrb[0].mxu0
      %v646 = vadd.f32 0.0, %v645
      %v647 = vpop.f32.mrb[0].mxu0
      %648 = vmatprep.mubr.bf16.mxu0 %v456
      %649 = vmatmul.mubr.bf16.gmra.mrb[0].mxu0 %v455
      %v650 = vpop.f32.mrb[0].mxu0
      %v651 = vadd.f32 0.0, %v650
      %v652 = vpop.f32.mrb[0].mxu0
      %v653 = vpop.f32.mrb[0].mxu0
      %v654 = vadd.f32 0.0, %v653
      %v655 = vpop.f32.mrb[0].mxu0
      %656 = vdwg.mxu0
      %657 = vmatprep.subr.bf16.mxu0 0
      %658 = vmatpush1.bf16.msra.mxu0 %v576
      %659 = vmatprep.subr.bf16.mxu0 0
      %660 = vmatpush1.bf16.msra.mxu0 %v577
      %661 = vmatprep.subr.bf16.mxu0 0
      %662 = vmatpush1.bf16.msra.mxu0 %v578
      %663 = vmatprep.subr.bf16.mxu0 0
      %664 = vmatpush1.bf16.msra.mxu0 %v579
      %665 = vmatprep.subr.bf16.mxu0 0
      %666 = vmatpush1.bf16.msra.mxu0 %v580
      %667 = vmatprep.subr.bf16.mxu0 0
      %668 = vmatpush1.bf16.msra.mxu0 %v581
      %669 = vmatprep.subr.bf16.mxu0 0
      %670 = vmatpush1.bf16.msra.mxu0 %v582
      %671 = vmatprep.subr.bf16.mxu0 0
      %672 = vmatpush1.bf16.msra.mxu0 %v583
      %673 = vmatprep.subr.bf16.mxu0 0
      %674 = vmatpush1.bf16.msra.mxu0 0
      %675 = vmatprep.subr.bf16.mxu0 0
      %676 = vmatpush1.bf16.msra.mxu0 0
      %677 = vmatprep.subr.bf16.mxu0 0
      %678 = vmatpush1.bf16.msra.mxu0 0
      %679 = vmatprep.subr.bf16.mxu0 0
      %680 = vmatpush1.bf16.msra.mxu0 0
      %681 = vmatprep.subr.bf16.mxu0 0
      %682 = vmatpush1.bf16.msra.mxu0 0
      %683 = vmatprep.subr.bf16.mxu0 0
      %684 = vmatpush1.bf16.msra.mxu0 0
      %685 = vmatprep.subr.bf16.mxu0 0
      %686 = vmatpush1.bf16.msra.mxu0 0
      %687 = vmatprep.subr.bf16.mxu0 0
      %688 = vmatpush1.bf16.msra.mxu0 0
      %689 = vmatprep.mubr.bf16.mxu0 0
      %690 = vmatmul.mubr.bf16.gmra.mrb[0].mxu0 %v454
      %v691 = vpop.f32.mrb[0].mxu0
      %v692 = vadd.f32 %v643, %v691
      %v693 = vpop.f32.mrb[0].mxu0
      %v694 = vpop.f32.mrb[0].mxu0
      %v695 = vadd.f32 %v646, %v694
      %v696 = vpop.f32.mrb[0].mxu0
      %697 = vmatprep.mubr.bf16.mxu0 0
      %698 = vmatmul.mubr.bf16.gmra.mrb[0].mxu0 %v457
      %v699 = vpop.f32.mrb[0].mxu0
      %v700 = vadd.f32 %v651, %v699
      %v701 = vpop.f32.mrb[0].mxu0
      %v702 = vpop.f32.mrb[0].mxu0
      %v703 = vadd.f32 %v654, %v702
      %v704 = vpop.f32.mrb[0].mxu0
      %705 = vdwg.mxu0
      %v706 = vpack.c.b16 %v225, %v223
      %v707 = vpack.c.b16 %v269, %v267
      %v708 = vpack.c.b16 %v270, %v268
      %v709 = vpack.c.b16 %v229, %v227
      %v710 = vpack.c.b16 %v273, %v271
      %v711 = vpack.c.b16 %v274, %v272
      %v766 = vunpack.c.l.b16 %v275
      %v767 = vunpack.c.l.b16 %v276
      %v768 = vunpack.c.l.b16 %v277
      %v769 = vunpack.c.l.b16 %v278
      %v770 = vunpack.c.l.b16 %v279
      %v771 = vunpack.c.l.b16 %v280
      %v772 = vunpack.c.l.b16 %v281
      %v773 = vunpack.c.l.b16 %v282
      %v774 = vunpack.c.l.b16 %v283
      %v775 = vunpack.c.l.b16 %v284
      %v776 = vunpack.c.l.b16 %v285
      %v777 = vunpack.c.l.b16 %v286
      %v778 = vunpack.c.l.b16 %v287
      %v779 = vunpack.c.l.b16 %v288
      %v780 = vunpack.c.l.b16 %v289
      %v781 = vunpack.c.l.b16 %v290
      %v782 = vunpack.c.l.b16 %v291
      %v783 = vunpack.c.l.b16 %v292
      %v784 = vunpack.c.l.b16 %v293
      %v785 = vunpack.c.l.b16 %v294
      %v786 = vunpack.c.l.b16 %v295
      %v787 = vunpack.c.l.b16 %v296
      %v788 = vunpack.c.l.b16 %v297
      %v789 = vunpack.c.l.b16 %v298
      %v790 = vunpack.c.l.b16 %v299
      %v791 = vunpack.c.l.b16 %v300
      %v792 = vunpack.c.l.b16 %v301
      %v793 = vunpack.c.l.b16 %v302
      %v794 = vunpack.c.l.b16 %v303
      %v795 = vunpack.c.l.b16 %v304
      %v796 = vunpack.c.l.b16 %v305
      %v797 = vunpack.c.l.b16 %v306
      %v798 = vunpack.c.l.b16 %v307
      %v799 = vunpack.c.l.b16 %v308
      %v800 = vunpack.c.l.b16 %v309
      %v801 = vunpack.c.l.b16 %v310
      %v802 = vunpack.c.l.b16 %v311
      %v803 = vunpack.c.l.b16 %v312
      %v804 = vunpack.c.l.b16 %v313
      %v805 = vunpack.c.l.b16 %v314
      %v806 = vunpack.c.l.b16 %v315
      %v807 = vunpack.c.l.b16 %v316
      %v808 = vunpack.c.l.b16 %v317
      %v809 = vunpack.c.l.b16 %v318
      %v810 = vunpack.c.l.b16 %v319
      %v811 = vunpack.c.l.b16 %v320
      %v812 = vunpack.c.l.b16 %v321
      %v813 = vunpack.c.l.b16 %v322
      %v814 = vpack.c.b16 %v767, %v766
      %v815 = vpack.c.b16 %v769, %v768
      %v816 = vpack.c.b16 %v771, %v770
      %v817 = vpack.c.b16 %v773, %v772
      %v818 = vpack.c.b16 %v775, %v774
      %v819 = vpack.c.b16 %v777, %v776
      %v820 = vpack.c.b16 %v779, %v778
      %v821 = vpack.c.b16 %v781, %v780
      %v822 = vpack.c.b16 %v783, %v782
      %v823 = vpack.c.b16 %v785, %v784
      %v824 = vpack.c.b16 %v787, %v786
      %v825 = vpack.c.b16 %v789, %v788
      %v826 = vpack.c.b16 %v791, %v790
      %v827 = vpack.c.b16 %v793, %v792
      %v828 = vpack.c.b16 %v795, %v794
      %v829 = vpack.c.b16 %v797, %v796
      %v830 = vpack.c.b16 %v799, %v798
      %v831 = vpack.c.b16 %v801, %v800
      %v832 = vpack.c.b16 %v803, %v802
      %v833 = vpack.c.b16 %v805, %v804
      %v834 = vpack.c.b16 %v807, %v806
      %v835 = vpack.c.b16 %v809, %v808
      %v836 = vpack.c.b16 %v811, %v810
      %v837 = vpack.c.b16 %v813, %v812
      %862 = vmatprep.subr.bf16.mxu0 0
      %863 = vmatpush1.bf16.msra.mxu0 %v814
      %864 = vmatprep.subr.bf16.mxu0 0
      %865 = vmatpush1.bf16.msra.mxu0 %v815
      %866 = vmatprep.subr.bf16.mxu0 0
      %867 = vmatpush1.bf16.msra.mxu0 %v816
      %868 = vmatprep.subr.bf16.mxu0 0
      %869 = vmatpush1.bf16.msra.mxu0 %v817
      %870 = vmatprep.subr.bf16.mxu0 0
      %871 = vmatpush1.bf16.msra.mxu0 %v818
      %872 = vmatprep.subr.bf16.mxu0 0
      %873 = vmatpush1.bf16.msra.mxu0 %v819
      %874 = vmatprep.subr.bf16.mxu0 0
      %875 = vmatpush1.bf16.msra.mxu0 %v820
      %876 = vmatprep.subr.bf16.mxu0 0
      %877 = vmatpush1.bf16.msra.mxu0 %v821
      %878 = vmatprep.subr.bf16.mxu0 0
      %879 = vmatpush1.bf16.msra.mxu0 %v822
      %880 = vmatprep.subr.bf16.mxu0 0
      %881 = vmatpush1.bf16.msra.mxu0 %v823
      %882 = vmatprep.subr.bf16.mxu0 0
      %883 = vmatpush1.bf16.msra.mxu0 %v824
      %884 = vmatprep.subr.bf16.mxu0 0
      %885 = vmatpush1.bf16.msra.mxu0 %v825
      %886 = vmatprep.subr.bf16.mxu0 0
      %887 = vmatpush1.bf16.msra.mxu0 %v826
      %888 = vmatprep.subr.bf16.mxu0 0
      %889 = vmatpush1.bf16.msra.mxu0 %v827
      %890 = vmatprep.subr.bf16.mxu0 0
      %891 = vmatpush1.bf16.msra.mxu0 %v828
      %892 = vmatprep.subr.bf16.mxu0 0
      %893 = vmatpush1.bf16.msra.mxu0 %v829
      %894 = vmatprep.mubr.bf16.mxu0 %v707
      %895 = vmatmul.mubr.bf16.gmra.mrb[0].mxu0 %v706
      %v896 = vpop.f32.mrb[0].mxu0
      %v897 = vadd.f32 %v692, %v896
      %v898 = vpop.f32.mrb[0].mxu0
      %v899 = vpop.f32.mrb[0].mxu0
      %v900 = vadd.f32 %v695, %v899
      %v901 = vpop.f32.mrb[0].mxu0
      %902 = vmatprep.mubr.bf16.mxu0 %v710
      %903 = vmatmul.mubr.bf16.gmra.mrb[0].mxu0 %v709
      %v904 = vpop.f32.mrb[0].mxu0
      %v905 = vadd.f32 %v700, %v904
      %v906 = vpop.f32.mrb[0].mxu0
      %v907 = vpop.f32.mrb[0].mxu0
      %v908 = vadd.f32 %v703, %v907
      %v909 = vpop.f32.mrb[0].mxu0
      %910 = vdwg.mxu0
      %911 = vmatprep.subr.bf16.mxu0 0
      %912 = vmatpush1.bf16.msra.mxu0 %v830
      %913 = vmatprep.subr.bf16.mxu0 0
      %914 = vmatpush1.bf16.msra.mxu0 %v831
      %915 = vmatprep.subr.bf16.mxu0 0
      %916 = vmatpush1.bf16.msra.mxu0 %v832
      %917 = vmatprep.subr.bf16.mxu0 0
      %918 = vmatpush1.bf16.msra.mxu0 %v833
      %919 = vmatprep.subr.bf16.mxu0 0
      %920 = vmatpush1.bf16.msra.mxu0 %v834
      %921 = vmatprep.subr.bf16.mxu0 0
      %922 = vmatpush1.bf16.msra.mxu0 %v835
      %923 = vmatprep.subr.bf16.mxu0 0
      %924 = vmatpush1.bf16.msra.mxu0 %v836
      %925 = vmatprep.subr.bf16.mxu0 0
      %926 = vmatpush1.bf16.msra.mxu0 %v837
      %927 = vmatprep.subr.bf16.mxu0 0
      %928 = vmatpush1.bf16.msra.mxu0 0
      %929 = vmatprep.subr.bf16.mxu0 0
      %930 = vmatpush1.bf16.msra.mxu0 0
      %931 = vmatprep.subr.bf16.mxu0 0
      %932 = vmatpush1.bf16.msra.mxu0 0
      %933 = vmatprep.subr.bf16.mxu0 0
      %934 = vmatpush1.bf16.msra.mxu0 0
      %935 = vmatprep.subr.bf16.mxu0 0
      %936 = vmatpush1.bf16.msra.mxu0 0
      %937 = vmatprep.subr.bf16.mxu0 0
      %938 = vmatpush1.bf16.msra.mxu0 0
      %939 = vmatprep.subr.bf16.mxu0 0
      %940 = vmatpush1.bf16.msra.mxu0 0
      %941 = vmatprep.subr.bf16.mxu0 0
      %942 = vmatpush1.bf16.msra.mxu0 0
      %943 = vmatprep.mubr.bf16.mxu0 0
      %944 = vmatmul.mubr.bf16.gmra.mrb[0].mxu0 %v708
      %v945 = vpop.f32.mrb[0].mxu0
      %v946 = vadd.f32 %v897, %v945
      %v947 = vpop.f32.mrb[0].mxu0
      %v948 = vpop.f32.mrb[0].mxu0
      %v949 = vadd.f32 %v900, %v948
      %v950 = vpop.f32.mrb[0].mxu0
      %951 = vmatprep.mubr.bf16.mxu0 0
      %952 = vmatmul.mubr.bf16.gmra.mrb[0].mxu0 %v711
      %v953 = vpop.f32.mrb[0].mxu0
      %v954 = vadd.f32 %v905, %v953
      %v955 = vpop.f32.mrb[0].mxu0
      %v956 = vpop.f32.mrb[0].mxu0
      %v957 = vadd.f32 %v908, %v956
      %v958 = vpop.f32.mrb[0].mxu0
      %959 = vdwg.mxu0
      %s960 = sadd.s32 %s195, 2
      %s961 = smul.u32 %s960, 2
      %s962 = smul.addr %s961, 4
      %s963 = scalar_lea.vmem %s183, %s962
      %v964 = vld [vmem:[%s963] sm:$0xf]
      %v965 = vld [vmem:[%s963 + $0x4] sm:$0x1]
      %v966 = vld [vmem:[%s963 + $0x8] sm:$0xf]
      %v967 = vld [vmem:[%s963 + $0xc] sm:$0x1]
      %v968 = vld [vmem:[%s963 + $0x10] sm:$0xf]
      %v969 = vld [vmem:[%s963 + $0x14] sm:$0x1]
      %v970 = vld [vmem:[%s963 + $0x18] sm:$0xf]
      %v971 = vld [vmem:[%s963 + $0x1c] sm:$0x1]
      %v972 = vmax.bf16 %v964, 0
      %v973 = vmax.bf16 %v965, 0
      %v974 = vmax.bf16 %v966, 0
      %v975 = vmax.bf16 %v967, 0
      %v976 = vmax.bf16 %v968, 0
      %v977 = vmax.bf16 %v969, 0
      %v978 = vmax.bf16 %v970, 0
      %v979 = vmax.bf16 %v971, 0
      %v988 = vunpack.c.l.b16 %v972
      %v989 = vunpack.c.l.b16 %v973
      %v990 = vunpack.c.l.b16 %v974
      %v991 = vunpack.c.l.b16 %v975
      %v992 = vunpack.c.l.b16 %v976
      %v993 = vunpack.c.l.b16 %v977
      %v994 = vunpack.c.l.b16 %v978
      %v995 = vunpack.c.l.b16 %v979
      %v996 = vpack.c.b16 %v989, %v988
      %v997 = vpack.c.b16 %v991, %v990
      %v998 = vpack.c.b16 %v993, %v992
      %v999 = vpack.c.b16 %v995, %v994
      %v1001 = vshrl.u32 %v996, 16
      %v1003 = vshll.u32 %v996, 16
      %v1005 = vrot.slane %v1003, 1
      %v1006 = vor.u32 %v1001, %v1005
      %v1008 = vshrl.u32 %v997, 16
      %v1010 = vshll.u32 %v997, 16
      %v1012 = vrot.slane %v1010, 1
      %v1013 = vor.u32 %v1008, %v1012
      %v1015 = vshrl.u32 %v998, 16
      %v1017 = vshll.u32 %v998, 16
      %v1019 = vrot.slane %v1017, 1
      %v1020 = vor.u32 %v1015, %v1019
      %v1022 = vshrl.u32 %v999, 16
      %v1024 = vshll.u32 %v999, 16
      %v1026 = vrot.slane %v1024, 1
      %v1027 = vor.u32 %v1022, %v1026
      %v1028 = vrot.slane %v996, 1
      %v1029 = vrot.slane %v997, 1
      %v1030 = vrot.slane %v998, 1
      %v1031 = vrot.slane %v999, 1
      %v1032 = vunpack.c.l.b16 %v1006
      %v1033 = vunpack.c.l.b16 %v1028
      %v1034 = vunpack.c.l.b16 %v1013
      %v1035 = vunpack.c.l.b16 %v1029
      %v1036 = vunpack.c.l.b16 %v1020
      %v1037 = vunpack.c.l.b16 %v1030
      %v1038 = vunpack.c.l.b16 %v1027
      %v1039 = vunpack.c.l.b16 %v1031
      %s1040 = scalar_lea.vmem %s1, 384
      %v1041 = vld [vmem:[%s1040] sm:$0xf]
      %v1042 = vld [vmem:[%s1040 + $0x4] sm:$0xf]
      %v1043 = vld [vmem:[%s1040 + $0x8] sm:$0xf]
      %v1044 = vld [vmem:[%s1040 + $0xc] sm:$0xf]
      %v1045 = vld [vmem:[%s1040 + $0x10] sm:$0xf]
      %v1046 = vld [vmem:[%s1040 + $0x14] sm:$0xf]
      %v1047 = vld [vmem:[%s1040 + $0x18] sm:$0xf]
      %v1048 = vld [vmem:[%s1040 + $0x1c] sm:$0xf]
      %v1049 = vld [vmem:[%s1040 + $0x20] sm:$0xf]
      %v1050 = vld [vmem:[%s1040 + $0x24] sm:$0xf]
      %v1051 = vld [vmem:[%s1040 + $0x28] sm:$0xf]
      %v1052 = vld [vmem:[%s1040 + $0x2c] sm:$0xf]
      %v1053 = vld [vmem:[%s1040 + $0x30] sm:$0xf]
      %v1054 = vld [vmem:[%s1040 + $0x34] sm:$0xf]
      %v1055 = vld [vmem:[%s1040 + $0x38] sm:$0xf]
      %v1056 = vld [vmem:[%s1040 + $0x3c] sm:$0xf]
      %v1057 = vld [vmem:[%s1040 + $0x40] sm:$0xf]
      %v1058 = vld [vmem:[%s1040 + $0x44] sm:$0xf]
      %v1059 = vld [vmem:[%s1040 + $0x48] sm:$0xf]
      %v1060 = vld [vmem:[%s1040 + $0x4c] sm:$0xf]
      %v1061 = vld [vmem:[%s1040 + $0x50] sm:$0xf]
      %v1062 = vld [vmem:[%s1040 + $0x54] sm:$0xf]
      %v1063 = vld [vmem:[%s1040 + $0x58] sm:$0xf]
      %v1064 = vld [vmem:[%s1040 + $0x5c] sm:$0xf]
      %v1065 = vld [vmem:[%s1040 + $0x60] sm:$0xf]
      %v1066 = vld [vmem:[%s1040 + $0x64] sm:$0xf]
      %v1067 = vld [vmem:[%s1040 + $0x68] sm:$0xf]
      %v1068 = vld [vmem:[%s1040 + $0x6c] sm:$0xf]
      %v1069 = vld [vmem:[%s1040 + $0x70] sm:$0xf]
      %v1070 = vld [vmem:[%s1040 + $0x74] sm:$0xf]
      %v1071 = vld [vmem:[%s1040 + $0x78] sm:$0xf]
      %v1072 = vld [vmem:[%s1040 + $0x7c] sm:$0xf]
      %v1073 = vld [vmem:[%s1040 + $0x80] sm:$0xf]
      %v1074 = vld [vmem:[%s1040 + $0x84] sm:$0xf]
      %v1075 = vld [vmem:[%s1040 + $0x88] sm:$0xf]
      %v1076 = vld [vmem:[%s1040 + $0x8c] sm:$0xf]
      %v1077 = vld [vmem:[%s1040 + $0x90] sm:$0xf]
      %v1078 = vld [vmem:[%s1040 + $0x94] sm:$0xf]
      %v1079 = vld [vmem:[%s1040 + $0x98] sm:$0xf]
      %v1080 = vld [vmem:[%s1040 + $0x9c] sm:$0xf]
      %v1081 = vld [vmem:[%s1040 + $0xa0] sm:$0xf]
      %v1082 = vld [vmem:[%s1040 + $0xa4] sm:$0xf]
      %v1083 = vld [vmem:[%s1040 + $0xa8] sm:$0xf]
      %v1084 = vld [vmem:[%s1040 + $0xac] sm:$0xf]
      %v1085 = vld [vmem:[%s1040 + $0xb0] sm:$0xf]
      %v1086 = vld [vmem:[%s1040 + $0xb4] sm:$0xf]
      %v1087 = vld [vmem:[%s1040 + $0xb8] sm:$0xf]
      %v1088 = vld [vmem:[%s1040 + $0xbc] sm:$0xf]
      %v1089 = vpack.c.b16 %v990, %v988
      %v1090 = vpack.c.b16 %v1034, %v1032
      %v1091 = vpack.c.b16 %v1035, %v1033
      %v1092 = vpack.c.b16 %v994, %v992
      %v1093 = vpack.c.b16 %v1038, %v1036
      %v1094 = vpack.c.b16 %v1039, %v1037
      %v1149 = vunpack.c.l.b16 %v1041
      %v1150 = vunpack.c.l.b16 %v1042
      %v1151 = vunpack.c.l.b16 %v1043
      %v1152 = vunpack.c.l.b16 %v1044
      %v1153 = vunpack.c.l.b16 %v1045
      %v1154 = vunpack.c.l.b16 %v1046
      %v1155 = vunpack.c.l.b16 %v1047
      %v1156 = vunpack.c.l.b16 %v1048
      %v1157 = vunpack.c.l.b16 %v1049
      %v1158 = vunpack.c.l.b16 %v1050
      %v1159 = vunpack.c.l.b16 %v1051
      %v1160 = vunpack.c.l.b16 %v1052
      %v1161 = vunpack.c.l.b16 %v1053
      %v1162 = vunpack.c.l.b16 %v1054
      %v1163 = vunpack.c.l.b16 %v1055
      %v1164 = vunpack.c.l.b16 %v1056
      %v1165 = vunpack.c.l.b16 %v1057
      %v1166 = vunpack.c.l.b16 %v1058
      %v1167 = vunpack.c.l.b16 %v1059
      %v1168 = vunpack.c.l.b16 %v1060
      %v1169 = vunpack.c.l.b16 %v1061
      %v1170 = vunpack.c.l.b16 %v1062
      %v1171 = vunpack.c.l.b16 %v1063
      %v1172 = vunpack.c.l.b16 %v1064
      %v1173 = vunpack.c.l.b16 %v1065
      %v1174 = vunpack.c.l.b16 %v1066
      %v1175 = vunpack.c.l.b16 %v1067
      %v1176 = vunpack.c.l.b16 %v1068
      %v1177 = vunpack.c.l.b16 %v1069
      %v1178 = vunpack.c.l.b16 %v1070
      %v1179 = vunpack.c.l.b16 %v1071
      %v1180 = vunpack.c.l.b16 %v1072
      %v1181 = vunpack.c.l.b16 %v1073
      %v1182 = vunpack.c.l.b16 %v1074
      %v1183 = vunpack.c.l.b16 %v1075
      %v1184 = vunpack.c.l.b16 %v1076
      %v1185 = vunpack.c.l.b16 %v1077
      %v1186 = vunpack.c.l.b16 %v1078
      %v1187 = vunpack.c.l.b16 %v1079
      %v1188 = vunpack.c.l.b16 %v1080
      %v1189 = vunpack.c.l.b16 %v1081
      %v1190 = vunpack.c.l.b16 %v1082
      %v1191 = vunpack.c.l.b16 %v1083
      %v1192 = vunpack.c.l.b16 %v1084
      %v1193 = vunpack.c.l.b16 %v1085
      %v1194 = vunpack.c.l.b16 %v1086
      %v1195 = vunpack.c.l.b16 %v1087
      %v1196 = vunpack.c.l.b16 %v1088
      %v1197 = vpack.c.b16 %v1150, %v1149
      %v1198 = vpack.c.b16 %v1152, %v1151
      %v1199 = vpack.c.b16 %v1154, %v1153
      %v1200 = vpack.c.b16 %v1156, %v1155
      %v1201 = vpack.c.b16 %v1158, %v1157
      %v1202 = vpack.c.b16 %v1160, %v1159
      %v1203 = vpack.c.b16 %v1162, %v1161
      %v1204 = vpack.c.b16 %v1164, %v1163
      %v1205 = vpack.c.b16 %v1166, %v1165
      %v1206 = vpack.c.b16 %v1168, %v1167
      %v1207 = vpack.c.b16 %v1170, %v1169
      %v1208 = vpack.c.b16 %v1172, %v1171
      %v1209 = vpack.c.b16 %v1174, %v1173
      %v1210 = vpack.c.b16 %v1176, %v1175
      %v1211 = vpack.c.b16 %v1178, %v1177
      %v1212 = vpack.c.b16 %v1180, %v1179
      %v1213 = vpack.c.b16 %v1182, %v1181
      %v1214 = vpack.c.b16 %v1184, %v1183
      %v1215 = vpack.c.b16 %v1186, %v1185
      %v1216 = vpack.c.b16 %v1188, %v1187
      %v1217 = vpack.c.b16 %v1190, %v1189
      %v1218 = vpack.c.b16 %v1192, %v1191
      %v1219 = vpack.c.b16 %v1194, %v1193
      %v1220 = vpack.c.b16 %v1196, %v1195
      %1245 = vmatprep.subr.bf16.mxu0 0
      %1246 = vmatpush1.bf16.msra.mxu0 %v1197
      %1247 = vmatprep.subr.bf16.mxu0 0
      %1248 = vmatpush1.bf16.msra.mxu0 %v1198
      %1249 = vmatprep.subr.bf16.mxu0 0
      %1250 = vmatpush1.bf16.msra.mxu0 %v1199
      %1251 = vmatprep.subr.bf16.mxu0 0
      %1252 = vmatpush1.bf16.msra.mxu0 %v1200
      %1253 = vmatprep.subr.bf16.mxu0 0
      %1254 = vmatpush1.bf16.msra.mxu0 %v1201
      %1255 = vmatprep.subr.bf16.mxu0 0
      %1256 = vmatpush1.bf16.msra.mxu0 %v1202
      %1257 = vmatprep.subr.bf16.mxu0 0
      %1258 = vmatpush1.bf16.msra.mxu0 %v1203
      %1259 = vmatprep.subr.bf16.mxu0 0
      %1260 = vmatpush1.bf16.msra.mxu0 %v1204
      %1261 = vmatprep.subr.bf16.mxu0 0
      %1262 = vmatpush1.bf16.msra.mxu0 %v1205
      %1263 = vmatprep.subr.bf16.mxu0 0
      %1264 = vmatpush1.bf16.msra.mxu0 %v1206
      %1265 = vmatprep.subr.bf16.mxu0 0
      %1266 = vmatpush1.bf16.msra.mxu0 %v1207
      %1267 = vmatprep.subr.bf16.mxu0 0
      %1268 = vmatpush1.bf16.msra.mxu0 %v1208
      %1269 = vmatprep.subr.bf16.mxu0 0
      %1270 = vmatpush1.bf16.msra.mxu0 %v1209
      %1271 = vmatprep.subr.bf16.mxu0 0
      %1272 = vmatpush1.bf16.msra.mxu0 %v1210
      %1273 = vmatprep.subr.bf16.mxu0 0
      %1274 = vmatpush1.bf16.msra.mxu0 %v1211
      %1275 = vmatprep.subr.bf16.mxu0 0
      %1276 = vmatpush1.bf16.msra.mxu0 %v1212
      %1277 = vmatprep.mubr.bf16.mxu0 %v1090
      %1278 = vmatmul.mubr.bf16.gmra.mrb[0].mxu0 %v1089
      %v1279 = vpop.f32.mrb[0].mxu0
      %v1280 = vadd.f32 0.0, %v1279
      %v1281 = vpop.f32.mrb[0].mxu0
      %v1282 = vpop.f32.mrb[0].mxu0
      %v1283 = vadd.f32 0.0, %v1282
      %v1284 = vpop.f32.mrb[0].mxu0
      %1285 = vmatprep.mubr.bf16.mxu0 %v1093
      %1286 = vmatmul.mubr.bf16.gmra.mrb[0].mxu0 %v1092
      %v1287 = vpop.f32.mrb[0].mxu0
      %v1288 = vadd.f32 0.0, %v1287
      %v1289 = vpop.f32.mrb[0].mxu0
      %v1290 = vpop.f32.mrb[0].mxu0
      %v1291 = vadd.f32 0.0, %v1290
      %v1292 = vpop.f32.mrb[0].mxu0
      %1293 = vdwg.mxu0
      %1294 = vmatprep.subr.bf16.mxu0 0
      %1295 = vmatpush1.bf16.msra.mxu0 %v1213
      %1296 = vmatprep.subr.bf16.mxu0 0
      %1297 = vmatpush1.bf16.msra.mxu0 %v1214
      %1298 = vmatprep.subr.bf16.mxu0 0
      %1299 = vmatpush1.bf16.msra.mxu0 %v1215
      %1300 = vmatprep.subr.bf16.mxu0 0
      %1301 = vmatpush1.bf16.msra.mxu0 %v1216
      %1302 = vmatprep.subr.bf16.mxu0 0
      %1303 = vmatpush1.bf16.msra.mxu0 %v1217
      %1304 = vmatprep.subr.bf16.mxu0 0
      %1305 = vmatpush1.bf16.msra.mxu0 %v1218
      %1306 = vmatprep.subr.bf16.mxu0 0
      %1307 = vmatpush1.bf16.msra.mxu0 %v1219
      %1308 = vmatprep.subr.bf16.mxu0 0
      %1309 = vmatpush1.bf16.msra.mxu0 %v1220
      %1310 = vmatprep.subr.bf16.mxu0 0
      %1311 = vmatpush1.bf16.msra.mxu0 0
      %1312 = vmatprep.subr.bf16.mxu0 0
      %1313 = vmatpush1.bf16.msra.mxu0 0
      %1314 = vmatprep.subr.bf16.mxu0 0
      %1315 = vmatpush1.bf16.msra.mxu0 0
      %1316 = vmatprep.subr.bf16.mxu0 0
      %1317 = vmatpush1.bf16.msra.mxu0 0
      %1318 = vmatprep.subr.bf16.mxu0 0
      %1319 = vmatpush1.bf16.msra.mxu0 0
      %1320 = vmatprep.subr.bf16.mxu0 0
      %1321 = vmatpush1.bf16.msra.mxu0 0
      %1322 = vmatprep.subr.bf16.mxu0 0
      %1323 = vmatpush1.bf16.msra.mxu0 0
      %1324 = vmatprep.subr.bf16.mxu0 0
      %1325 = vmatpush1.bf16.msra.mxu0 0
      %1326 = vmatprep.mubr.bf16.mxu0 0
      %1327 = vmatmul.mubr.bf16.gmra.mrb[0].mxu0 %v1091
      %v1328 = vpop.f32.mrb[0].mxu0
      %v1329 = vadd.f32 %v1280, %v1328
      %v1330 = vpop.f32.mrb[0].mxu0
      %v1331 = vpop.f32.mrb[0].mxu0
      %v1332 = vadd.f32 %v1283, %v1331
      %v1333 = vpop.f32.mrb[0].mxu0
      %1334 = vmatprep.mubr.bf16.mxu0 0
      %1335 = vmatmul.mubr.bf16.gmra.mrb[0].mxu0 %v1094
      %v1336 = vpop.f32.mrb[0].mxu0
      %v1337 = vadd.f32 %v1288, %v1336
      %v1338 = vpop.f32.mrb[0].mxu0
      %v1339 = vpop.f32.mrb[0].mxu0
      %v1340 = vadd.f32 %v1291, %v1339
      %v1341 = vpop.f32.mrb[0].mxu0
      %1342 = vdwg.mxu0
      %v1343 = vadd.f32 %v946, %v1329
      %v1344 = vadd.f32 %v949, %v1332
      %v1345 = vadd.f32 %v954, %v1337
      %v1346 = vadd.f32 %v957, %v1340
      %v1347 = vld [vmem:[%s2] sm:$0x1]
      %v1349 = vlaneseq
      %v1350 = vshrl.u32 %v1349, 7
      %v1351 = vsub.s32 0, %v1350
      %v1352 = vrot.slane %v1347, %v1351
      %v1354 = vadd.f32 %v1343, %v1352
      %v1355 = vadd.f32 %v1344, %v1352
      %v1356 = vadd.f32 %v1345, %v1352
      %v1357 = vadd.f32 %v1346, %v1352
      %v1358 = vmax.f32 %v1354, 0.0
      %v1359 = vmax.f32 %v1355, 0.0
      %v1360 = vmax.f32 %v1356, 0.0
      %v1361 = vmax.f32 %v1357, 0.0
      %v1362 = vpack.c.bf16 %v1358, %v1358
      %v1363 = vpack.c.bf16 %v1359, %v1359
      %v1364 = vpack.c.bf16 %v1360, %v1360
      %v1365 = vpack.c.bf16 %v1361, %v1361
      %1366 = vst [vmem:[%s192] sm:$0xf] %v1362
      %1367 = vst [vmem:[%s192 + $0x4] sm:$0xf] %v1363
      %1368 = vst [vmem:[%s192 + $0x8] sm:$0xf] %v1364
      %1369 = vst [vmem:[%s192 + $0xc] sm:$0xf] %v1365
      %s1370 = smul.u32 4, %s19
      %p1371 = scmp.lt.s32.totalorder %s18, 1
      %s1372 = scalar_select %p1371, %s18, 1
      %p1373 = scmp.lt.s32.totalorder %s1370, 7
      %s1374 = scalar_select %p1373, %s1370, 7
      %s1375 = smul.addr %s1372, 8
      %s1376 = sadd.s32 %s1374, %s1375
      %s1377 = smul.addr %s1376, 4
      %s1378 = scalar_lea.vmem %s3, %s1377
      // Predicated region
      $region33: #{vgg16_feature_extractor.7} parent=31 // pred_check
        %p1379 = pneg %p114
      $region34: #{vgg16_feature_extractor.7} parent=31 // pred_check_branch
        %1381 = sbr.rel (%p1379) target = $region36
      $region35: #{vgg16_feature_extractor.7} parent=31 // pred_region
        %s1382 = smul.u32 4, %s19
      $region36: #{vgg16_feature_extractor.7} parent=31 // pred_fallthru
        _
    $region32: #{vgg16_feature_extractor.7} parent=5 // pred_fallthru
      _
    %p1383 = scmp.le.s32.totalorder 2, %s9
    // Predicated region
    $region37: #{vgg16_feature_extractor.7} parent=5 // pred_check
      %p1384 = pneg %p1383
    $region38: #{vgg16_feature_extractor.7} parent=5 // pred_check_branch
      %1386 = sbr.rel (%p1384) target = $region40
    $region39: #{vgg16_feature_extractor.7} parent=5 // pred_region
      %s1387 = ssub.s32 %s9, 2
      // Predicated region
      $region41: #{vgg16_feature_extractor.7} parent=39 // pred_check
        %p1388 = pneg %p120
      $region42: #{vgg16_feature_extractor.7} parent=39 // pred_check_branch
        %1390 = sbr.rel (%p1388) target = $region44
      $region43: #{vgg16_feature_extractor.7} parent=39 // pred_region
        %s1391 = smul.u32 4, %s21
        %p1392 = scmp.lt.s32.totalorder %s20, 1
        %s1393 = scalar_select %p1392, %s20, 1
        %p1394 = scmp.lt.s32.totalorder %s1391, 7
        %s1395 = scalar_select %p1394, %s1391, 7
        %s1396 = smul.addr %s1393, 8
        %s1397 = sadd.s32 %s1395, %s1396
        %s1398 = smul.addr %s1397, 4
        %s1399 = scalar_lea.vmem %s3, %s1398
      $region44: #{vgg16_feature_extractor.7} parent=39 // pred_fallthru
        _
    $region40: #{vgg16_feature_extractor.7} parent=5 // pred_fallthru
      _
  $region6: #{vgg16_feature_extractor.7} parent=0 // loop_footer
    %s13 = sadd.s32 1, %s9
  $region7: #{vgg16_feature_extractor.7} parent=0 // loop_footer_branch
    %8 = sbr.rel target = $region3
  $region8: #{vgg16_feature_extractor.7} parent=0 // loop_exit
    _

</llo_original>
